<compile_context>
chip_gen: v7x
topology: tpu7x:2x2x1
jax: 0.10.0
libtpu: 0.0.40
codegen_flags: <defaults>
</compile_context>

<pallas_src>
import functools
import math

import jax
import jax.numpy as jnp
from jax.experimental import pallas as pl
from jax.experimental.pallas import tpu as pltpu


# ----------------------------------------------------------------------------
# In-kernel helpers (f32 math)
# ----------------------------------------------------------------------------
def _layernorm_nobias(x, w, eps=1e-5):
    # nn.LayerNorm(embed_dim, bias=False): normalize over last dim, scale by w.
    mu = jnp.mean(x, axis=-1, keepdims=True)
    xc = x - mu
    var = jnp.mean(xc * xc, axis=-1, keepdims=True)
    return xc * jax.lax.rsqrt(var + eps) * w


def _gelu_tanh(x):
    # tanh-form GELU: one EUP transcendental + a handful of VALU ops.
    c = math.sqrt(2.0 / math.pi)
    return 0.5 * x * (1.0 + jnp.tanh(c * (x + 0.044715 * x * x * x)))


# ----------------------------------------------------------------------------
# Fused GMLPBlock kernel (one grid step = Bblk batch elements)
# ----------------------------------------------------------------------------
def _gmlp_block_kernel(x_ref, ln1w_ref, wuv_ref, buv_ref, ws_ref, bs_ref,
                       wo_ref, bo_ref, ln2w_ref, w1_ref, b1_ref, w2_ref,
                       b2_ref, o_ref, *, dh_chunk):
    bblk, S, D = x_ref.shape
    Dh = w1_ref.shape[1]
    M = bblk * S

    x = x_ref[...].reshape(M, D)                             # (M, D) f32

    # ---- sub-layer 1: spatial gating unit (pre-norm1, residual) ----
    y = _layernorm_nobias(x, ln1w_ref[0]).astype(jnp.bfloat16)
    # fused Linear(D, 2D): single N=2D matmul, u/v split on a lane boundary.
    z = jnp.dot(y, wuv_ref[...], preferred_element_type=jnp.float32) + buv_ref[0]
    z = _gelu_tanh(z)                                        # (M, 2D) f32
    u = z[:, :D]
    v = z[:, D:].reshape(bblk, S, D).astype(jnp.bfloat16)
    # token mixing: v'[b, s, :] = sum_t ws[s, t] * v[b, t, :] + bs[s, :]
    mixed = [
        jnp.dot(ws_ref[...], v[b], preferred_element_type=jnp.float32)
        + bs_ref[...]
        for b in range(bblk)
    ]
    vmix = jnp.concatenate(mixed, axis=0)                    # (M, D) f32
    g = (u * vmix).astype(jnp.bfloat16)
    x = x + jnp.dot(g, wo_ref[...], preferred_element_type=jnp.float32) + bo_ref[0]

    # ---- sub-layer 2: channel MLP (pre-norm2, residual), tiled over Dh ----
    y2 = _layernorm_nobias(x, ln2w_ref[0]).astype(jnp.bfloat16)
    acc = jnp.zeros((M, D), jnp.float32)
    n_chunks = Dh // dh_chunk
    for c in range(n_chunks):                                # static, aligned slices
        lo, hi = c * dh_chunk, (c + 1) * dh_chunk
        h = (jnp.dot(y2, w1_ref[:, lo:hi], preferred_element_type=jnp.float32)
             + b1_ref[:, lo:hi])
        h = _gelu_tanh(h).astype(jnp.bfloat16)
        acc = acc + jnp.dot(h, w2_ref[lo:hi, :], preferred_element_type=jnp.float32)
    x = x + acc + b2_ref[0]

    o_ref[...] = x.reshape(bblk, S, D).astype(o_ref.dtype)


def gmlp_block(x, p, *, block_b=4, dh_chunk=256):
    """x: (B, S, D) float32. p: param dict from init_gmlp_block_params."""
    B, S, D = x.shape
    Dh = p["w1"].shape[1]

    block_b = min(block_b, B)
    assert B % block_b == 0, "batch must be divisible by the batch block"
    dh_chunk = min(dh_chunk, Dh)
    assert Dh % dh_chunk == 0, "hidden dim must be divisible by dh_chunk"

    kernel = functools.partial(_gmlp_block_kernel, dh_chunk=dh_chunk)

    in_specs = [
        pl.BlockSpec((block_b, S, D), lambda b: (b, 0, 0)),  # x
        pl.BlockSpec((1, D), lambda b: (0, 0)),              # norm1 weight
        pl.BlockSpec((D, 2 * D), lambda b: (0, 0)),          # wuv (fused gating proj)
        pl.BlockSpec((1, 2 * D), lambda b: (0, 0)),          # buv
        pl.BlockSpec((S, S), lambda b: (0, 0)),              # ws (spatial proj)
        pl.BlockSpec((S, D), lambda b: (0, 0)),              # bs (pre-broadcast)
        pl.BlockSpec((D, D), lambda b: (0, 0)),              # wo
        pl.BlockSpec((1, D), lambda b: (0, 0)),              # bo
        pl.BlockSpec((1, D), lambda b: (0, 0)),              # norm2 weight
        pl.BlockSpec((D, Dh), lambda b: (0, 0)),             # mlp w1
        pl.BlockSpec((1, Dh), lambda b: (0, 0)),             # mlp b1
        pl.BlockSpec((Dh, D), lambda b: (0, 0)),             # mlp w2
        pl.BlockSpec((1, D), lambda b: (0, 0)),              # mlp b2
    ]

    return pl.pallas_call(
        kernel,
        out_shape=jax.ShapeDtypeStruct((B, S, D), jnp.float32),
        grid=(B // block_b,),
        in_specs=in_specs,
        out_specs=pl.BlockSpec((block_b, S, D), lambda b: (b, 0, 0)),
        compiler_params=pltpu.CompilerParams(
            dimension_semantics=("parallel",)),   # independent batch blocks
    )(x, p["ln1_w"], p["wuv"], p["buv"], p["ws"], p["bs"],
      p["wo"], p["bo"], p["ln2_w"], p["w1"], p["b1"], p["w2"], p["b2"])


# ----------------------------------------------------------------------------
# Parameter init (synthetic; Linear weights stored transposed for x @ W and
# cast to bf16 for the MXU; biases / LN weights stay f32)
# ----------------------------------------------------------------------------
def init_gmlp_block_params(key, embed_dim, seq_len, mlp_ratio=4):
    D, S, Dh = embed_dim, seq_len, embed_dim * mlp_ratio
    k = jax.random.split(key, 5)
    bf16 = jnp.bfloat16
    # spatial (token-mixing) Linear(S, S) bias init to 1 (per token), stored
    # pre-broadcast to (S, D) so the in-kernel add is a plain VPU add.
    bs_token = jnp.ones((S, 1), jnp.float32)
    return dict(
        ln1_w=jnp.ones((1, D), jnp.float32),
        ln2_w=jnp.ones((1, D), jnp.float32),
        # Fused Linear(D, 2D) input projection: columns [:D] -> u, [D:] -> v
        # (identical to one matmul + chunk(2, -1)).
        wuv=(jax.random.normal(k[0], (D, 2 * D), jnp.float32) * 0.02).astype(bf16),
        buv=jnp.zeros((1, 2 * D), jnp.float32),
        ws=(jax.random.normal(k[1], (S, S), jnp.float32) * 0.02).astype(bf16),
        bs=jnp.tile(bs_token, (1, D)),
        wo=(jax.random.normal(k[2], (D, D), jnp.float32) * 0.02).astype(bf16),
        bo=jnp.zeros((1, D), jnp.float32),
        w1=(jax.random.normal(k[3], (D, Dh), jnp.float32) * 0.02).astype(bf16),
        b1=jnp.zeros((1, Dh), jnp.float32),
        w2=(jax.random.normal(k[4], (Dh, D), jnp.float32) * 0.02).astype(bf16),
        b2=jnp.zeros((1, D), jnp.float32),
    )


# ----------------------------------------------------------------------------
# Pure-JAX reference (f32 matmuls) for a tolerance check
# ----------------------------------------------------------------------------
def gmlp_block_reference(x, p):
    f32 = lambda a: a.astype(jnp.float32)
    D = x.shape[-1]

    def ln(z, w, eps=1e-5):
        mu = jnp.mean(z, -1, keepdims=True)
        zc = z - mu
        var = jnp.mean(zc * zc, -1, keepdims=True)
        return zc * jax.lax.rsqrt(var + eps) * w

    y = ln(x, p["ln1_w"][0])
    z = _gelu_tanh(y @ f32(p["wuv"]) + p["buv"][0])
    u, v = z[..., :D], z[..., D:]
    v = jnp.einsum("st,btd->bsd", f32(p["ws"]), v) + p["bs"][None]
    x = x + ((u * v) @ f32(p["wo"]) + p["bo"][0])
    y2 = ln(x, p["ln2_w"][0])
    h = _gelu_tanh(y2 @ f32(p["w1"]) + p["b1"][0])
    x = x + (h @ f32(p["w2"]) + p["b2"][0])
    return x


# ----------------------------------------------------------------------------
if __name__ == "__main__":
    # Lane-dense demo config: embed_dim = 128 (full 128-lane width),
    # seq_len = 64 (8x8 patches), mlp_ratio = 4, batch = 8, batch block = 4
    # -> grid length 2 (both v7x TensorCores get work).
    B, S, D, MLP_RATIO = 8, 64, 128, 4

    root = jax.random.PRNGKey(0)
    k_params, k_x = jax.random.split(root)

    params = init_gmlp_block_params(k_params, D, S, MLP_RATIO)
    x = jax.random.normal(k_x, (B, S, D), jnp.float32)

    out = jax.block_until_ready(gmlp_block(x, params, block_b=4, dh_chunk=256))
    ref = jax.block_until_ready(gmlp_block_reference(x, params))

    assert out.shape == (B, S, D)
    assert bool(jnp.all(jnp.isfinite(out)))
    max_err = float(jnp.max(jnp.abs(out - ref)))
    assert bool(jnp.allclose(out, ref, atol=5e-2, rtol=5e-2)), max_err
    print("KERNEL_OK")
</pallas_src>

<mosaic_0001>
module attributes {stable_mosaic.version = 11 : i64} {
  func.func @_gmlp_block_kernel(%arg0: i32, %arg1: memref<4x64x128xf32, #tpu.memory_space<vmem>>, %arg2: memref<1x128xf32, #tpu.memory_space<vmem>>, %arg3: memref<128x256xbf16, #tpu.memory_space<vmem>>, %arg4: memref<1x256xf32, #tpu.memory_space<vmem>>, %arg5: memref<64x64xbf16, #tpu.memory_space<vmem>>, %arg6: memref<64x128xf32, #tpu.memory_space<vmem>>, %arg7: memref<128x128xbf16, #tpu.memory_space<vmem>>, %arg8: memref<1x128xf32, #tpu.memory_space<vmem>>, %arg9: memref<1x128xf32, #tpu.memory_space<vmem>>, %arg10: memref<128x512xbf16, #tpu.memory_space<vmem>>, %arg11: memref<1x512xf32, #tpu.memory_space<vmem>>, %arg12: memref<512x128xbf16, #tpu.memory_space<vmem>>, %arg13: memref<1x128xf32, #tpu.memory_space<vmem>>, %arg14: memref<4x64x128xf32, #tpu.memory_space<vmem>>) attributes {dimension_semantics = [#tpu.dimension_semantics<parallel>], iteration_bounds = array<i64: 2>, scalar_prefetch = 0 : i64, scratch_operands = 0 : i64, tpu.core_type = #tpu.core_type<tc>, window_params = [{transform_indices = @transform_0, window_bounds = array<i64: 4, 64, 128>}, {pipeline_mode = #tpu.pipeline_mode<synchronous>, transform_indices = @transform_1, window_bounds = array<i64: 1, 128>}, {pipeline_mode = #tpu.pipeline_mode<synchronous>, transform_indices = @transform_2, window_bounds = array<i64: 128, 256>}, {pipeline_mode = #tpu.pipeline_mode<synchronous>, transform_indices = @transform_3, window_bounds = array<i64: 1, 256>}, {pipeline_mode = #tpu.pipeline_mode<synchronous>, transform_indices = @transform_4, window_bounds = array<i64: 64, 64>}, {pipeline_mode = #tpu.pipeline_mode<synchronous>, transform_indices = @transform_5, window_bounds = array<i64: 64, 128>}, {pipeline_mode = #tpu.pipeline_mode<synchronous>, transform_indices = @transform_6, window_bounds = array<i64: 128, 128>}, {pipeline_mode = #tpu.pipeline_mode<synchronous>, transform_indices = @transform_7, window_bounds = array<i64: 1, 128>}, {pipeline_mode = #tpu.pipeline_mode<synchronous>, transform_indices = @transform_8, window_bounds = array<i64: 1, 128>}, {pipeline_mode = #tpu.pipeline_mode<synchronous>, transform_indices = @transform_9, window_bounds = array<i64: 128, 512>}, {pipeline_mode = #tpu.pipeline_mode<synchronous>, transform_indices = @transform_10, window_bounds = array<i64: 1, 512>}, {pipeline_mode = #tpu.pipeline_mode<synchronous>, transform_indices = @transform_11, window_bounds = array<i64: 512, 128>}, {pipeline_mode = #tpu.pipeline_mode<synchronous>, transform_indices = @transform_12, window_bounds = array<i64: 1, 128>}, {transform_indices = @transform_13, window_bounds = array<i64: 4, 64, 128>}]} {
    %c0 = arith.constant 0 : index
    %c0_0 = arith.constant 0 : index
    %c0_1 = arith.constant 0 : index
    %0 = vector.load %arg1[%c0, %c0_0, %c0_1] : memref<4x64x128xf32, #tpu.memory_space<vmem>>, vector<4x64x128xf32>
    %1 = vector.shape_cast %0 : vector<4x64x128xf32> to vector<256x128xf32>
    %c0_2 = arith.constant 0 : index
    %c0_3 = arith.constant 0 : index
    %2 = vector.load %arg2[%c0_2, %c0_3] : memref<1x128xf32, #tpu.memory_space<vmem>>, vector<1x128xf32>
    %3 = vector.shape_cast %2 : vector<1x128xf32> to vector<128xf32>
    %cst = arith.constant dense<0.000000e+00> : vector<256xf32>
    %4 = vector.multi_reduction <add>, %1, %cst [1] : vector<256x128xf32> to vector<256xf32>
    %5 = vector.shape_cast %4 : vector<256xf32> to vector<256x1xf32>
    %cst_4 = arith.constant 1.280000e+02 : f32
    %6 = vector.broadcast %cst_4 : f32 to vector<256x1xf32>
    %7 = arith.divf %5, %6 : vector<256x1xf32>
    %8 = vector.broadcast %7 : vector<256x1xf32> to vector<256x128xf32>
    %9 = arith.subf %1, %8 : vector<256x128xf32>
    %10 = arith.mulf %9, %9 : vector<256x128xf32>
    %cst_5 = arith.constant dense<0.000000e+00> : vector<256xf32>
    %11 = vector.multi_reduction <add>, %10, %cst_5 [1] : vector<256x128xf32> to vector<256xf32>
    %12 = vector.shape_cast %11 : vector<256xf32> to vector<256x1xf32>
    %cst_6 = arith.constant 1.280000e+02 : f32
    %13 = vector.broadcast %cst_6 : f32 to vector<256x1xf32>
    %14 = arith.divf %12, %13 : vector<256x1xf32>
    %cst_7 = arith.constant 9.99999974E-6 : f32
    %15 = vector.broadcast %cst_7 : f32 to vector<256x1xf32>
    %16 = arith.addf %14, %15 : vector<256x1xf32>
    %17 = math.rsqrt %16 : vector<256x1xf32>
    %18 = vector.broadcast %17 : vector<256x1xf32> to vector<256x128xf32>
    %19 = arith.mulf %9, %18 : vector<256x128xf32>
    %20 = vector.shape_cast %3 : vector<128xf32> to vector<1x128xf32>
    %21 = vector.broadcast %20 : vector<1x128xf32> to vector<256x128xf32>
    %22 = arith.mulf %19, %21 : vector<256x128xf32>
    %23 = arith.truncf %22 : vector<256x128xf32> to vector<256x128xbf16>
    %c0_8 = arith.constant 0 : index
    %c0_9 = arith.constant 0 : index
    %24 = vector.load %arg3[%c0_8, %c0_9] : memref<128x256xbf16, #tpu.memory_space<vmem>>, vector<128x256xbf16>
    %cst_10 = arith.constant dense<0.000000e+00> : vector<256x256xf32>
    %25 = tpu.matmul %23, %24, %cst_10 {dimension_numbers = #tpu.dot_dimension_numbers<[1], [0], [0], [1], [0, 0, 1, 1], [], []>} : vector<256x128xbf16>, vector<128x256xbf16>, vector<256x256xf32> -> vector<256x256xf32>
    %c0_11 = arith.constant 0 : index
    %c0_12 = arith.constant 0 : index
    %26 = vector.load %arg4[%c0_11, %c0_12] : memref<1x256xf32, #tpu.memory_space<vmem>>, vector<1x256xf32>
    %27 = vector.shape_cast %26 : vector<1x256xf32> to vector<256xf32>
    %28 = vector.shape_cast %27 : vector<256xf32> to vector<1x256xf32>
    %29 = vector.broadcast %28 : vector<1x256xf32> to vector<256x256xf32>
    %30 = arith.addf %25, %29 : vector<256x256xf32>
    %cst_13 = arith.constant 5.000000e-01 : f32
    %31 = vector.broadcast %cst_13 : f32 to vector<256x256xf32>
    %32 = arith.mulf %31, %30 : vector<256x256xf32>
    %cst_14 = arith.constant 4.471500e-02 : f32
    %33 = vector.broadcast %cst_14 : f32 to vector<256x256xf32>
    %34 = arith.mulf %33, %30 : vector<256x256xf32>
    %35 = arith.mulf %34, %30 : vector<256x256xf32>
    %36 = arith.mulf %35, %30 : vector<256x256xf32>
    %37 = arith.addf %30, %36 : vector<256x256xf32>
    %cst_15 = arith.constant 0.797884583 : f32
    %38 = vector.broadcast %cst_15 : f32 to vector<256x256xf32>
    %39 = arith.mulf %38, %37 : vector<256x256xf32>
    %40 = math.tanh %39 : vector<256x256xf32>
    %cst_16 = arith.constant 1.000000e+00 : f32
    %41 = vector.broadcast %cst_16 : f32 to vector<256x256xf32>
    %42 = arith.addf %41, %40 : vector<256x256xf32>
    %43 = arith.mulf %32, %42 : vector<256x256xf32>
    %44 = vector.extract_strided_slice %43 {offsets = [0, 0], sizes = [256, 128], strides = [1, 1]} : vector<256x256xf32> to vector<256x128xf32>
    %45 = vector.extract_strided_slice %43 {offsets = [0, 128], sizes = [256, 128], strides = [1, 1]} : vector<256x256xf32> to vector<256x128xf32>
    %46 = vector.shape_cast %45 : vector<256x128xf32> to vector<4x64x128xf32>
    %47 = arith.truncf %46 : vector<4x64x128xf32> to vector<4x64x128xbf16>
    %c0_17 = arith.constant 0 : index
    %c0_18 = arith.constant 0 : index
    %48 = vector.load %arg5[%c0_17, %c0_18] : memref<64x64xbf16, #tpu.memory_space<vmem>>, vector<64x64xbf16>
    %49 = vector.extract_strided_slice %47 {offsets = [0, 0, 0], sizes = [1, 64, 128], strides = [1, 1, 1]} : vector<4x64x128xbf16> to vector<1x64x128xbf16>
    %50 = vector.shape_cast %49 : vector<1x64x128xbf16> to vector<64x128xbf16>
    %cst_19 = arith.constant dense<0.000000e+00> : vector<64x128xf32>
    %51 = tpu.matmul %48, %50, %cst_19 {dimension_numbers = #tpu.dot_dimension_numbers<[1], [0], [0], [1], [0, 0, 1, 1], [], []>} : vector<64x64xbf16>, vector<64x128xbf16>, vector<64x128xf32> -> vector<64x128xf32>
    %c0_20 = arith.constant 0 : index
    %c0_21 = arith.constant 0 : index
    %52 = vector.load %arg6[%c0_20, %c0_21] : memref<64x128xf32, #tpu.memory_space<vmem>>, vector<64x128xf32>
    %53 = arith.addf %51, %52 : vector<64x128xf32>
    %c0_22 = arith.constant 0 : index
    %c0_23 = arith.constant 0 : index
    %54 = vector.load %arg5[%c0_22, %c0_23] : memref<64x64xbf16, #tpu.memory_space<vmem>>, vector<64x64xbf16>
    %55 = vector.extract_strided_slice %47 {offsets = [1, 0, 0], sizes = [1, 64, 128], strides = [1, 1, 1]} : vector<4x64x128xbf16> to vector<1x64x128xbf16>
    %56 = vector.shape_cast %55 : vector<1x64x128xbf16> to vector<64x128xbf16>
    %cst_24 = arith.constant dense<0.000000e+00> : vector<64x128xf32>
    %57 = tpu.matmul %54, %56, %cst_24 {dimension_numbers = #tpu.dot_dimension_numbers<[1], [0], [0], [1], [0, 0, 1, 1], [], []>} : vector<64x64xbf16>, vector<64x128xbf16>, vector<64x128xf32> -> vector<64x128xf32>
    %c0_25 = arith.constant 0 : index
    %c0_26 = arith.constant 0 : index
    %58 = vector.load %arg6[%c0_25, %c0_26] : memref<64x128xf32, #tpu.memory_space<vmem>>, vector<64x128xf32>
    %59 = arith.addf %57, %58 : vector<64x128xf32>
    %c0_27 = arith.constant 0 : index
    %c0_28 = arith.constant 0 : index
    %60 = vector.load %arg5[%c0_27, %c0_28] : memref<64x64xbf16, #tpu.memory_space<vmem>>, vector<64x64xbf16>
    %61 = vector.extract_strided_slice %47 {offsets = [2, 0, 0], sizes = [1, 64, 128], strides = [1, 1, 1]} : vector<4x64x128xbf16> to vector<1x64x128xbf16>
    %62 = vector.shape_cast %61 : vector<1x64x128xbf16> to vector<64x128xbf16>
    %cst_29 = arith.constant dense<0.000000e+00> : vector<64x128xf32>
    %63 = tpu.matmul %60, %62, %cst_29 {dimension_numbers = #tpu.dot_dimension_numbers<[1], [0], [0], [1], [0, 0, 1, 1], [], []>} : vector<64x64xbf16>, vector<64x128xbf16>, vector<64x128xf32> -> vector<64x128xf32>
    %c0_30 = arith.constant 0 : index
    %c0_31 = arith.constant 0 : index
    %64 = vector.load %arg6[%c0_30, %c0_31] : memref<64x128xf32, #tpu.memory_space<vmem>>, vector<64x128xf32>
    %65 = arith.addf %63, %64 : vector<64x128xf32>
    %c0_32 = arith.constant 0 : index
    %c0_33 = arith.constant 0 : index
    %66 = vector.load %arg5[%c0_32, %c0_33] : memref<64x64xbf16, #tpu.memory_space<vmem>>, vector<64x64xbf16>
    %67 = vector.extract_strided_slice %47 {offsets = [3, 0, 0], sizes = [1, 64, 128], strides = [1, 1, 1]} : vector<4x64x128xbf16> to vector<1x64x128xbf16>
    %68 = vector.shape_cast %67 : vector<1x64x128xbf16> to vector<64x128xbf16>
    %cst_34 = arith.constant dense<0.000000e+00> : vector<64x128xf32>
    %69 = tpu.matmul %66, %68, %cst_34 {dimension_numbers = #tpu.dot_dimension_numbers<[1], [0], [0], [1], [0, 0, 1, 1], [], []>} : vector<64x64xbf16>, vector<64x128xbf16>, vector<64x128xf32> -> vector<64x128xf32>
    %c0_35 = arith.constant 0 : index
    %c0_36 = arith.constant 0 : index
    %70 = vector.load %arg6[%c0_35, %c0_36] : memref<64x128xf32, #tpu.memory_space<vmem>>, vector<64x128xf32>
    %71 = arith.addf %69, %70 : vector<64x128xf32>
    %72 = tpu.concatenate %53, %59, %65, %71 in 0 : vector<64x128xf32>, vector<64x128xf32>, vector<64x128xf32>, vector<64x128xf32> -> vector<256x128xf32>
    %73 = arith.mulf %44, %72 : vector<256x128xf32>
    %74 = arith.truncf %73 : vector<256x128xf32> to vector<256x128xbf16>
    %c0_37 = arith.constant 0 : index
    %c0_38 = arith.constant 0 : index
    %75 = vector.load %arg7[%c0_37, %c0_38] : memref<128x128xbf16, #tpu.memory_space<vmem>>, vector<128x128xbf16>
    %cst_39 = arith.constant dense<0.000000e+00> : vector<256x128xf32>
    %76 = tpu.matmul %74, %75, %cst_39 {dimension_numbers = #tpu.dot_dimension_numbers<[1], [0], [0], [1], [0, 0, 1, 1], [], []>} : vector<256x128xbf16>, vector<128x128xbf16>, vector<256x128xf32> -> vector<256x128xf32>
    %77 = arith.addf %1, %76 : vector<256x128xf32>
    %c0_40 = arith.constant 0 : index
    %c0_41 = arith.constant 0 : index
    %78 = vector.load %arg8[%c0_40, %c0_41] : memref<1x128xf32, #tpu.memory_space<vmem>>, vector<1x128xf32>
    %79 = vector.shape_cast %78 : vector<1x128xf32> to vector<128xf32>
    %80 = vector.shape_cast %79 : vector<128xf32> to vector<1x128xf32>
    %81 = vector.broadcast %80 : vector<1x128xf32> to vector<256x128xf32>
    %82 = arith.addf %77, %81 : vector<256x128xf32>
    %c0_42 = arith.constant 0 : index
    %c0_43 = arith.constant 0 : index
    %83 = vector.load %arg9[%c0_42, %c0_43] : memref<1x128xf32, #tpu.memory_space<vmem>>, vector<1x128xf32>
    %84 = vector.shape_cast %83 : vector<1x128xf32> to vector<128xf32>
    %cst_44 = arith.constant dense<0.000000e+00> : vector<256xf32>
    %85 = vector.multi_reduction <add>, %82, %cst_44 [1] : vector<256x128xf32> to vector<256xf32>
    %86 = vector.shape_cast %85 : vector<256xf32> to vector<256x1xf32>
    %cst_45 = arith.constant 1.280000e+02 : f32
    %87 = vector.broadcast %cst_45 : f32 to vector<256x1xf32>
    %88 = arith.divf %86, %87 : vector<256x1xf32>
    %89 = vector.broadcast %88 : vector<256x1xf32> to vector<256x128xf32>
    %90 = arith.subf %82, %89 : vector<256x128xf32>
    %91 = arith.mulf %90, %90 : vector<256x128xf32>
    %cst_46 = arith.constant dense<0.000000e+00> : vector<256xf32>
    %92 = vector.multi_reduction <add>, %91, %cst_46 [1] : vector<256x128xf32> to vector<256xf32>
    %93 = vector.shape_cast %92 : vector<256xf32> to vector<256x1xf32>
    %cst_47 = arith.constant 1.280000e+02 : f32
    %94 = vector.broadcast %cst_47 : f32 to vector<256x1xf32>
    %95 = arith.divf %93, %94 : vector<256x1xf32>
    %cst_48 = arith.constant 9.99999974E-6 : f32
    %96 = vector.broadcast %cst_48 : f32 to vector<256x1xf32>
    %97 = arith.addf %95, %96 : vector<256x1xf32>
    %98 = math.rsqrt %97 : vector<256x1xf32>
    %99 = vector.broadcast %98 : vector<256x1xf32> to vector<256x128xf32>
    %100 = arith.mulf %90, %99 : vector<256x128xf32>
    %101 = vector.shape_cast %84 : vector<128xf32> to vector<1x128xf32>
    %102 = vector.broadcast %101 : vector<1x128xf32> to vector<256x128xf32>
    %103 = arith.mulf %100, %102 : vector<256x128xf32>
    %104 = arith.truncf %103 : vector<256x128xf32> to vector<256x128xbf16>
    %cst_49 = arith.constant 0.000000e+00 : f32
    %105 = vector.broadcast %cst_49 : f32 to vector<256x128xf32>
    %c0_50 = arith.constant 0 : index
    %c0_51 = arith.constant 0 : index
    %106 = vector.load %arg10[%c0_50, %c0_51] : memref<128x512xbf16, #tpu.memory_space<vmem>>, vector<128x256xbf16>
    %cst_52 = arith.constant dense<0.000000e+00> : vector<256x256xf32>
    %107 = tpu.matmul %104, %106, %cst_52 {dimension_numbers = #tpu.dot_dimension_numbers<[1], [0], [0], [1], [0, 0, 1, 1], [], []>} : vector<256x128xbf16>, vector<128x256xbf16>, vector<256x256xf32> -> vector<256x256xf32>
    %c0_53 = arith.constant 0 : index
    %c0_54 = arith.constant 0 : index
    %108 = vector.load %arg11[%c0_53, %c0_54] : memref<1x512xf32, #tpu.memory_space<vmem>>, vector<1x256xf32>
    %109 = vector.broadcast %108 : vector<1x256xf32> to vector<256x256xf32>
    %110 = arith.addf %107, %109 : vector<256x256xf32>
    %cst_55 = arith.constant 5.000000e-01 : f32
    %111 = vector.broadcast %cst_55 : f32 to vector<256x256xf32>
    %112 = arith.mulf %111, %110 : vector<256x256xf32>
    %cst_56 = arith.constant 4.471500e-02 : f32
    %113 = vector.broadcast %cst_56 : f32 to vector<256x256xf32>
    %114 = arith.mulf %113, %110 : vector<256x256xf32>
    %115 = arith.mulf %114, %110 : vector<256x256xf32>
    %116 = arith.mulf %115, %110 : vector<256x256xf32>
    %117 = arith.addf %110, %116 : vector<256x256xf32>
    %cst_57 = arith.constant 0.797884583 : f32
    %118 = vector.broadcast %cst_57 : f32 to vector<256x256xf32>
    %119 = arith.mulf %118, %117 : vector<256x256xf32>
    %120 = math.tanh %119 : vector<256x256xf32>
    %cst_58 = arith.constant 1.000000e+00 : f32
    %121 = vector.broadcast %cst_58 : f32 to vector<256x256xf32>
    %122 = arith.addf %121, %120 : vector<256x256xf32>
    %123 = arith.mulf %112, %122 : vector<256x256xf32>
    %124 = arith.truncf %123 : vector<256x256xf32> to vector<256x256xbf16>
    %c0_59 = arith.constant 0 : index
    %c0_60 = arith.constant 0 : index
    %125 = vector.load %arg12[%c0_59, %c0_60] : memref<512x128xbf16, #tpu.memory_space<vmem>>, vector<256x128xbf16>
    %cst_61 = arith.constant dense<0.000000e+00> : vector<256x128xf32>
    %126 = tpu.matmul %124, %125, %cst_61 {dimension_numbers = #tpu.dot_dimension_numbers<[1], [0], [0], [1], [0, 0, 1, 1], [], []>} : vector<256x256xbf16>, vector<256x128xbf16>, vector<256x128xf32> -> vector<256x128xf32>
    %127 = arith.addf %105, %126 : vector<256x128xf32>
    %c0_62 = arith.constant 0 : index
    %c256 = arith.constant 256 : index
    %128 = vector.load %arg10[%c0_62, %c256] : memref<128x512xbf16, #tpu.memory_space<vmem>>, vector<128x256xbf16>
    %cst_63 = arith.constant dense<0.000000e+00> : vector<256x256xf32>
    %129 = tpu.matmul %104, %128, %cst_63 {dimension_numbers = #tpu.dot_dimension_numbers<[1], [0], [0], [1], [0, 0, 1, 1], [], []>} : vector<256x128xbf16>, vector<128x256xbf16>, vector<256x256xf32> -> vector<256x256xf32>
    %c0_64 = arith.constant 0 : index
    %c256_65 = arith.constant 256 : index
    %130 = vector.load %arg11[%c0_64, %c256_65] : memref<1x512xf32, #tpu.memory_space<vmem>>, vector<1x256xf32>
    %131 = vector.broadcast %130 : vector<1x256xf32> to vector<256x256xf32>
    %132 = arith.addf %129, %131 : vector<256x256xf32>
    %cst_66 = arith.constant 5.000000e-01 : f32
    %133 = vector.broadcast %cst_66 : f32 to vector<256x256xf32>
    %134 = arith.mulf %133, %132 : vector<256x256xf32>
    %cst_67 = arith.constant 4.471500e-02 : f32
    %135 = vector.broadcast %cst_67 : f32 to vector<256x256xf32>
    %136 = arith.mulf %135, %132 : vector<256x256xf32>
    %137 = arith.mulf %136, %132 : vector<256x256xf32>
    %138 = arith.mulf %137, %132 : vector<256x256xf32>
    %139 = arith.addf %132, %138 : vector<256x256xf32>
    %cst_68 = arith.constant 0.797884583 : f32
    %140 = vector.broadcast %cst_68 : f32 to vector<256x256xf32>
    %141 = arith.mulf %140, %139 : vector<256x256xf32>
    %142 = math.tanh %141 : vector<256x256xf32>
    %cst_69 = arith.constant 1.000000e+00 : f32
    %143 = vector.broadcast %cst_69 : f32 to vector<256x256xf32>
    %144 = arith.addf %143, %142 : vector<256x256xf32>
    %145 = arith.mulf %134, %144 : vector<256x256xf32>
    %146 = arith.truncf %145 : vector<256x256xf32> to vector<256x256xbf16>
    %c256_70 = arith.constant 256 : index
    %c0_71 = arith.constant 0 : index
    %147 = vector.load %arg12[%c256_70, %c0_71] : memref<512x128xbf16, #tpu.memory_space<vmem>>, vector<256x128xbf16>
    %cst_72 = arith.constant dense<0.000000e+00> : vector<256x128xf32>
    %148 = tpu.matmul %146, %147, %cst_72 {dimension_numbers = #tpu.dot_dimension_numbers<[1], [0], [0], [1], [0, 0, 1, 1], [], []>} : vector<256x256xbf16>, vector<256x128xbf16>, vector<256x128xf32> -> vector<256x128xf32>
    %149 = arith.addf %127, %148 : vector<256x128xf32>
    %150 = arith.addf %82, %149 : vector<256x128xf32>
    %c0_73 = arith.constant 0 : index
    %c0_74 = arith.constant 0 : index
    %151 = vector.load %arg13[%c0_73, %c0_74] : memref<1x128xf32, #tpu.memory_space<vmem>>, vector<1x128xf32>
    %152 = vector.shape_cast %151 : vector<1x128xf32> to vector<128xf32>
    %153 = vector.shape_cast %152 : vector<128xf32> to vector<1x128xf32>
    %154 = vector.broadcast %153 : vector<1x128xf32> to vector<256x128xf32>
    %155 = arith.addf %150, %154 : vector<256x128xf32>
    %156 = vector.shape_cast %155 : vector<256x128xf32> to vector<4x64x128xf32>
    %c0_75 = arith.constant 0 : index
    %c0_76 = arith.constant 0 : index
    %c0_77 = arith.constant 0 : index
    %157 = vector.load %arg14[%c0_75, %c0_76, %c0_77] : memref<4x64x128xf32, #tpu.memory_space<vmem>>, vector<4x64x128xf32>
    tpu.vector_store %arg14[%c0_75, %c0_76, %c0_77], %156 {strides = array<i32>} : memref<4x64x128xf32, #tpu.memory_space<vmem>>, vector<4x64x128xf32>,
    return
  }
  func.func @transform_0(%arg0: i32) -> (i32, i32, i32) {
    %c0_i32 = arith.constant 0 : i32
    %c0_i32_0 = arith.constant 0 : i32
    %c0_i32_1 = arith.constant 0 : i32
    return %arg0, %c0_i32, %c0_i32_0 : i32, i32, i32
  }
  func.func @transform_1(%arg0: i32) -> (i32, i32) {
    %c0_i32 = arith.constant 0 : i32
    %c0_i32_0 = arith.constant 0 : i32
    %c0_i32_1 = arith.constant 0 : i32
    return %c0_i32, %c0_i32_0 : i32, i32
  }
  func.func @transform_2(%arg0: i32) -> (i32, i32) {
    %c0_i32 = arith.constant 0 : i32
    %c0_i32_0 = arith.constant 0 : i32
    %c0_i32_1 = arith.constant 0 : i32
    return %c0_i32, %c0_i32_0 : i32, i32
  }
  func.func @transform_3(%arg0: i32) -> (i32, i32) {
    %c0_i32 = arith.constant 0 : i32
    %c0_i32_0 = arith.constant 0 : i32
    %c0_i32_1 = arith.constant 0 : i32
    return %c0_i32, %c0_i32_0 : i32, i32
  }
  func.func @transform_4(%arg0: i32) -> (i32, i32) {
    %c0_i32 = arith.constant 0 : i32
    %c0_i32_0 = arith.constant 0 : i32
    %c0_i32_1 = arith.constant 0 : i32
    return %c0_i32, %c0_i32_0 : i32, i32
  }
  func.func @transform_5(%arg0: i32) -> (i32, i32) {
    %c0_i32 = arith.constant 0 : i32
    %c0_i32_0 = arith.constant 0 : i32
    %c0_i32_1 = arith.constant 0 : i32
    return %c0_i32, %c0_i32_0 : i32, i32
  }
  func.func @transform_6(%arg0: i32) -> (i32, i32) {
    %c0_i32 = arith.constant 0 : i32
    %c0_i32_0 = arith.constant 0 : i32
    %c0_i32_1 = arith.constant 0 : i32
    return %c0_i32, %c0_i32_0 : i32, i32
  }
  func.func @transform_7(%arg0: i32) -> (i32, i32) {
    %c0_i32 = arith.constant 0 : i32
    %c0_i32_0 = arith.constant 0 : i32
    %c0_i32_1 = arith.constant 0 : i32
    return %c0_i32, %c0_i32_0 : i32, i32
  }
  func.func @transform_8(%arg0: i32) -> (i32, i32) {
    %c0_i32 = arith.constant 0 : i32
    %c0_i32_0 = arith.constant 0 : i32
    %c0_i32_1 = arith.constant 0 : i32
    return %c0_i32, %c0_i32_0 : i32, i32
  }
  func.func @transform_9(%arg0: i32) -> (i32, i32) {
    %c0_i32 = arith.constant 0 : i32
    %c0_i32_0 = arith.constant 0 : i32
    %c0_i32_1 = arith.constant 0 : i32
    return %c0_i32, %c0_i32_0 : i32, i32
  }
  func.func @transform_10(%arg0: i32) -> (i32, i32) {
    %c0_i32 = arith.constant 0 : i32
    %c0_i32_0 = arith.constant 0 : i32
    %c0_i32_1 = arith.constant 0 : i32
    return %c0_i32, %c0_i32_0 : i32, i32
  }
  func.func @transform_11(%arg0: i32) -> (i32, i32) {
    %c0_i32 = arith.constant 0 : i32
    %c0_i32_0 = arith.constant 0 : i32
    %c0_i32_1 = arith.constant 0 : i32
    return %c0_i32, %c0_i32_0 : i32, i32
  }
  func.func @transform_12(%arg0: i32) -> (i32, i32) {
    %c0_i32 = arith.constant 0 : i32
    %c0_i32_0 = arith.constant 0 : i32
    %c0_i32_1 = arith.constant 0 : i32
    return %c0_i32, %c0_i32_0 : i32, i32
  }
  func.func @transform_13(%arg0: i32) -> (i32, i32, i32) {
    %c0_i32 = arith.constant 0 : i32
    %c0_i32_0 = arith.constant 0 : i32
    %c0_i32_1 = arith.constant 0 : i32
    return %arg0, %c0_i32, %c0_i32_0 : i32, i32, i32
  }
}

</mosaic_0001>

<llo_original>
// kernel: tpu_custom_call.1
$region0: #{tpu_custom_call.1}
  #allocation0 [shape = 'u32[]', space=smem, size = 0x4, offset = 0x4, fixed_abs, tag = 'smem constant byte address 0x4 - core index']
  #allocation1 [shape = 'u32[144,128]{1,0:T(1,128)}', space=vmem, size = 0x12000, scoped, tag = 'internal scratch']
  %s0 = inlined_call_operand.hbm [shape: f32[8,64,128], index: 0, kind: input, shape index: {}]
  %s1 = inlined_call_operand.vmem [shape: f32[1,128], index: 1, kind: input, shape index: {}]
  %s2 = inlined_call_operand.hbm [shape: bf16[128,256], index: 2, kind: input, shape index: {}]
  %s3 = inlined_call_operand.vmem [shape: f32[1,256], index: 3, kind: input, shape index: {}]
  %s4 = inlined_call_operand.hbm [shape: bf16[64,64], index: 4, kind: input, shape index: {}]
  %s5 = inlined_call_operand.hbm [shape: f32[64,128], index: 5, kind: input, shape index: {}]
  %s6 = inlined_call_operand.hbm [shape: bf16[128,128], index: 6, kind: input, shape index: {}]
  %s7 = inlined_call_operand.vmem [shape: f32[1,128], index: 7, kind: input, shape index: {}]
  %s8 = inlined_call_operand.vmem [shape: f32[1,128], index: 8, kind: input, shape index: {}]
  %s9 = inlined_call_operand.hbm [shape: bf16[128,512], index: 9, kind: input, shape index: {}]
  %s10 = inlined_call_operand.vmem [shape: f32[1,512], index: 10, kind: input, shape index: {}]
  %s11 = inlined_call_operand.hbm [shape: bf16[512,128], index: 11, kind: input, shape index: {}]
  %s12 = inlined_call_operand.vmem [shape: f32[1,128], index: 12, kind: input, shape index: {}]
  %s13 = inlined_call_operand.hbm [shape: f32[8,64,128], index: 13, kind: output, shape index: {}]
  %s14 = sld [smem:[#allocation0]]
  $region113: #{tpu_custom_call.1} parent=0
    _
  %s16 = ssub.s32 1, %s14
  %s17 = scalar_select 0, %s16, %s14
  $region1: #{tpu_custom_call.1} parent=0
    #allocation2 [shape = 'u8[262144]{0}', space=vmem, size = 0x40000, scoped, tag = 'input window, operand 0']
    #allocation3 [shape = 's32[2]{0}', space=sflag, size = 0x8, scoped, tag = 'scoped memory for tpu_custom_call.1']
    #allocation4 [shape = 's32[2]{0}', space=sflag, size = 0x8, scoped, tag = 'scoped memory for tpu_custom_call.1']
    #allocation5 [shape = 'u8[65536]{0}', space=vmem, size = 0x10000, scoped, tag = 'input window, operand 2, single buffered']
    #allocation6 [shape = 's32[1]{0}', space=sflag, size = 0x4, scoped, tag = 'scoped memory for tpu_custom_call.1']
    #allocation7 [shape = 'u8[16384]{0}', space=vmem, size = 0x4000, scoped, tag = 'input window, operand 4, single buffered']
    #allocation8 [shape = 'u8[32768]{0}', space=vmem, size = 0x8000, scoped, tag = 'input window, operand 5, single buffered']
    #allocation9 [shape = 's32[1]{0}', space=sflag, size = 0x4, scoped, tag = 'scoped memory for tpu_custom_call.1']
    #allocation10 [shape = 'u8[32768]{0}', space=vmem, size = 0x8000, scoped, tag = 'input window, operand 6, single buffered']
    #allocation11 [shape = 'u8[131072]{0}', space=vmem, size = 0x20000, scoped, tag = 'input window, operand 9, single buffered']
    #allocation12 [shape = 's32[1]{0}', space=sflag, size = 0x4, scoped, tag = 'scoped memory for tpu_custom_call.1']
    #allocation13 [shape = 'u8[131072]{0}', space=vmem, size = 0x20000, scoped, tag = 'input window, operand 11, single buffered']
    #allocation14 [shape = 'u8[262144]{0}', space=vmem, size = 0x40000, scoped, tag = 'output window, operand 0']
    %18 = vsyncpa [#allocation3], 0
    %s19 = scalar_lea.sflag [#allocation3], 1
    %20 = vsyncpa %s19, 0
    %21 = vsyncpa [#allocation6], 0
    %22 = vsyncpa [#allocation9], 0
    %23 = vsyncpa [#allocation12], 0
    %24 = vsyncpa [#allocation4], 0
    %s25 = scalar_lea.sflag [#allocation4], 1
    %26 = vsyncpa %s25, 0
    loop: start=0, step=1, limit=4
    $region2: #{tpu_custom_call.1} parent=1 // loop_pre_header
      _
    $region3: #{tpu_custom_call.1} parent=1 // loop_header
      %s28 = sphi 0, %s32
      %p29 = scmp.ge.s32.totalorder %s28, 4
      %s38 = sphi 0, %s40
      %s41 = sphi 0, %s38
      %s42 = sphi 0, %s41
      %s58 = sphi 0, %s42
      %s62 = sphi 0, %s62
      %s64 = sphi 0, %s62
      %s65 = sphi 0, %s64
      %s79 = sphi 0, %s65
      %s83 = sphi 0, %s83
      %s85 = sphi 0, %s83
      %s86 = sphi 0, %s85
      %s100 = sphi 0, %s86
      %s104 = sphi 0, %s104
      %s106 = sphi 0, %s104
      %s107 = sphi 0, %s106
      %s121 = sphi 0, %s107
      %s125 = sphi 0, %s125
      %s127 = sphi 0, %s125
      %s128 = sphi 0, %s127
      %s142 = sphi 0, %s128
      %s146 = sphi 0, %s146
      %s148 = sphi 0, %s146
      %s149 = sphi 0, %s148
      %s163 = sphi 0, %s149
      %s167 = sphi 0, %s167
      %s169 = sphi 0, %s167
      %s170 = sphi 0, %s169
      %s184 = sphi 0, %s170
      %s188 = sphi 0, %s188
      %s190 = sphi 0, %s188
      %s191 = sphi 0, %s190
      %s205 = sphi 0, %s191
      %s209 = sphi 0, %s209
      %s211 = sphi 0, %s209
      %s212 = sphi 0, %s211
      %s226 = sphi 0, %s212
      %s230 = sphi 0, %s230
      %s232 = sphi 0, %s230
      %s233 = sphi 0, %s232
      %s247 = sphi 0, %s233
      %s251 = sphi 0, %s251
      %s253 = sphi 0, %s251
      %s254 = sphi 0, %s253
      %s268 = sphi 0, %s254
      %s272 = sphi 0, %s272
      %s274 = sphi 0, %s272
      %s275 = sphi 0, %s274
      %s289 = sphi 0, %s275
      %s293 = sphi 0, %s293
      %s295 = sphi 0, %s293
      %s296 = sphi 0, %s295
      %s310 = sphi 0, %s296
      %s316 = sphi 0, %s318
      %s319 = sphi 0, %s316
      %s320 = sphi 0, %s319
      %s336 = sphi 0, %s320
    $region4: #{tpu_custom_call.1} parent=1 // loop_header_branch
      %31 = sbr.rel (%p29) target = $region8
    $region5: #{tpu_custom_call.1} parent=1 // loop_body
      %s33 = ssub.s32 %s28, 1
      %s34 = ssub.s32 %s28, 2
      %s35 = sadd.s32 %s28, 1
      %s36 = ssub.s32 %s28, %s35
      %p37 = scmp.eq.s32.totalorder %s36, 0
      %s39 = sadd.s32 %s38, 1
      %s40 = scalar_select %p37, %s38, %s39
      %p43 = pneg %p37
      %p44 = scmp.eq.s32.totalorder %s28, 1
      %p45 = por %p43, %p44
      %p46 = scmp.ne.s32.totalorder %s38, %s41
      %p47 = scmp.eq.s32.totalorder %s28, 0
      %p48 = por %p46, %p47
      %p49 = scmp.ne.s32.totalorder %s38, %s41
      %p50 = scmp.eq.s32.totalorder %s33, 1
      %p51 = por %p49, %p50
      %p52 = scmp.ne.s32.totalorder %s41, %s42
      %p53 = scmp.eq.s32.totalorder %s33, 0
      %p54 = por %p52, %p53
      %p55 = scmp.ne.s32.totalorder %s41, %s42
      %p56 = scmp.eq.s32.totalorder %s34, 1
      %p57 = por %p55, %p56
      %p59 = scmp.ne.s32.totalorder %s42, %s58
      %p60 = scmp.eq.s32.totalorder %s34, 0
      %p61 = por %p59, %p60
      %s63 = sadd.s32 %s62, 1
      %p66 = scmp.eq.s32.totalorder %s28, 1
      %p67 = scmp.ne.s32.totalorder %s62, %s64
      %p68 = scmp.eq.s32.totalorder %s28, 0
      %p69 = por %p67, %p68
      %p70 = scmp.ne.s32.totalorder %s62, %s64
      %p71 = scmp.eq.s32.totalorder %s33, 1
      %p72 = por %p70, %p71
      %p73 = scmp.ne.s32.totalorder %s64, %s65
      %p74 = scmp.eq.s32.totalorder %s33, 0
      %p75 = por %p73, %p74
      %p76 = scmp.ne.s32.totalorder %s64, %s65
      %p77 = scmp.eq.s32.totalorder %s34, 1
      %p78 = por %p76, %p77
      %p80 = scmp.ne.s32.totalorder %s65, %s79
      %p81 = scmp.eq.s32.totalorder %s34, 0
      %p82 = por %p80, %p81
      %s84 = sadd.s32 %s83, 1
      %p87 = scmp.eq.s32.totalorder %s28, 1
      %p88 = scmp.ne.s32.totalorder %s83, %s85
      %p89 = scmp.eq.s32.totalorder %s28, 0
      %p90 = por %p88, %p89
      %p91 = scmp.ne.s32.totalorder %s83, %s85
      %p92 = scmp.eq.s32.totalorder %s33, 1
      %p93 = por %p91, %p92
      %p94 = scmp.ne.s32.totalorder %s85, %s86
      %p95 = scmp.eq.s32.totalorder %s33, 0
      %p96 = por %p94, %p95
      %p97 = scmp.ne.s32.totalorder %s85, %s86
      %p98 = scmp.eq.s32.totalorder %s34, 1
      %p99 = por %p97, %p98
      %p101 = scmp.ne.s32.totalorder %s86, %s100
      %p102 = scmp.eq.s32.totalorder %s34, 0
      %p103 = por %p101, %p102
      %s105 = sadd.s32 %s104, 1
      %p108 = scmp.eq.s32.totalorder %s28, 1
      %p109 = scmp.ne.s32.totalorder %s104, %s106
      %p110 = scmp.eq.s32.totalorder %s28, 0
      %p111 = por %p109, %p110
      %p112 = scmp.ne.s32.totalorder %s104, %s106
      %p113 = scmp.eq.s32.totalorder %s33, 1
      %p114 = por %p112, %p113
      %p115 = scmp.ne.s32.totalorder %s106, %s107
      %p116 = scmp.eq.s32.totalorder %s33, 0
      %p117 = por %p115, %p116
      %p118 = scmp.ne.s32.totalorder %s106, %s107
      %p119 = scmp.eq.s32.totalorder %s34, 1
      %p120 = por %p118, %p119
      %p122 = scmp.ne.s32.totalorder %s107, %s121
      %p123 = scmp.eq.s32.totalorder %s34, 0
      %p124 = por %p122, %p123
      %s126 = sadd.s32 %s125, 1
      %p129 = scmp.eq.s32.totalorder %s28, 1
      %p130 = scmp.ne.s32.totalorder %s125, %s127
      %p131 = scmp.eq.s32.totalorder %s28, 0
      %p132 = por %p130, %p131
      %p133 = scmp.ne.s32.totalorder %s125, %s127
      %p134 = scmp.eq.s32.totalorder %s33, 1
      %p135 = por %p133, %p134
      %p136 = scmp.ne.s32.totalorder %s127, %s128
      %p137 = scmp.eq.s32.totalorder %s33, 0
      %p138 = por %p136, %p137
      %p139 = scmp.ne.s32.totalorder %s127, %s128
      %p140 = scmp.eq.s32.totalorder %s34, 1
      %p141 = por %p139, %p140
      %p143 = scmp.ne.s32.totalorder %s128, %s142
      %p144 = scmp.eq.s32.totalorder %s34, 0
      %p145 = por %p143, %p144
      %s147 = sadd.s32 %s146, 1
      %p150 = scmp.eq.s32.totalorder %s28, 1
      %p151 = scmp.ne.s32.totalorder %s146, %s148
      %p152 = scmp.eq.s32.totalorder %s28, 0
      %p153 = por %p151, %p152
      %p154 = scmp.ne.s32.totalorder %s146, %s148
      %p155 = scmp.eq.s32.totalorder %s33, 1
      %p156 = por %p154, %p155
      %p157 = scmp.ne.s32.totalorder %s148, %s149
      %p158 = scmp.eq.s32.totalorder %s33, 0
      %p159 = por %p157, %p158
      %p160 = scmp.ne.s32.totalorder %s148, %s149
      %p161 = scmp.eq.s32.totalorder %s34, 1
      %p162 = por %p160, %p161
      %p164 = scmp.ne.s32.totalorder %s149, %s163
      %p165 = scmp.eq.s32.totalorder %s34, 0
      %p166 = por %p164, %p165
      %s168 = sadd.s32 %s167, 1
      %p171 = scmp.eq.s32.totalorder %s28, 1
      %p172 = scmp.ne.s32.totalorder %s167, %s169
      %p173 = scmp.eq.s32.totalorder %s28, 0
      %p174 = por %p172, %p173
      %p175 = scmp.ne.s32.totalorder %s167, %s169
      %p176 = scmp.eq.s32.totalorder %s33, 1
      %p177 = por %p175, %p176
      %p178 = scmp.ne.s32.totalorder %s169, %s170
      %p179 = scmp.eq.s32.totalorder %s33, 0
      %p180 = por %p178, %p179
      %p181 = scmp.ne.s32.totalorder %s169, %s170
      %p182 = scmp.eq.s32.totalorder %s34, 1
      %p183 = por %p181, %p182
      %p185 = scmp.ne.s32.totalorder %s170, %s184
      %p186 = scmp.eq.s32.totalorder %s34, 0
      %p187 = por %p185, %p186
      %s189 = sadd.s32 %s188, 1
      %p192 = scmp.eq.s32.totalorder %s28, 1
      %p193 = scmp.ne.s32.totalorder %s188, %s190
      %p194 = scmp.eq.s32.totalorder %s28, 0
      %p195 = por %p193, %p194
      %p196 = scmp.ne.s32.totalorder %s188, %s190
      %p197 = scmp.eq.s32.totalorder %s33, 1
      %p198 = por %p196, %p197
      %p199 = scmp.ne.s32.totalorder %s190, %s191
      %p200 = scmp.eq.s32.totalorder %s33, 0
      %p201 = por %p199, %p200
      %p202 = scmp.ne.s32.totalorder %s190, %s191
      %p203 = scmp.eq.s32.totalorder %s34, 1
      %p204 = por %p202, %p203
      %p206 = scmp.ne.s32.totalorder %s191, %s205
      %p207 = scmp.eq.s32.totalorder %s34, 0
      %p208 = por %p206, %p207
      %s210 = sadd.s32 %s209, 1
      %p213 = scmp.eq.s32.totalorder %s28, 1
      %p214 = scmp.ne.s32.totalorder %s209, %s211
      %p215 = scmp.eq.s32.totalorder %s28, 0
      %p216 = por %p214, %p215
      %p217 = scmp.ne.s32.totalorder %s209, %s211
      %p218 = scmp.eq.s32.totalorder %s33, 1
      %p219 = por %p217, %p218
      %p220 = scmp.ne.s32.totalorder %s211, %s212
      %p221 = scmp.eq.s32.totalorder %s33, 0
      %p222 = por %p220, %p221
      %p223 = scmp.ne.s32.totalorder %s211, %s212
      %p224 = scmp.eq.s32.totalorder %s34, 1
      %p225 = por %p223, %p224
      %p227 = scmp.ne.s32.totalorder %s212, %s226
      %p228 = scmp.eq.s32.totalorder %s34, 0
      %p229 = por %p227, %p228
      %s231 = sadd.s32 %s230, 1
      %p234 = scmp.eq.s32.totalorder %s28, 1
      %p235 = scmp.ne.s32.totalorder %s230, %s232
      %p236 = scmp.eq.s32.totalorder %s28, 0
      %p237 = por %p235, %p236
      %p238 = scmp.ne.s32.totalorder %s230, %s232
      %p239 = scmp.eq.s32.totalorder %s33, 1
      %p240 = por %p238, %p239
      %p241 = scmp.ne.s32.totalorder %s232, %s233
      %p242 = scmp.eq.s32.totalorder %s33, 0
      %p243 = por %p241, %p242
      %p244 = scmp.ne.s32.totalorder %s232, %s233
      %p245 = scmp.eq.s32.totalorder %s34, 1
      %p246 = por %p244, %p245
      %p248 = scmp.ne.s32.totalorder %s233, %s247
      %p249 = scmp.eq.s32.totalorder %s34, 0
      %p250 = por %p248, %p249
      %s252 = sadd.s32 %s251, 1
      %p255 = scmp.eq.s32.totalorder %s28, 1
      %p256 = scmp.ne.s32.totalorder %s251, %s253
      %p257 = scmp.eq.s32.totalorder %s28, 0
      %p258 = por %p256, %p257
      %p259 = scmp.ne.s32.totalorder %s251, %s253
      %p260 = scmp.eq.s32.totalorder %s33, 1
      %p261 = por %p259, %p260
      %p262 = scmp.ne.s32.totalorder %s253, %s254
      %p263 = scmp.eq.s32.totalorder %s33, 0
      %p264 = por %p262, %p263
      %p265 = scmp.ne.s32.totalorder %s253, %s254
      %p266 = scmp.eq.s32.totalorder %s34, 1
      %p267 = por %p265, %p266
      %p269 = scmp.ne.s32.totalorder %s254, %s268
      %p270 = scmp.eq.s32.totalorder %s34, 0
      %p271 = por %p269, %p270
      %s273 = sadd.s32 %s272, 1
      %p276 = scmp.eq.s32.totalorder %s28, 1
      %p277 = scmp.ne.s32.totalorder %s272, %s274
      %p278 = scmp.eq.s32.totalorder %s28, 0
      %p279 = por %p277, %p278
      %p280 = scmp.ne.s32.totalorder %s272, %s274
      %p281 = scmp.eq.s32.totalorder %s33, 1
      %p282 = por %p280, %p281
      %p283 = scmp.ne.s32.totalorder %s274, %s275
      %p284 = scmp.eq.s32.totalorder %s33, 0
      %p285 = por %p283, %p284
      %p286 = scmp.ne.s32.totalorder %s274, %s275
      %p287 = scmp.eq.s32.totalorder %s34, 1
      %p288 = por %p286, %p287
      %p290 = scmp.ne.s32.totalorder %s275, %s289
      %p291 = scmp.eq.s32.totalorder %s34, 0
      %p292 = por %p290, %p291
      %s294 = sadd.s32 %s293, 1
      %p297 = scmp.eq.s32.totalorder %s28, 1
      %p298 = scmp.ne.s32.totalorder %s293, %s295
      %p299 = scmp.eq.s32.totalorder %s28, 0
      %p300 = por %p298, %p299
      %p301 = scmp.ne.s32.totalorder %s293, %s295
      %p302 = scmp.eq.s32.totalorder %s33, 1
      %p303 = por %p301, %p302
      %p304 = scmp.ne.s32.totalorder %s295, %s296
      %p305 = scmp.eq.s32.totalorder %s33, 0
      %p306 = por %p304, %p305
      %p307 = scmp.ne.s32.totalorder %s295, %s296
      %p308 = scmp.eq.s32.totalorder %s34, 1
      %p309 = por %p307, %p308
      %p311 = scmp.ne.s32.totalorder %s296, %s310
      %p312 = scmp.eq.s32.totalorder %s34, 0
      %p313 = por %p311, %p312
      %s314 = ssub.s32 %s28, %s35
      %p315 = scmp.eq.s32.totalorder %s314, 0
      %s317 = sadd.s32 %s316, 1
      %s318 = scalar_select %p315, %s316, %s317
      %p321 = pneg %p315
      %p322 = scmp.eq.s32.totalorder %s28, 1
      %p323 = por %p321, %p322
      %p324 = scmp.ne.s32.totalorder %s316, %s319
      %p325 = scmp.eq.s32.totalorder %s28, 0
      %p326 = por %p324, %p325
      %p327 = scmp.ne.s32.totalorder %s316, %s319
      %p328 = scmp.eq.s32.totalorder %s33, 1
      %p329 = por %p327, %p328
      %p330 = scmp.ne.s32.totalorder %s319, %s320
      %p331 = scmp.eq.s32.totalorder %s33, 0
      %p332 = por %p330, %p331
      %p333 = scmp.ne.s32.totalorder %s319, %s320
      %p334 = scmp.eq.s32.totalorder %s34, 1
      %p335 = por %p333, %p334
      %p337 = scmp.ne.s32.totalorder %s320, %s336
      %p338 = scmp.eq.s32.totalorder %s34, 0
      %p339 = por %p337, %p338
      %p340 = scmp.le.s32.totalorder 1, %s28
      %p341 = scmp.lt.s32.totalorder %s28, 3
      %p342 = pnand %p340, %p341
      %p343 = pneg %p342
      // Predicated region
      $region9: #{tpu_custom_call.1} parent=5 // pred_check
        _
      $region10: #{tpu_custom_call.1} parent=5 // pred_check_branch
        %345 = sbr.rel (%p342) target = $region12
      $region11: #{tpu_custom_call.1} parent=5 // pred_region
        %s346 = ssub.s32 %s28, 1
        // Predicated region
        $region13: #{tpu_custom_call.1} parent=11 // pred_check
          %p347 = pneg %p75
        $region14: #{tpu_custom_call.1} parent=11 // pred_check_branch
          %349 = sbr.rel (%p347) target = $region16
        $region15: #{tpu_custom_call.1} parent=11 // pred_region
          _
        $region16: #{tpu_custom_call.1} parent=11 // pred_fallthru
          _
        // Predicated region
        $region17: #{tpu_custom_call.1} parent=11 // pred_check
          %p350 = pneg %p96
        $region18: #{tpu_custom_call.1} parent=11 // pred_check_branch
          %352 = sbr.rel (%p350) target = $region20
        $region19: #{tpu_custom_call.1} parent=11 // pred_region
          %s354 = ssub.s32 2048, 2048
          %355 = vsyncadd [#allocation6], %s354
          %s356 = sshll.u32 [#allocation5], 4
          %s357 = int_to_ptr.vmem [resolvable:$true] %s356
          %362 = dma.hbm_to_vmem [thread:$0]  %s2, 2048, %s357, [#allocation6], 128, 128, 8
        $region20: #{tpu_custom_call.1} parent=11 // pred_fallthru
          _
        // Predicated region
        $region21: #{tpu_custom_call.1} parent=11 // pred_check
          %p363 = pneg %p117
        $region22: #{tpu_custom_call.1} parent=11 // pred_check_branch
          %365 = sbr.rel (%p363) target = $region24
        $region23: #{tpu_custom_call.1} parent=11 // pred_region
          _
        $region24: #{tpu_custom_call.1} parent=11 // pred_fallthru
          _
        // Predicated region
        $region25: #{tpu_custom_call.1} parent=11 // pred_check
          %p366 = pneg %p138
        $region26: #{tpu_custom_call.1} parent=11 // pred_check_branch
          %368 = sbr.rel (%p366) target = $region28
        $region27: #{tpu_custom_call.1} parent=11 // pred_region
          %s370 = ssub.s32 512, 512
          %371 = vsyncadd [#allocation6], %s370
          %s372 = sshll.u32 [#allocation7], 4
          %s373 = int_to_ptr.vmem [resolvable:$true] %s372
          %378 = dma.hbm_to_vmem [thread:$0]  %s4, 512, %s373, [#allocation6], 64, 64, 4
        $region28: #{tpu_custom_call.1} parent=11 // pred_fallthru
          _
        // Predicated region
        $region29: #{tpu_custom_call.1} parent=11 // pred_check
          %p379 = pneg %p159
        $region30: #{tpu_custom_call.1} parent=11 // pred_check_branch
          %381 = sbr.rel (%p379) target = $region32
        $region31: #{tpu_custom_call.1} parent=11 // pred_region
          %s383 = ssub.s32 1024, 1024
          %384 = vsyncadd [#allocation9], %s383
          %s385 = sshll.u32 [#allocation8], 4
          %s386 = int_to_ptr.vmem [resolvable:$true] %s385
          %391 = dma.hbm_to_vmem [thread:$0]  %s5, 1024, %s386, [#allocation9], 128, 128, 8
        $region32: #{tpu_custom_call.1} parent=11 // pred_fallthru
          _
        // Predicated region
        $region33: #{tpu_custom_call.1} parent=11 // pred_check
          %p392 = pneg %p180
        $region34: #{tpu_custom_call.1} parent=11 // pred_check_branch
          %394 = sbr.rel (%p392) target = $region36
        $region35: #{tpu_custom_call.1} parent=11 // pred_region
          %s396 = ssub.s32 1024, 1024
          %397 = vsyncadd [#allocation9], %s396
          %s398 = sshll.u32 [#allocation10], 4
          %s399 = int_to_ptr.vmem [resolvable:$true] %s398
          %404 = dma.hbm_to_vmem [thread:$0]  %s6, 1024, %s399, [#allocation9], 64, 64, 4
        $region36: #{tpu_custom_call.1} parent=11 // pred_fallthru
          _
        // Predicated region
        $region37: #{tpu_custom_call.1} parent=11 // pred_check
          %p405 = pneg %p201
        $region38: #{tpu_custom_call.1} parent=11 // pred_check_branch
          %407 = sbr.rel (%p405) target = $region40
        $region39: #{tpu_custom_call.1} parent=11 // pred_region
          _
        $region40: #{tpu_custom_call.1} parent=11 // pred_fallthru
          _
        // Predicated region
        $region41: #{tpu_custom_call.1} parent=11 // pred_check
          %p408 = pneg %p222
        $region42: #{tpu_custom_call.1} parent=11 // pred_check_branch
          %410 = sbr.rel (%p408) target = $region44
        $region43: #{tpu_custom_call.1} parent=11 // pred_region
          _
        $region44: #{tpu_custom_call.1} parent=11 // pred_fallthru
          _
        // Predicated region
        $region45: #{tpu_custom_call.1} parent=11 // pred_check
          %p411 = pneg %p243
        $region46: #{tpu_custom_call.1} parent=11 // pred_check_branch
          %413 = sbr.rel (%p411) target = $region48
        $region47: #{tpu_custom_call.1} parent=11 // pred_region
          %s415 = ssub.s32 4096, 4096
          %416 = vsyncadd [#allocation12], %s415
          %s417 = sshll.u32 [#allocation11], 4
          %s418 = int_to_ptr.vmem [resolvable:$true] %s417
          %423 = dma.hbm_to_vmem [thread:$0]  %s9, 4096, %s418, [#allocation12], 256, 256, 16
        $region48: #{tpu_custom_call.1} parent=11 // pred_fallthru
          _
        // Predicated region
        $region49: #{tpu_custom_call.1} parent=11 // pred_check
          %p424 = pneg %p264
        $region50: #{tpu_custom_call.1} parent=11 // pred_check_branch
          %426 = sbr.rel (%p424) target = $region52
        $region51: #{tpu_custom_call.1} parent=11 // pred_region
          _
        $region52: #{tpu_custom_call.1} parent=11 // pred_fallthru
          _
        // Predicated region
        $region53: #{tpu_custom_call.1} parent=11 // pred_check
          %p427 = pneg %p285
        $region54: #{tpu_custom_call.1} parent=11 // pred_check_branch
          %429 = sbr.rel (%p427) target = $region56
        $region55: #{tpu_custom_call.1} parent=11 // pred_region
          %s431 = ssub.s32 4096, 4096
          %432 = vsyncadd [#allocation12], %s431
          %s433 = sshll.u32 [#allocation13], 4
          %s434 = int_to_ptr.vmem [resolvable:$true] %s433
          %439 = dma.hbm_to_vmem [thread:$0]  %s11, 4096, %s434, [#allocation12], 64, 64, 4
        $region56: #{tpu_custom_call.1} parent=11 // pred_fallthru
          _
        // Predicated region
        $region57: #{tpu_custom_call.1} parent=11 // pred_check
          %p440 = pneg %p306
        $region58: #{tpu_custom_call.1} parent=11 // pred_check_branch
          %442 = sbr.rel (%p440) target = $region60
        $region59: #{tpu_custom_call.1} parent=11 // pred_region
          _
        $region60: #{tpu_custom_call.1} parent=11 // pred_fallthru
          _
      $region12: #{tpu_custom_call.1} parent=5 // pred_fallthru
        _
      %p443 = scmp.lt.s32.totalorder %s28, 2
      // Predicated region
      $region61: #{tpu_custom_call.1} parent=5 // pred_check
        %p444 = pneg %p443
      $region62: #{tpu_custom_call.1} parent=5 // pred_check_branch
        %446 = sbr.rel (%p444) target = $region64
      $region63: #{tpu_custom_call.1} parent=5 // pred_region
        // Predicated region
        $region65: #{tpu_custom_call.1} parent=63 // pred_check
          %p447 = pneg %p48
        $region66: #{tpu_custom_call.1} parent=63 // pred_check_branch
          %449 = sbr.rel (%p447) target = $region68
        $region67: #{tpu_custom_call.1} parent=63 // pred_region
          %s450 = sand.u32 %s38, 1
          %s451 = scalar_lea.sflag [#allocation3], %s450
          %s452 = sand.u32 %s38, 1
          %s453 = smul.addr %s452, 256
          %s454 = scalar_lea.vmem [#allocation2], %s453
          %s455 = smul.u32 4, %s28
          %s457 = ssub.s32 4096, 4096
          %458 = vsyncadd %s451, %s457
          %s459 = smul.addr %s455, 8
          %s460 = smul.addr %s459, 128
          %s461 = scalar_lea.hbm %s0, %s460
          %s462 = sshll.u32 %s454, 4
          %s463 = int_to_ptr.vmem [resolvable:$true] %s462
          %468 = dma.hbm_to_vmem [thread:$0]  %s461, 4096, %s463, %s451, 128, 128, 8
        $region68: #{tpu_custom_call.1} parent=63 // pred_fallthru
          _
      $region64: #{tpu_custom_call.1} parent=5 // pred_fallthru
        _
      %p469 = scmp.le.s32.totalorder 1, %s28
      %p470 = scmp.lt.s32.totalorder %s28, 3
      %p471 = pnand %p469, %p470
      %p472 = pneg %p471
      // Predicated region
      $region69: #{tpu_custom_call.1} parent=5 // pred_check
        _
      $region70: #{tpu_custom_call.1} parent=5 // pred_check_branch
        %474 = sbr.rel (%p471) target = $region72
      $region71: #{tpu_custom_call.1} parent=5 // pred_region
        %s475 = ssub.s32 %s28, 1
        %s476 = sand.u32 %s41, 1
        %s477 = scalar_lea.sflag [#allocation3], %s476
        %s478 = sand.u32 %s41, 1
        %s479 = smul.addr %s478, 256
        %s480 = scalar_lea.vmem [#allocation2], %s479
        // Predicated region
        $region73: #{tpu_custom_call.1} parent=71 // pred_check
          %p481 = pneg %p54
        $region74: #{tpu_custom_call.1} parent=71 // pred_check_branch
          %483 = sbr.rel (%p481) target = $region76
        $region75: #{tpu_custom_call.1} parent=71 // pred_region
          %484 = dma.done %s477, 4096
        $region76: #{tpu_custom_call.1} parent=71 // pred_fallthru
          _
        // Predicated region
        $region77: #{tpu_custom_call.1} parent=71 // pred_check
          %p485 = pneg %p96
        $region78: #{tpu_custom_call.1} parent=71 // pred_check_branch
          %487 = sbr.rel (%p485) target = $region80
        $region79: #{tpu_custom_call.1} parent=71 // pred_region
          %488 = dma.done [#allocation6], 2048
        $region80: #{tpu_custom_call.1} parent=71 // pred_fallthru
          _
        // Predicated region
        $region81: #{tpu_custom_call.1} parent=71 // pred_check
          %p489 = pneg %p138
        $region82: #{tpu_custom_call.1} parent=71 // pred_check_branch
          %491 = sbr.rel (%p489) target = $region84
        $region83: #{tpu_custom_call.1} parent=71 // pred_region
          %492 = dma.done [#allocation6], 512
        $region84: #{tpu_custom_call.1} parent=71 // pred_fallthru
          _
        // Predicated region
        $region85: #{tpu_custom_call.1} parent=71 // pred_check
          %p493 = pneg %p159
        $region86: #{tpu_custom_call.1} parent=71 // pred_check_branch
          %495 = sbr.rel (%p493) target = $region88
        $region87: #{tpu_custom_call.1} parent=71 // pred_region
          %496 = dma.done [#allocation9], 1024
        $region88: #{tpu_custom_call.1} parent=71 // pred_fallthru
          _
        // Predicated region
        $region89: #{tpu_custom_call.1} parent=71 // pred_check
          %p497 = pneg %p180
        $region90: #{tpu_custom_call.1} parent=71 // pred_check_branch
          %499 = sbr.rel (%p497) target = $region92
        $region91: #{tpu_custom_call.1} parent=71 // pred_region
          %500 = dma.done [#allocation9], 1024
        $region92: #{tpu_custom_call.1} parent=71 // pred_fallthru
          _
        // Predicated region
        $region93: #{tpu_custom_call.1} parent=71 // pred_check
          %p501 = pneg %p243
        $region94: #{tpu_custom_call.1} parent=71 // pred_check_branch
          %503 = sbr.rel (%p501) target = $region96
        $region95: #{tpu_custom_call.1} parent=71 // pred_region
          %504 = dma.done [#allocation12], 4096
        $region96: #{tpu_custom_call.1} parent=71 // pred_fallthru
          _
        // Predicated region
        $region97: #{tpu_custom_call.1} parent=71 // pred_check
          %p505 = pneg %p285
        $region98: #{tpu_custom_call.1} parent=71 // pred_check_branch
          %507 = sbr.rel (%p505) target = $region100
        $region99: #{tpu_custom_call.1} parent=71 // pred_region
          %508 = dma.done [#allocation12], 4096
        $region100: #{tpu_custom_call.1} parent=71 // pred_fallthru
          _
        %s509 = sand.u32 %s41, 1
        %s510 = scalar_lea.sflag [#allocation3], %s509
        %s511 = sand.u32 %s41, 1
        %s512 = smul.addr %s511, 256
        %s513 = scalar_lea.vmem [#allocation2], %s512
        %p514 = pneg %p54
        %p515 = pneg %p51
        %p516 = pneg %p75
        %p517 = pneg %p72
        %p518 = pneg %p96
        %p519 = pneg %p93
        %p520 = pneg %p117
        %p521 = pneg %p114
        %p522 = pneg %p138
        %p523 = pneg %p135
        %p524 = pneg %p159
        %p525 = pneg %p156
        %p526 = pneg %p180
        %p527 = pneg %p177
        %p528 = pneg %p201
        %p529 = pneg %p198
        %p530 = pneg %p222
        %p531 = pneg %p219
        %p532 = pneg %p243
        %p533 = pneg %p240
        %p534 = pneg %p264
        %p535 = pneg %p261
        %p536 = pneg %p285
        %p537 = pneg %p282
        %p538 = pneg %p306
        %p539 = pneg %p303
        %p540 = pneg %p332
        %p541 = pneg %p329
        %s542 = sand.u32 %s319, 1
        %s543 = scalar_lea.sflag [#allocation4], %s542
        %s544 = sand.u32 %s319, 1
        %s545 = smul.addr %s544, 256
        %s546 = scalar_lea.vmem [#allocation14], %s545
        %s547 = smul.u32 4, %s33
        %s548 = smul.u32 4, %s33
        %v550 = vld [vmem:[%s480] sm:$0xff]
        %v551 = vld [vmem:[%s480 + $0x8] sm:$0xff]
        %v552 = vld [vmem:[%s480 + $0x10] sm:$0xff]
        %v553 = vld [vmem:[%s480 + $0x18] sm:$0xff]
        %v554 = vld [vmem:[%s480 + $0x20] sm:$0xff]
        %v555 = vld [vmem:[%s480 + $0x28] sm:$0xff]
        %v556 = vld [vmem:[%s480 + $0x30] sm:$0xff]
        %v557 = vld [vmem:[%s480 + $0x38] sm:$0xff]
        %v558 = vld [vmem:[%s480 + $0x40] sm:$0xff]
        %v559 = vld [vmem:[%s480 + $0x48] sm:$0xff]
        %v560 = vld [vmem:[%s480 + $0x50] sm:$0xff]
        %v561 = vld [vmem:[%s480 + $0x58] sm:$0xff]
        %v562 = vld [vmem:[%s480 + $0x60] sm:$0xff]
        %v563 = vld [vmem:[%s480 + $0x68] sm:$0xff]
        %v564 = vld [vmem:[%s480 + $0x70] sm:$0xff]
        %v565 = vld [vmem:[%s480 + $0x78] sm:$0xff]
        %v566 = vld [vmem:[%s480 + $0x80] sm:$0xff]
        %v567 = vld [vmem:[%s480 + $0x88] sm:$0xff]
        %v568 = vld [vmem:[%s480 + $0x90] sm:$0xff]
        %v569 = vld [vmem:[%s480 + $0x98] sm:$0xff]
        %v570 = vld [vmem:[%s480 + $0xa0] sm:$0xff]
        %v571 = vld [vmem:[%s480 + $0xa8] sm:$0xff]
        %v572 = vld [vmem:[%s480 + $0xb0] sm:$0xff]
        %v573 = vld [vmem:[%s480 + $0xb8] sm:$0xff]
        %v574 = vld [vmem:[%s480 + $0xc0] sm:$0xff]
        %v575 = vld [vmem:[%s480 + $0xc8] sm:$0xff]
        %v576 = vld [vmem:[%s480 + $0xd0] sm:$0xff]
        %v577 = vld [vmem:[%s480 + $0xd8] sm:$0xff]
        %v578 = vld [vmem:[%s480 + $0xe0] sm:$0xff]
        %v579 = vld [vmem:[%s480 + $0xe8] sm:$0xff]
        %v580 = vld [vmem:[%s480 + $0xf0] sm:$0xff]
        %v581 = vld [vmem:[%s480 + $0xf8] sm:$0xff]
        %v582 = vld [vmem:[%s1] sm:$0x1]
        %583 = vadd.xlane.f32.xlu0 %v550
        %v584 = vpop.xlane.xlu0 %583
        %585 = vadd.xlane.f32.xlu0 %v551
        %v586 = vpop.xlane.xlu0 %585
        %587 = vadd.xlane.f32.xlu0 %v552
        %v588 = vpop.xlane.xlu0 %587
        %589 = vadd.xlane.f32.xlu0 %v553
        %v590 = vpop.xlane.xlu0 %589
        %591 = vadd.xlane.f32.xlu0 %v554
        %v592 = vpop.xlane.xlu0 %591
        %593 = vadd.xlane.f32.xlu0 %v555
        %v594 = vpop.xlane.xlu0 %593
        %595 = vadd.xlane.f32.xlu0 %v556
        %v596 = vpop.xlane.xlu0 %595
        %597 = vadd.xlane.f32.xlu0 %v557
        %v598 = vpop.xlane.xlu0 %597
        %599 = vadd.xlane.f32.xlu0 %v558
        %v600 = vpop.xlane.xlu0 %599
        %601 = vadd.xlane.f32.xlu0 %v559
        %v602 = vpop.xlane.xlu0 %601
        %603 = vadd.xlane.f32.xlu0 %v560
        %v604 = vpop.xlane.xlu0 %603
        %605 = vadd.xlane.f32.xlu0 %v561
        %v606 = vpop.xlane.xlu0 %605
        %607 = vadd.xlane.f32.xlu0 %v562
        %v608 = vpop.xlane.xlu0 %607
        %609 = vadd.xlane.f32.xlu0 %v563
        %v610 = vpop.xlane.xlu0 %609
        %611 = vadd.xlane.f32.xlu0 %v564
        %v612 = vpop.xlane.xlu0 %611
        %613 = vadd.xlane.f32.xlu0 %v565
        %v614 = vpop.xlane.xlu0 %613
        %615 = vadd.xlane.f32.xlu0 %v566
        %v616 = vpop.xlane.xlu0 %615
        %617 = vadd.xlane.f32.xlu0 %v567
        %v618 = vpop.xlane.xlu0 %617
        %619 = vadd.xlane.f32.xlu0 %v568
        %v620 = vpop.xlane.xlu0 %619
        %621 = vadd.xlane.f32.xlu0 %v569
        %v622 = vpop.xlane.xlu0 %621
        %623 = vadd.xlane.f32.xlu0 %v570
        %v624 = vpop.xlane.xlu0 %623
        %625 = vadd.xlane.f32.xlu0 %v571
        %v626 = vpop.xlane.xlu0 %625
        %627 = vadd.xlane.f32.xlu0 %v572
        %v628 = vpop.xlane.xlu0 %627
        %629 = vadd.xlane.f32.xlu0 %v573
        %v630 = vpop.xlane.xlu0 %629
        %631 = vadd.xlane.f32.xlu0 %v574
        %v632 = vpop.xlane.xlu0 %631
        %633 = vadd.xlane.f32.xlu0 %v575
        %v634 = vpop.xlane.xlu0 %633
        %635 = vadd.xlane.f32.xlu0 %v576
        %v636 = vpop.xlane.xlu0 %635
        %637 = vadd.xlane.f32.xlu0 %v577
        %v638 = vpop.xlane.xlu0 %637
        %639 = vadd.xlane.f32.xlu0 %v578
        %v640 = vpop.xlane.xlu0 %639
        %641 = vadd.xlane.f32.xlu0 %v579
        %v642 = vpop.xlane.xlu0 %641
        %643 = vadd.xlane.f32.xlu0 %v580
        %v644 = vpop.xlane.xlu0 %643
        %645 = vadd.xlane.f32.xlu0 %v581
        %v646 = vpop.xlane.xlu0 %645
        %v647 = vrcp.pop 128.0
        %v648 = vmul.f32 %v584, %v647
        %v649 = vmul.f32 %v586, %v647
        %v650 = vmul.f32 %v588, %v647
        %v651 = vmul.f32 %v590, %v647
        %v652 = vmul.f32 %v592, %v647
        %v653 = vmul.f32 %v594, %v647
        %v654 = vmul.f32 %v596, %v647
        %v655 = vmul.f32 %v598, %v647
        %v656 = vmul.f32 %v600, %v647
        %v657 = vmul.f32 %v602, %v647
        %v658 = vmul.f32 %v604, %v647
        %v659 = vmul.f32 %v606, %v647
        %v660 = vmul.f32 %v608, %v647
        %v661 = vmul.f32 %v610, %v647
        %v662 = vmul.f32 %v612, %v647
        %v663 = vmul.f32 %v614, %v647
        %v664 = vmul.f32 %v616, %v647
        %v665 = vmul.f32 %v618, %v647
        %v666 = vmul.f32 %v620, %v647
        %v667 = vmul.f32 %v622, %v647
        %v668 = vmul.f32 %v624, %v647
        %v669 = vmul.f32 %v626, %v647
        %v670 = vmul.f32 %v628, %v647
        %v671 = vmul.f32 %v630, %v647
        %v672 = vmul.f32 %v632, %v647
        %v673 = vmul.f32 %v634, %v647
        %v674 = vmul.f32 %v636, %v647
        %v675 = vmul.f32 %v638, %v647
        %v676 = vmul.f32 %v640, %v647
        %v677 = vmul.f32 %v642, %v647
        %v678 = vmul.f32 %v644, %v647
        %v679 = vmul.f32 %v646, %v647
        %v680 = vsub.f32 %v550, %v648
        %v681 = vsub.f32 %v551, %v649
        %v682 = vsub.f32 %v552, %v650
        %v683 = vsub.f32 %v553, %v651
        %v684 = vsub.f32 %v554, %v652
        %v685 = vsub.f32 %v555, %v653
        %v686 = vsub.f32 %v556, %v654
        %v687 = vsub.f32 %v557, %v655
        %v688 = vsub.f32 %v558, %v656
        %v689 = vsub.f32 %v559, %v657
        %v690 = vsub.f32 %v560, %v658
        %v691 = vsub.f32 %v561, %v659
        %v692 = vsub.f32 %v562, %v660
        %v693 = vsub.f32 %v563, %v661
        %v694 = vsub.f32 %v564, %v662
        %v695 = vsub.f32 %v565, %v663
        %v696 = vsub.f32 %v566, %v664
        %v697 = vsub.f32 %v567, %v665
        %v698 = vsub.f32 %v568, %v666
        %v699 = vsub.f32 %v569, %v667
        %v700 = vsub.f32 %v570, %v668
        %v701 = vsub.f32 %v571, %v669
        %v702 = vsub.f32 %v572, %v670
        %v703 = vsub.f32 %v573, %v671
        %v704 = vsub.f32 %v574, %v672
        %v705 = vsub.f32 %v575, %v673
        %v706 = vsub.f32 %v576, %v674
        %v707 = vsub.f32 %v577, %v675
        %v708 = vsub.f32 %v578, %v676
        %v709 = vsub.f32 %v579, %v677
        %v710 = vsub.f32 %v580, %v678
        %v711 = vsub.f32 %v581, %v679
        %v712 = vmul.f32 %v680, %v680
        %v713 = vmul.f32 %v681, %v681
        %v714 = vmul.f32 %v682, %v682
        %v715 = vmul.f32 %v683, %v683
        %v716 = vmul.f32 %v684, %v684
        %v717 = vmul.f32 %v685, %v685
        %v718 = vmul.f32 %v686, %v686
        %v719 = vmul.f32 %v687, %v687
        %v720 = vmul.f32 %v688, %v688
        %v721 = vmul.f32 %v689, %v689
        %v722 = vmul.f32 %v690, %v690
        %v723 = vmul.f32 %v691, %v691
        %v724 = vmul.f32 %v692, %v692
        %v725 = vmul.f32 %v693, %v693
        %v726 = vmul.f32 %v694, %v694
        %v727 = vmul.f32 %v695, %v695
        %v728 = vmul.f32 %v696, %v696
        %v729 = vmul.f32 %v697, %v697
        %v730 = vmul.f32 %v698, %v698
        %v731 = vmul.f32 %v699, %v699
        %v732 = vmul.f32 %v700, %v700
        %v733 = vmul.f32 %v701, %v701
        %v734 = vmul.f32 %v702, %v702
        %v735 = vmul.f32 %v703, %v703
        %v736 = vmul.f32 %v704, %v704
        %v737 = vmul.f32 %v705, %v705
        %v738 = vmul.f32 %v706, %v706
        %v739 = vmul.f32 %v707, %v707
        %v740 = vmul.f32 %v708, %v708
        %v741 = vmul.f32 %v709, %v709
        %v742 = vmul.f32 %v710, %v710
        %v743 = vmul.f32 %v711, %v711
        %744 = vadd.xlane.f32.xlu0 %v712
        %v745 = vpop.xlane.xlu0 %744
        %746 = vadd.xlane.f32.xlu0 %v713
        %v747 = vpop.xlane.xlu0 %746
        %748 = vadd.xlane.f32.xlu0 %v714
        %v749 = vpop.xlane.xlu0 %748
        %750 = vadd.xlane.f32.xlu0 %v715
        %v751 = vpop.xlane.xlu0 %750
        %752 = vadd.xlane.f32.xlu0 %v716
        %v753 = vpop.xlane.xlu0 %752
        %754 = vadd.xlane.f32.xlu0 %v717
        %v755 = vpop.xlane.xlu0 %754
        %756 = vadd.xlane.f32.xlu0 %v718
        %v757 = vpop.xlane.xlu0 %756
        %758 = vadd.xlane.f32.xlu0 %v719
        %v759 = vpop.xlane.xlu0 %758
        %760 = vadd.xlane.f32.xlu0 %v720
        %v761 = vpop.xlane.xlu0 %760
        %762 = vadd.xlane.f32.xlu0 %v721
        %v763 = vpop.xlane.xlu0 %762
        %764 = vadd.xlane.f32.xlu0 %v722
        %v765 = vpop.xlane.xlu0 %764
        %766 = vadd.xlane.f32.xlu0 %v723
        %v767 = vpop.xlane.xlu0 %766
        %768 = vadd.xlane.f32.xlu0 %v724
        %v769 = vpop.xlane.xlu0 %768
        %770 = vadd.xlane.f32.xlu0 %v725
        %v771 = vpop.xlane.xlu0 %770
        %772 = vadd.xlane.f32.xlu0 %v726
        %v773 = vpop.xlane.xlu0 %772
        %774 = vadd.xlane.f32.xlu0 %v727
        %v775 = vpop.xlane.xlu0 %774
        %776 = vadd.xlane.f32.xlu0 %v728
        %v777 = vpop.xlane.xlu0 %776
        %778 = vadd.xlane.f32.xlu0 %v729
        %v779 = vpop.xlane.xlu0 %778
        %780 = vadd.xlane.f32.xlu0 %v730
        %v781 = vpop.xlane.xlu0 %780
        %782 = vadd.xlane.f32.xlu0 %v731
        %v783 = vpop.xlane.xlu0 %782
        %784 = vadd.xlane.f32.xlu0 %v732
        %v785 = vpop.xlane.xlu0 %784
        %786 = vadd.xlane.f32.xlu0 %v733
        %v787 = vpop.xlane.xlu0 %786
        %788 = vadd.xlane.f32.xlu0 %v734
        %v789 = vpop.xlane.xlu0 %788
        %790 = vadd.xlane.f32.xlu0 %v735
        %v791 = vpop.xlane.xlu0 %790
        %792 = vadd.xlane.f32.xlu0 %v736
        %v793 = vpop.xlane.xlu0 %792
        %794 = vadd.xlane.f32.xlu0 %v737
        %v795 = vpop.xlane.xlu0 %794
        %796 = vadd.xlane.f32.xlu0 %v738
        %v797 = vpop.xlane.xlu0 %796
        %798 = vadd.xlane.f32.xlu0 %v739
        %v799 = vpop.xlane.xlu0 %798
        %800 = vadd.xlane.f32.xlu0 %v740
        %v801 = vpop.xlane.xlu0 %800
        %802 = vadd.xlane.f32.xlu0 %v741
        %v803 = vpop.xlane.xlu0 %802
        %804 = vadd.xlane.f32.xlu0 %v742
        %v805 = vpop.xlane.xlu0 %804
        %806 = vadd.xlane.f32.xlu0 %v743
        %v807 = vpop.xlane.xlu0 %806
        %v808 = vmul.f32 %v745, %v647
        %v809 = vmul.f32 %v747, %v647
        %v810 = vmul.f32 %v749, %v647
        %v811 = vmul.f32 %v751, %v647
        %v812 = vmul.f32 %v753, %v647
        %v813 = vmul.f32 %v755, %v647
        %v814 = vmul.f32 %v757, %v647
        %v815 = vmul.f32 %v759, %v647
        %v816 = vmul.f32 %v761, %v647
        %v817 = vmul.f32 %v763, %v647
        %v818 = vmul.f32 %v765, %v647
        %v819 = vmul.f32 %v767, %v647
        %v820 = vmul.f32 %v769, %v647
        %v821 = vmul.f32 %v771, %v647
        %v822 = vmul.f32 %v773, %v647
        %v823 = vmul.f32 %v775, %v647
        %v824 = vmul.f32 %v777, %v647
        %v825 = vmul.f32 %v779, %v647
        %v826 = vmul.f32 %v781, %v647
        %v827 = vmul.f32 %v783, %v647
        %v828 = vmul.f32 %v785, %v647
        %v829 = vmul.f32 %v787, %v647
        %v830 = vmul.f32 %v789, %v647
        %v831 = vmul.f32 %v791, %v647
        %v832 = vmul.f32 %v793, %v647
        %v833 = vmul.f32 %v795, %v647
        %v834 = vmul.f32 %v797, %v647
        %v835 = vmul.f32 %v799, %v647
        %v836 = vmul.f32 %v801, %v647
        %v837 = vmul.f32 %v803, %v647
        %v838 = vmul.f32 %v805, %v647
        %v839 = vmul.f32 %v807, %v647
        %v840 = vadd.f32 %v808, 1e-05
        %v841 = vadd.f32 %v809, 1e-05
        %v842 = vadd.f32 %v810, 1e-05
        %v843 = vadd.f32 %v811, 1e-05
        %v844 = vadd.f32 %v812, 1e-05
        %v845 = vadd.f32 %v813, 1e-05
        %v846 = vadd.f32 %v814, 1e-05
        %v847 = vadd.f32 %v815, 1e-05
        %v848 = vadd.f32 %v816, 1e-05
        %v849 = vadd.f32 %v817, 1e-05
        %v850 = vadd.f32 %v818, 1e-05
        %v851 = vadd.f32 %v819, 1e-05
        %v852 = vadd.f32 %v820, 1e-05
        %v853 = vadd.f32 %v821, 1e-05
        %v854 = vadd.f32 %v822, 1e-05
        %v855 = vadd.f32 %v823, 1e-05
        %v856 = vadd.f32 %v824, 1e-05
        %v857 = vadd.f32 %v825, 1e-05
        %v858 = vadd.f32 %v826, 1e-05
        %v859 = vadd.f32 %v827, 1e-05
        %v860 = vadd.f32 %v828, 1e-05
        %v861 = vadd.f32 %v829, 1e-05
        %v862 = vadd.f32 %v830, 1e-05
        %v863 = vadd.f32 %v831, 1e-05
        %v864 = vadd.f32 %v832, 1e-05
        %v865 = vadd.f32 %v833, 1e-05
        %v866 = vadd.f32 %v834, 1e-05
        %v867 = vadd.f32 %v835, 1e-05
        %v868 = vadd.f32 %v836, 1e-05
        %v869 = vadd.f32 %v837, 1e-05
        %v870 = vadd.f32 %v838, 1e-05
        %v871 = vadd.f32 %v839, 1e-05
        %v872 = vrsqrt.pop %v840
        %v873 = vrsqrt.pop %v841
        %v874 = vrsqrt.pop %v842
        %v875 = vrsqrt.pop %v843
        %v876 = vrsqrt.pop %v844
        %v877 = vrsqrt.pop %v845
        %v878 = vrsqrt.pop %v846
        %v879 = vrsqrt.pop %v847
        %v880 = vrsqrt.pop %v848
        %v881 = vrsqrt.pop %v849
        %v882 = vrsqrt.pop %v850
        %v883 = vrsqrt.pop %v851
        %v884 = vrsqrt.pop %v852
        %v885 = vrsqrt.pop %v853
        %v886 = vrsqrt.pop %v854
        %v887 = vrsqrt.pop %v855
        %v888 = vrsqrt.pop %v856
        %v889 = vrsqrt.pop %v857
        %v890 = vrsqrt.pop %v858
        %v891 = vrsqrt.pop %v859
        %v892 = vrsqrt.pop %v860
        %v893 = vrsqrt.pop %v861
        %v894 = vrsqrt.pop %v862
        %v895 = vrsqrt.pop %v863
        %v896 = vrsqrt.pop %v864
        %v897 = vrsqrt.pop %v865
        %v898 = vrsqrt.pop %v866
        %v899 = vrsqrt.pop %v867
        %v900 = vrsqrt.pop %v868
        %v901 = vrsqrt.pop %v869
        %v902 = vrsqrt.pop %v870
        %v903 = vrsqrt.pop %v871
        %v904 = vmul.f32 %v680, %v872
        %v905 = vmul.f32 %v681, %v873
        %v906 = vmul.f32 %v682, %v874
        %v907 = vmul.f32 %v683, %v875
        %v908 = vmul.f32 %v684, %v876
        %v909 = vmul.f32 %v685, %v877
        %v910 = vmul.f32 %v686, %v878
        %v911 = vmul.f32 %v687, %v879
        %v912 = vmul.f32 %v688, %v880
        %v913 = vmul.f32 %v689, %v881
        %v914 = vmul.f32 %v690, %v882
        %v915 = vmul.f32 %v691, %v883
        %v916 = vmul.f32 %v692, %v884
        %v917 = vmul.f32 %v693, %v885
        %v918 = vmul.f32 %v694, %v886
        %v919 = vmul.f32 %v695, %v887
        %v920 = vmul.f32 %v696, %v888
        %v921 = vmul.f32 %v697, %v889
        %v922 = vmul.f32 %v698, %v890
        %v923 = vmul.f32 %v699, %v891
        %v924 = vmul.f32 %v700, %v892
        %v925 = vmul.f32 %v701, %v893
        %v926 = vmul.f32 %v702, %v894
        %v927 = vmul.f32 %v703, %v895
        %v928 = vmul.f32 %v704, %v896
        %v929 = vmul.f32 %v705, %v897
        %v930 = vmul.f32 %v706, %v898
        %v931 = vmul.f32 %v707, %v899
        %v932 = vmul.f32 %v708, %v900
        %v933 = vmul.f32 %v709, %v901
        %v934 = vmul.f32 %v710, %v902
        %v935 = vmul.f32 %v711, %v903
        %v937 = vlaneseq
        %v938 = vshrl.u32 %v937, 7
        %v939 = vsub.s32 0, %v938
        %v940 = vrot.slane %v582, %v939
        %v942 = vmul.f32 %v904, %v940
        %v943 = vmul.f32 %v905, %v940
        %v944 = vmul.f32 %v906, %v940
        %v945 = vmul.f32 %v907, %v940
        %v946 = vmul.f32 %v908, %v940
        %v947 = vmul.f32 %v909, %v940
        %v948 = vmul.f32 %v910, %v940
        %v949 = vmul.f32 %v911, %v940
        %v950 = vmul.f32 %v912, %v940
        %v951 = vmul.f32 %v913, %v940
        %v952 = vmul.f32 %v914, %v940
        %v953 = vmul.f32 %v915, %v940
        %v954 = vmul.f32 %v916, %v940
        %v955 = vmul.f32 %v917, %v940
        %v956 = vmul.f32 %v918, %v940
        %v957 = vmul.f32 %v919, %v940
        %v958 = vmul.f32 %v920, %v940
        %v959 = vmul.f32 %v921, %v940
        %v960 = vmul.f32 %v922, %v940
        %v961 = vmul.f32 %v923, %v940
        %v962 = vmul.f32 %v924, %v940
        %v963 = vmul.f32 %v925, %v940
        %v964 = vmul.f32 %v926, %v940
        %v965 = vmul.f32 %v927, %v940
        %v966 = vmul.f32 %v928, %v940
        %v967 = vmul.f32 %v929, %v940
        %v968 = vmul.f32 %v930, %v940
        %v969 = vmul.f32 %v931, %v940
        %v970 = vmul.f32 %v932, %v940
        %v971 = vmul.f32 %v933, %v940
        %v972 = vmul.f32 %v934, %v940
        %v973 = vmul.f32 %v935, %v940
        %v974 = vpack.c.bf16 %v943, %v942
        %v975 = vpack.c.bf16 %v945, %v944
        %v976 = vpack.c.bf16 %v947, %v946
        %v977 = vpack.c.bf16 %v949, %v948
        %v978 = vpack.c.bf16 %v951, %v950
        %v979 = vpack.c.bf16 %v953, %v952
        %v980 = vpack.c.bf16 %v955, %v954
        %v981 = vpack.c.bf16 %v957, %v956
        %v982 = vpack.c.bf16 %v959, %v958
        %v983 = vpack.c.bf16 %v961, %v960
        %v984 = vpack.c.bf16 %v963, %v962
        %v985 = vpack.c.bf16 %v965, %v964
        %v986 = vpack.c.bf16 %v967, %v966
        %v987 = vpack.c.bf16 %v969, %v968
        %v988 = vpack.c.bf16 %v971, %v970
        %v989 = vpack.c.bf16 %v973, %v972
        %v990 = vld [vmem:[#allocation5] sm:$0xff]
        %v991 = vld [vmem:[#allocation5 + $0x8] sm:$0xff]
        %v992 = vld [vmem:[#allocation5 + $0x10] sm:$0xff]
        %v993 = vld [vmem:[#allocation5 + $0x18] sm:$0xff]
        %v994 = vld [vmem:[#allocation5 + $0x20] sm:$0xff]
        %v995 = vld [vmem:[#allocation5 + $0x28] sm:$0xff]
        %v996 = vld [vmem:[#allocation5 + $0x30] sm:$0xff]
        %v997 = vld [vmem:[#allocation5 + $0x38] sm:$0xff]
        %v998 = vld [vmem:[#allocation5 + $0x40] sm:$0xff]
        %v999 = vld [vmem:[#allocation5 + $0x48] sm:$0xff]
        %v1000 = vld [vmem:[#allocation5 + $0x50] sm:$0xff]
        %v1001 = vld [vmem:[#allocation5 + $0x58] sm:$0xff]
        %v1002 = vld [vmem:[#allocation5 + $0x60] sm:$0xff]
        %v1003 = vld [vmem:[#allocation5 + $0x68] sm:$0xff]
        %v1004 = vld [vmem:[#allocation5 + $0x70] sm:$0xff]
        %v1005 = vld [vmem:[#allocation5 + $0x78] sm:$0xff]
        %v1006 = vld [vmem:[%s3] sm:$0x3]
        %v1008 = vlaneseq
        %v1009 = vshrl.u32 %v1008, 7
        %v1010 = vsub.s32 0, %v1009
        %v1011 = vrot.slane %v1006, %v1010
        %v1012 = vlaneseq
        %v1013 = vshrl.u32 %v1012, 7
        %v1014 = vsub.s32 1, %v1013
        %v1015 = vrot.slane %v1006, %v1014
        %v1034 = vunpack.c.l.b16 %v990
        %v1035 = vunpack.c.h.b16 %v990
        %v1036 = vunpack.c.l.b16 %v991
        %v1037 = vunpack.c.h.b16 %v991
        %v1038 = vunpack.c.l.b16 %v992
        %v1039 = vunpack.c.h.b16 %v992
        %v1040 = vunpack.c.l.b16 %v993
        %v1041 = vunpack.c.h.b16 %v993
        %v1042 = vunpack.c.l.b16 %v994
        %v1043 = vunpack.c.h.b16 %v994
        %v1044 = vunpack.c.l.b16 %v995
        %v1045 = vunpack.c.h.b16 %v995
        %v1046 = vunpack.c.l.b16 %v996
        %v1047 = vunpack.c.h.b16 %v996
        %v1048 = vunpack.c.l.b16 %v997
        %v1049 = vunpack.c.h.b16 %v997
        %v1050 = vunpack.c.l.b16 %v998
        %v1051 = vunpack.c.h.b16 %v998
        %v1052 = vunpack.c.l.b16 %v999
        %v1053 = vunpack.c.h.b16 %v999
        %v1054 = vunpack.c.l.b16 %v1000
        %v1055 = vunpack.c.h.b16 %v1000
        %v1056 = vunpack.c.l.b16 %v1001
        %v1057 = vunpack.c.h.b16 %v1001
        %v1058 = vunpack.c.l.b16 %v1002
        %v1059 = vunpack.c.h.b16 %v1002
        %v1060 = vunpack.c.l.b16 %v1003
        %v1061 = vunpack.c.h.b16 %v1003
        %v1062 = vunpack.c.l.b16 %v1004
        %v1063 = vunpack.c.h.b16 %v1004
        %v1064 = vunpack.c.l.b16 %v1005
        %v1065 = vunpack.c.h.b16 %v1005
        %v1066 = vpack.c.b16 %v1036, %v1034
        %v1067 = vpack.c.b16 %v1037, %v1035
        %v1068 = vpack.c.b16 %v1040, %v1038
        %v1069 = vpack.c.b16 %v1041, %v1039
        %v1070 = vpack.c.b16 %v1044, %v1042
        %v1071 = vpack.c.b16 %v1045, %v1043
        %v1072 = vpack.c.b16 %v1048, %v1046
        %v1073 = vpack.c.b16 %v1049, %v1047
        %v1074 = vpack.c.b16 %v1052, %v1050
        %v1075 = vpack.c.b16 %v1053, %v1051
        %v1076 = vpack.c.b16 %v1056, %v1054
        %v1077 = vpack.c.b16 %v1057, %v1055
        %v1078 = vpack.c.b16 %v1060, %v1058
        %v1079 = vpack.c.b16 %v1061, %v1059
        %v1080 = vpack.c.b16 %v1064, %v1062
        %v1081 = vpack.c.b16 %v1065, %v1063
        %1098 = vmatprep.subr.bf16.mxu0 %v1067
        %1099 = vmatpush1.bf16.msra.mxu0 %v1066
        %1100 = vmatprep.subr.bf16.mxu0 %v1069
        %1101 = vmatpush1.bf16.msra.mxu0 %v1068
        %1102 = vmatprep.subr.bf16.mxu0 %v1071
        %1103 = vmatpush1.bf16.msra.mxu0 %v1070
        %1104 = vmatprep.subr.bf16.mxu0 %v1073
        %1105 = vmatpush1.bf16.msra.mxu0 %v1072
        %1106 = vmatprep.subr.bf16.mxu0 %v1075
        %1107 = vmatpush1.bf16.msra.mxu0 %v1074
        %1108 = vmatprep.subr.bf16.mxu0 %v1077
        %1109 = vmatpush1.bf16.msra.mxu0 %v1076
        %1110 = vmatprep.subr.bf16.mxu0 %v1079
        %1111 = vmatpush1.bf16.msra.mxu0 %v1078
        %1112 = vmatprep.subr.bf16.mxu0 %v1081
        %1113 = vmatpush1.bf16.msra.mxu0 %v1080
        %1114 = vmatprep.subr.bf16.mxu0 0
        %1115 = vmatpush1.bf16.msra.mxu0 0
        %1116 = vmatprep.subr.bf16.mxu0 0
        %1117 = vmatpush1.bf16.msra.mxu0 0
        %1118 = vmatprep.subr.bf16.mxu0 0
        %1119 = vmatpush1.bf16.msra.mxu0 0
        %1120 = vmatprep.subr.bf16.mxu0 0
        %1121 = vmatpush1.bf16.msra.mxu0 0
        %1122 = vmatprep.subr.bf16.mxu0 0
        %1123 = vmatpush1.bf16.msra.mxu0 0
        %1124 = vmatprep.subr.bf16.mxu0 0
        %1125 = vmatpush1.bf16.msra.mxu0 0
        %1126 = vmatprep.subr.bf16.mxu0 0
        %1127 = vmatpush1.bf16.msra.mxu0 0
        %1128 = vmatprep.subr.bf16.mxu0 0
        %1129 = vmatpush1.bf16.msra.mxu0 0
        %1130 = vmatprep.mubr.bf16.mxu0 0
        %1131 = vmatmul.mubr.bf16.gmra.mrb[0].mxu0 %v974
        %v1132 = vpop.f32.mrb[0].mxu0
        %v1133 = vadd.f32 %v1011, %v1132
        %v1134 = vpop.f32.mrb[0].mxu0
        %v1135 = vadd.f32 %v1015, %v1134
        %v1136 = vpop.f32.mrb[0].mxu0
        %v1137 = vadd.f32 %v1011, %v1136
        %v1138 = vpop.f32.mrb[0].mxu0
        %v1139 = vadd.f32 %v1015, %v1138
        %1140 = vmatprep.mubr.bf16.mxu0 0
        %1141 = vmatmul.mubr.bf16.gmra.mrb[0].mxu0 %v975
        %v1142 = vpop.f32.mrb[0].mxu0
        %v1143 = vadd.f32 %v1011, %v1142
        %v1144 = vpop.f32.mrb[0].mxu0
        %v1145 = vadd.f32 %v1015, %v1144
        %v1146 = vpop.f32.mrb[0].mxu0
        %v1147 = vadd.f32 %v1011, %v1146
        %v1148 = vpop.f32.mrb[0].mxu0
        %v1149 = vadd.f32 %v1015, %v1148
        %1150 = vmatprep.mubr.bf16.mxu0 0
        %1151 = vmatmul.mubr.bf16.gmra.mrb[0].mxu0 %v976
        %v1152 = vpop.f32.mrb[0].mxu0
        %v1153 = vadd.f32 %v1011, %v1152
        %v1154 = vpop.f32.mrb[0].mxu0
        %v1155 = vadd.f32 %v1015, %v1154
        %v1156 = vpop.f32.mrb[0].mxu0
        %v1157 = vadd.f32 %v1011, %v1156
        %v1158 = vpop.f32.mrb[0].mxu0
        %v1159 = vadd.f32 %v1015, %v1158
        %1160 = vmatprep.mubr.bf16.mxu0 0
        %1161 = vmatmul.mubr.bf16.gmra.mrb[0].mxu0 %v977
        %v1162 = vpop.f32.mrb[0].mxu0
        %v1163 = vadd.f32 %v1011, %v1162
        %v1164 = vpop.f32.mrb[0].mxu0
        %v1165 = vadd.f32 %v1015, %v1164
        %v1166 = vpop.f32.mrb[0].mxu0
        %v1167 = vadd.f32 %v1011, %v1166
        %v1168 = vpop.f32.mrb[0].mxu0
        %v1169 = vadd.f32 %v1015, %v1168
        %1170 = vmatprep.mubr.bf16.mxu0 0
        %1171 = vmatmul.mubr.bf16.gmra.mrb[0].mxu0 %v978
        %v1172 = vpop.f32.mrb[0].mxu0
        %v1173 = vadd.f32 %v1011, %v1172
        %v1174 = vpop.f32.mrb[0].mxu0
        %v1175 = vadd.f32 %v1015, %v1174
        %v1176 = vpop.f32.mrb[0].mxu0
        %v1177 = vadd.f32 %v1011, %v1176
        %v1178 = vpop.f32.mrb[0].mxu0
        %v1179 = vadd.f32 %v1015, %v1178
        %1180 = vmatprep.mubr.bf16.mxu0 0
        %1181 = vmatmul.mubr.bf16.gmra.mrb[0].mxu0 %v979
        %v1182 = vpop.f32.mrb[0].mxu0
        %v1183 = vadd.f32 %v1011, %v1182
        %v1184 = vpop.f32.mrb[0].mxu0
        %v1185 = vadd.f32 %v1015, %v1184
        %v1186 = vpop.f32.mrb[0].mxu0
        %v1187 = vadd.f32 %v1011, %v1186
        %v1188 = vpop.f32.mrb[0].mxu0
        %v1189 = vadd.f32 %v1015, %v1188
        %1190 = vmatprep.mubr.bf16.mxu0 0
        %1191 = vmatmul.mubr.bf16.gmra.mrb[0].mxu0 %v980
        %v1192 = vpop.f32.mrb[0].mxu0
        %v1193 = vadd.f32 %v1011, %v1192
        %v1194 = vpop.f32.mrb[0].mxu0
        %v1195 = vadd.f32 %v1015, %v1194
        %v1196 = vpop.f32.mrb[0].mxu0
        %v1197 = vadd.f32 %v1011, %v1196
        %v1198 = vpop.f32.mrb[0].mxu0
        %v1199 = vadd.f32 %v1015, %v1198
        %1200 = vmatprep.mubr.bf16.mxu0 0
        %1201 = vmatmul.mubr.bf16.gmra.mrb[0].mxu0 %v981
        %v1202 = vpop.f32.mrb[0].mxu0
        %v1203 = vadd.f32 %v1011, %v1202
        %v1204 = vpop.f32.mrb[0].mxu0
        %v1205 = vadd.f32 %v1015, %v1204
        %v1206 = vpop.f32.mrb[0].mxu0
        %v1207 = vadd.f32 %v1011, %v1206
        %v1208 = vpop.f32.mrb[0].mxu0
        %v1209 = vadd.f32 %v1015, %v1208
        %1210 = vmatprep.mubr.bf16.mxu0 0
        %1211 = vmatmul.mubr.bf16.gmra.mrb[0].mxu0 %v982
        %v1212 = vpop.f32.mrb[0].mxu0
        %v1213 = vadd.f32 %v1011, %v1212
        %v1214 = vpop.f32.mrb[0].mxu0
        %v1215 = vadd.f32 %v1015, %v1214
        %v1216 = vpop.f32.mrb[0].mxu0
        %v1217 = vadd.f32 %v1011, %v1216
        %v1218 = vpop.f32.mrb[0].mxu0
        %v1219 = vadd.f32 %v1015, %v1218
        %1220 = vmatprep.mubr.bf16.mxu0 0
        %1221 = vmatmul.mubr.bf16.gmra.mrb[0].mxu0 %v983
        %v1222 = vpop.f32.mrb[0].mxu0
        %v1223 = vadd.f32 %v1011, %v1222
        %v1224 = vpop.f32.mrb[0].mxu0
        %v1225 = vadd.f32 %v1015, %v1224
        %v1226 = vpop.f32.mrb[0].mxu0
        %v1227 = vadd.f32 %v1011, %v1226
        %v1228 = vpop.f32.mrb[0].mxu0
        %v1229 = vadd.f32 %v1015, %v1228
        %1230 = vmatprep.mubr.bf16.mxu0 0
        %1231 = vmatmul.mubr.bf16.gmra.mrb[0].mxu0 %v984
        %v1232 = vpop.f32.mrb[0].mxu0
        %v1233 = vadd.f32 %v1011, %v1232
        %v1234 = vpop.f32.mrb[0].mxu0
        %v1235 = vadd.f32 %v1015, %v1234
        %v1236 = vpop.f32.mrb[0].mxu0
        %v1237 = vadd.f32 %v1011, %v1236
        %v1238 = vpop.f32.mrb[0].mxu0
        %v1239 = vadd.f32 %v1015, %v1238
        %1240 = vmatprep.mubr.bf16.mxu0 0
        %1241 = vmatmul.mubr.bf16.gmra.mrb[0].mxu0 %v985
        %v1242 = vpop.f32.mrb[0].mxu0
        %v1243 = vadd.f32 %v1011, %v1242
        %v1244 = vpop.f32.mrb[0].mxu0
        %v1245 = vadd.f32 %v1015, %v1244
        %v1246 = vpop.f32.mrb[0].mxu0
        %v1247 = vadd.f32 %v1011, %v1246
        %v1248 = vpop.f32.mrb[0].mxu0
        %v1249 = vadd.f32 %v1015, %v1248
        %1250 = vmatprep.mubr.bf16.mxu0 0
        %1251 = vmatmul.mubr.bf16.gmra.mrb[0].mxu0 %v986
        %v1252 = vpop.f32.mrb[0].mxu0
        %v1253 = vadd.f32 %v1011, %v1252
        %v1254 = vpop.f32.mrb[0].mxu0
        %v1255 = vadd.f32 %v1015, %v1254
        %v1256 = vpop.f32.mrb[0].mxu0
        %v1257 = vadd.f32 %v1011, %v1256
        %v1258 = vpop.f32.mrb[0].mxu0
        %v1259 = vadd.f32 %v1015, %v1258
        %1260 = vmatprep.mubr.bf16.mxu0 0
        %1261 = vmatmul.mubr.bf16.gmra.mrb[0].mxu0 %v987
        %v1262 = vpop.f32.mrb[0].mxu0
        %v1263 = vadd.f32 %v1011, %v1262
        %v1264 = vpop.f32.mrb[0].mxu0
        %v1265 = vadd.f32 %v1015, %v1264
        %v1266 = vpop.f32.mrb[0].mxu0
        %v1267 = vadd.f32 %v1011, %v1266
        %v1268 = vpop.f32.mrb[0].mxu0
        %v1269 = vadd.f32 %v1015, %v1268
        %1270 = vmatprep.mubr.bf16.mxu0 0
        %1271 = vmatmul.mubr.bf16.gmra.mrb[0].mxu0 %v988
        %v1272 = vpop.f32.mrb[0].mxu0
        %v1273 = vadd.f32 %v1011, %v1272
        %v1274 = vpop.f32.mrb[0].mxu0
        %v1275 = vadd.f32 %v1015, %v1274
        %v1276 = vpop.f32.mrb[0].mxu0
        %v1277 = vadd.f32 %v1011, %v1276
        %v1278 = vpop.f32.mrb[0].mxu0
        %v1279 = vadd.f32 %v1015, %v1278
        %1280 = vmatprep.mubr.bf16.mxu0 0
        %1281 = vmatmul.mubr.bf16.gmra.mrb[0].mxu0 %v989
        %v1282 = vpop.f32.mrb[0].mxu0
        %v1283 = vadd.f32 %v1011, %v1282
        %v1284 = vpop.f32.mrb[0].mxu0
        %v1285 = vadd.f32 %v1015, %v1284
        %v1286 = vpop.f32.mrb[0].mxu0
        %v1287 = vadd.f32 %v1011, %v1286
        %v1288 = vpop.f32.mrb[0].mxu0
        %v1289 = vadd.f32 %v1015, %v1288
        %1290 = vdwg.mxu0
        %v1291 = vmul.f32 %v1133, 0.5
        %v1292 = vmul.f32 %v1135, 0.5
        %v1293 = vmul.f32 %v1137, 0.5
        %v1294 = vmul.f32 %v1139, 0.5
        %v1295 = vmul.f32 %v1143, 0.5
        %v1296 = vmul.f32 %v1145, 0.5
        %v1297 = vmul.f32 %v1147, 0.5
        %v1298 = vmul.f32 %v1149, 0.5
        %v1299 = vmul.f32 %v1153, 0.5
        %v1300 = vmul.f32 %v1155, 0.5
        %v1301 = vmul.f32 %v1157, 0.5
        %v1302 = vmul.f32 %v1159, 0.5
        %v1303 = vmul.f32 %v1163, 0.5
        %v1304 = vmul.f32 %v1165, 0.5
        %v1305 = vmul.f32 %v1167, 0.5
        %v1306 = vmul.f32 %v1169, 0.5
        %v1307 = vmul.f32 %v1173, 0.5
        %v1308 = vmul.f32 %v1175, 0.5
        %v1309 = vmul.f32 %v1177, 0.5
        %v1310 = vmul.f32 %v1179, 0.5
        %v1311 = vmul.f32 %v1183, 0.5
        %v1312 = vmul.f32 %v1185, 0.5
        %v1313 = vmul.f32 %v1187, 0.5
        %v1314 = vmul.f32 %v1189, 0.5
        %v1315 = vmul.f32 %v1193, 0.5
        %v1316 = vmul.f32 %v1195, 0.5
        %v1317 = vmul.f32 %v1197, 0.5
        %v1318 = vmul.f32 %v1199, 0.5
        %v1319 = vmul.f32 %v1203, 0.5
        %v1320 = vmul.f32 %v1205, 0.5
        %v1321 = vmul.f32 %v1207, 0.5
        %v1322 = vmul.f32 %v1209, 0.5
        %v1323 = vmul.f32 %v1213, 0.5
        %v1324 = vmul.f32 %v1215, 0.5
        %v1325 = vmul.f32 %v1217, 0.5
        %v1326 = vmul.f32 %v1219, 0.5
        %v1327 = vmul.f32 %v1223, 0.5
        %v1328 = vmul.f32 %v1225, 0.5
        %v1329 = vmul.f32 %v1227, 0.5
        %v1330 = vmul.f32 %v1229, 0.5
        %v1331 = vmul.f32 %v1233, 0.5
        %v1332 = vmul.f32 %v1235, 0.5
        %v1333 = vmul.f32 %v1237, 0.5
        %v1334 = vmul.f32 %v1239, 0.5
        %v1335 = vmul.f32 %v1243, 0.5
        %v1336 = vmul.f32 %v1245, 0.5
        %v1337 = vmul.f32 %v1247, 0.5
        %v1338 = vmul.f32 %v1249, 0.5
        %v1339 = vmul.f32 %v1253, 0.5
        %v1340 = vmul.f32 %v1255, 0.5
        %v1341 = vmul.f32 %v1257, 0.5
        %v1342 = vmul.f32 %v1259, 0.5
        %v1343 = vmul.f32 %v1263, 0.5
        %v1344 = vmul.f32 %v1265, 0.5
        %v1345 = vmul.f32 %v1267, 0.5
        %v1346 = vmul.f32 %v1269, 0.5
        %v1347 = vmul.f32 %v1273, 0.5
        %v1348 = vmul.f32 %v1275, 0.5
        %v1349 = vmul.f32 %v1277, 0.5
        %v1350 = vmul.f32 %v1279, 0.5
        %v1351 = vmul.f32 %v1283, 0.5
        %v1352 = vmul.f32 %v1285, 0.5
        %v1353 = vmul.f32 %v1287, 0.5
        %v1354 = vmul.f32 %v1289, 0.5
        %v1355 = vmul.f32 %v1133, 0.044715
        %v1356 = vmul.f32 %v1135, 0.044715
        %v1357 = vmul.f32 %v1137, 0.044715
        %v1358 = vmul.f32 %v1139, 0.044715
        %v1359 = vmul.f32 %v1143, 0.044715
        %v1360 = vmul.f32 %v1145, 0.044715
        %v1361 = vmul.f32 %v1147, 0.044715
        %v1362 = vmul.f32 %v1149, 0.044715
        %v1363 = vmul.f32 %v1153, 0.044715
        %v1364 = vmul.f32 %v1155, 0.044715
        %v1365 = vmul.f32 %v1157, 0.044715
        %v1366 = vmul.f32 %v1159, 0.044715
        %v1367 = vmul.f32 %v1163, 0.044715
        %v1368 = vmul.f32 %v1165, 0.044715
        %v1369 = vmul.f32 %v1167, 0.044715
        %v1370 = vmul.f32 %v1169, 0.044715
        %v1371 = vmul.f32 %v1173, 0.044715
        %v1372 = vmul.f32 %v1175, 0.044715
        %v1373 = vmul.f32 %v1177, 0.044715
        %v1374 = vmul.f32 %v1179, 0.044715
        %v1375 = vmul.f32 %v1183, 0.044715
        %v1376 = vmul.f32 %v1185, 0.044715
        %v1377 = vmul.f32 %v1187, 0.044715
        %v1378 = vmul.f32 %v1189, 0.044715
        %v1379 = vmul.f32 %v1193, 0.044715
        %v1380 = vmul.f32 %v1195, 0.044715
        %v1381 = vmul.f32 %v1197, 0.044715
        %v1382 = vmul.f32 %v1199, 0.044715
        %v1383 = vmul.f32 %v1203, 0.044715
        %v1384 = vmul.f32 %v1205, 0.044715
        %v1385 = vmul.f32 %v1207, 0.044715
        %v1386 = vmul.f32 %v1209, 0.044715
        %v1387 = vmul.f32 %v1213, 0.044715
        %v1388 = vmul.f32 %v1215, 0.044715
        %v1389 = vmul.f32 %v1217, 0.044715
        %v1390 = vmul.f32 %v1219, 0.044715
        %v1391 = vmul.f32 %v1223, 0.044715
        %v1392 = vmul.f32 %v1225, 0.044715
        %v1393 = vmul.f32 %v1227, 0.044715
        %v1394 = vmul.f32 %v1229, 0.044715
        %v1395 = vmul.f32 %v1233, 0.044715
        %v1396 = vmul.f32 %v1235, 0.044715
        %v1397 = vmul.f32 %v1237, 0.044715
        %v1398 = vmul.f32 %v1239, 0.044715
        %v1399 = vmul.f32 %v1243, 0.044715
        %v1400 = vmul.f32 %v1245, 0.044715
        %v1401 = vmul.f32 %v1247, 0.044715
        %v1402 = vmul.f32 %v1249, 0.044715
        %v1403 = vmul.f32 %v1253, 0.044715
        %v1404 = vmul.f32 %v1255, 0.044715
        %v1405 = vmul.f32 %v1257, 0.044715
        %v1406 = vmul.f32 %v1259, 0.044715
        %v1407 = vmul.f32 %v1263, 0.044715
        %v1408 = vmul.f32 %v1265, 0.044715
        %v1409 = vmul.f32 %v1267, 0.044715
        %v1410 = vmul.f32 %v1269, 0.044715
        %v1411 = vmul.f32 %v1273, 0.044715
        %v1412 = vmul.f32 %v1275, 0.044715
        %v1413 = vmul.f32 %v1277, 0.044715
        %v1414 = vmul.f32 %v1279, 0.044715
        %v1415 = vmul.f32 %v1283, 0.044715
        %v1416 = vmul.f32 %v1285, 0.044715
        %v1417 = vmul.f32 %v1287, 0.044715
        %v1418 = vmul.f32 %v1289, 0.044715
        %v1419 = vmul.f32 %v1355, %v1133
        %v1420 = vmul.f32 %v1356, %v1135
        %v1421 = vmul.f32 %v1357, %v1137
        %v1422 = vmul.f32 %v1358, %v1139
        %v1423 = vmul.f32 %v1359, %v1143
        %v1424 = vmul.f32 %v1360, %v1145
        %v1425 = vmul.f32 %v1361, %v1147
        %v1426 = vmul.f32 %v1362, %v1149
        %v1427 = vmul.f32 %v1363, %v1153
        %v1428 = vmul.f32 %v1364, %v1155
        %v1429 = vmul.f32 %v1365, %v1157
        %v1430 = vmul.f32 %v1366, %v1159
        %v1431 = vmul.f32 %v1367, %v1163
        %v1432 = vmul.f32 %v1368, %v1165
        %v1433 = vmul.f32 %v1369, %v1167
        %v1434 = vmul.f32 %v1370, %v1169
        %v1435 = vmul.f32 %v1371, %v1173
        %v1436 = vmul.f32 %v1372, %v1175
        %v1437 = vmul.f32 %v1373, %v1177
        %v1438 = vmul.f32 %v1374, %v1179
        %v1439 = vmul.f32 %v1375, %v1183
        %v1440 = vmul.f32 %v1376, %v1185
        %v1441 = vmul.f32 %v1377, %v1187
        %v1442 = vmul.f32 %v1378, %v1189
        %v1443 = vmul.f32 %v1379, %v1193
        %v1444 = vmul.f32 %v1380, %v1195
        %v1445 = vmul.f32 %v1381, %v1197
        %v1446 = vmul.f32 %v1382, %v1199
        %v1447 = vmul.f32 %v1383, %v1203
        %v1448 = vmul.f32 %v1384, %v1205
        %v1449 = vmul.f32 %v1385, %v1207
        %v1450 = vmul.f32 %v1386, %v1209
        %v1451 = vmul.f32 %v1387, %v1213
        %v1452 = vmul.f32 %v1388, %v1215
        %v1453 = vmul.f32 %v1389, %v1217
        %v1454 = vmul.f32 %v1390, %v1219
        %v1455 = vmul.f32 %v1391, %v1223
        %v1456 = vmul.f32 %v1392, %v1225
        %v1457 = vmul.f32 %v1393, %v1227
        %v1458 = vmul.f32 %v1394, %v1229
        %v1459 = vmul.f32 %v1395, %v1233
        %v1460 = vmul.f32 %v1396, %v1235
        %v1461 = vmul.f32 %v1397, %v1237
        %v1462 = vmul.f32 %v1398, %v1239
        %v1463 = vmul.f32 %v1399, %v1243
        %v1464 = vmul.f32 %v1400, %v1245
        %v1465 = vmul.f32 %v1401, %v1247
        %v1466 = vmul.f32 %v1402, %v1249
        %v1467 = vmul.f32 %v1403, %v1253
        %v1468 = vmul.f32 %v1404, %v1255
        %v1469 = vmul.f32 %v1405, %v1257
        %v1470 = vmul.f32 %v1406, %v1259
        %v1471 = vmul.f32 %v1407, %v1263
        %v1472 = vmul.f32 %v1408, %v1265
        %v1473 = vmul.f32 %v1409, %v1267
        %v1474 = vmul.f32 %v1410, %v1269
        %v1475 = vmul.f32 %v1411, %v1273
        %v1476 = vmul.f32 %v1412, %v1275
        %v1477 = vmul.f32 %v1413, %v1277
        %v1478 = vmul.f32 %v1414, %v1279
        %v1479 = vmul.f32 %v1415, %v1283
        %v1480 = vmul.f32 %v1416, %v1285
        %v1481 = vmul.f32 %v1417, %v1287
        %v1482 = vmul.f32 %v1418, %v1289
        %v1483 = vmul.f32 %v1419, %v1133
        %v1484 = vmul.f32 %v1420, %v1135
        %v1485 = vmul.f32 %v1421, %v1137
        %v1486 = vmul.f32 %v1422, %v1139
        %v1487 = vmul.f32 %v1423, %v1143
        %v1488 = vmul.f32 %v1424, %v1145
        %v1489 = vmul.f32 %v1425, %v1147
        %v1490 = vmul.f32 %v1426, %v1149
        %v1491 = vmul.f32 %v1427, %v1153
        %v1492 = vmul.f32 %v1428, %v1155
        %v1493 = vmul.f32 %v1429, %v1157
        %v1494 = vmul.f32 %v1430, %v1159
        %v1495 = vmul.f32 %v1431, %v1163
        %v1496 = vmul.f32 %v1432, %v1165
        %v1497 = vmul.f32 %v1433, %v1167
        %v1498 = vmul.f32 %v1434, %v1169
        %v1499 = vmul.f32 %v1435, %v1173
        %v1500 = vmul.f32 %v1436, %v1175
        %v1501 = vmul.f32 %v1437, %v1177
        %v1502 = vmul.f32 %v1438, %v1179
        %v1503 = vmul.f32 %v1439, %v1183
        %v1504 = vmul.f32 %v1440, %v1185
        %v1505 = vmul.f32 %v1441, %v1187
        %v1506 = vmul.f32 %v1442, %v1189
        %v1507 = vmul.f32 %v1443, %v1193
        %v1508 = vmul.f32 %v1444, %v1195
        %v1509 = vmul.f32 %v1445, %v1197
        %v1510 = vmul.f32 %v1446, %v1199
        %v1511 = vmul.f32 %v1447, %v1203
        %v1512 = vmul.f32 %v1448, %v1205
        %v1513 = vmul.f32 %v1449, %v1207
        %v1514 = vmul.f32 %v1450, %v1209
        %v1515 = vmul.f32 %v1451, %v1213
        %v1516 = vmul.f32 %v1452, %v1215
        %v1517 = vmul.f32 %v1453, %v1217
        %v1518 = vmul.f32 %v1454, %v1219
        %v1519 = vmul.f32 %v1455, %v1223
        %v1520 = vmul.f32 %v1456, %v1225
        %v1521 = vmul.f32 %v1457, %v1227
        %v1522 = vmul.f32 %v1458, %v1229
        %v1523 = vmul.f32 %v1459, %v1233
        %v1524 = vmul.f32 %v1460, %v1235
        %v1525 = vmul.f32 %v1461, %v1237
        %v1526 = vmul.f32 %v1462, %v1239
        %v1527 = vmul.f32 %v1463, %v1243
        %v1528 = vmul.f32 %v1464, %v1245
        %v1529 = vmul.f32 %v1465, %v1247
        %v1530 = vmul.f32 %v1466, %v1249
        %v1531 = vmul.f32 %v1467, %v1253
        %v1532 = vmul.f32 %v1468, %v1255
        %v1533 = vmul.f32 %v1469, %v1257
        %v1534 = vmul.f32 %v1470, %v1259
        %v1535 = vmul.f32 %v1471, %v1263
        %v1536 = vmul.f32 %v1472, %v1265
        %v1537 = vmul.f32 %v1473, %v1267
        %v1538 = vmul.f32 %v1474, %v1269
        %v1539 = vmul.f32 %v1475, %v1273
        %v1540 = vmul.f32 %v1476, %v1275
        %v1541 = vmul.f32 %v1477, %v1277
        %v1542 = vmul.f32 %v1478, %v1279
        %v1543 = vmul.f32 %v1479, %v1283
        %v1544 = vmul.f32 %v1480, %v1285
        %v1545 = vmul.f32 %v1481, %v1287
        %v1546 = vmul.f32 %v1482, %v1289
        %v1547 = vadd.f32 %v1133, %v1483
        %v1548 = vadd.f32 %v1135, %v1484
        %v1549 = vadd.f32 %v1137, %v1485
        %v1550 = vadd.f32 %v1139, %v1486
        %v1551 = vadd.f32 %v1143, %v1487
        %v1552 = vadd.f32 %v1145, %v1488
        %v1553 = vadd.f32 %v1147, %v1489
        %v1554 = vadd.f32 %v1149, %v1490
        %v1555 = vadd.f32 %v1153, %v1491
        %v1556 = vadd.f32 %v1155, %v1492
        %v1557 = vadd.f32 %v1157, %v1493
        %v1558 = vadd.f32 %v1159, %v1494
        %v1559 = vadd.f32 %v1163, %v1495
        %v1560 = vadd.f32 %v1165, %v1496
        %v1561 = vadd.f32 %v1167, %v1497
        %v1562 = vadd.f32 %v1169, %v1498
        %v1563 = vadd.f32 %v1173, %v1499
        %v1564 = vadd.f32 %v1175, %v1500
        %v1565 = vadd.f32 %v1177, %v1501
        %v1566 = vadd.f32 %v1179, %v1502
        %v1567 = vadd.f32 %v1183, %v1503
        %v1568 = vadd.f32 %v1185, %v1504
        %v1569 = vadd.f32 %v1187, %v1505
        %v1570 = vadd.f32 %v1189, %v1506
        %v1571 = vadd.f32 %v1193, %v1507
        %v1572 = vadd.f32 %v1195, %v1508
        %v1573 = vadd.f32 %v1197, %v1509
        %v1574 = vadd.f32 %v1199, %v1510
        %v1575 = vadd.f32 %v1203, %v1511
        %v1576 = vadd.f32 %v1205, %v1512
        %v1577 = vadd.f32 %v1207, %v1513
        %v1578 = vadd.f32 %v1209, %v1514
        %v1579 = vadd.f32 %v1213, %v1515
        %v1580 = vadd.f32 %v1215, %v1516
        %v1581 = vadd.f32 %v1217, %v1517
        %v1582 = vadd.f32 %v1219, %v1518
        %v1583 = vadd.f32 %v1223, %v1519
        %v1584 = vadd.f32 %v1225, %v1520
        %v1585 = vadd.f32 %v1227, %v1521
        %v1586 = vadd.f32 %v1229, %v1522
        %v1587 = vadd.f32 %v1233, %v1523
        %v1588 = vadd.f32 %v1235, %v1524
        %v1589 = vadd.f32 %v1237, %v1525
        %v1590 = vadd.f32 %v1239, %v1526
        %v1591 = vadd.f32 %v1243, %v1527
        %v1592 = vadd.f32 %v1245, %v1528
        %v1593 = vadd.f32 %v1247, %v1529
        %v1594 = vadd.f32 %v1249, %v1530
        %v1595 = vadd.f32 %v1253, %v1531
        %v1596 = vadd.f32 %v1255, %v1532
        %v1597 = vadd.f32 %v1257, %v1533
        %v1598 = vadd.f32 %v1259, %v1534
        %v1599 = vadd.f32 %v1263, %v1535
        %v1600 = vadd.f32 %v1265, %v1536
        %v1601 = vadd.f32 %v1267, %v1537
        %v1602 = vadd.f32 %v1269, %v1538
        %v1603 = vadd.f32 %v1273, %v1539
        %v1604 = vadd.f32 %v1275, %v1540
        %v1605 = vadd.f32 %v1277, %v1541
        %v1606 = vadd.f32 %v1279, %v1542
        %v1607 = vadd.f32 %v1283, %v1543
        %v1608 = vadd.f32 %v1285, %v1544
        %v1609 = vadd.f32 %v1287, %v1545
        %v1610 = vadd.f32 %v1289, %v1546
        %v1611 = vmul.f32 %v1547, 0.7978846
        %v1612 = vmul.f32 %v1548, 0.7978846
        %v1613 = vmul.f32 %v1549, 0.7978846
        %v1614 = vmul.f32 %v1550, 0.7978846
        %v1615 = vmul.f32 %v1551, 0.7978846
        %v1616 = vmul.f32 %v1552, 0.7978846
        %v1617 = vmul.f32 %v1553, 0.7978846
        %v1618 = vmul.f32 %v1554, 0.7978846
        %v1619 = vmul.f32 %v1555, 0.7978846
        %v1620 = vmul.f32 %v1556, 0.7978846
        %v1621 = vmul.f32 %v1557, 0.7978846
        %v1622 = vmul.f32 %v1558, 0.7978846
        %v1623 = vmul.f32 %v1559, 0.7978846
        %v1624 = vmul.f32 %v1560, 0.7978846
        %v1625 = vmul.f32 %v1561, 0.7978846
        %v1626 = vmul.f32 %v1562, 0.7978846
        %v1627 = vmul.f32 %v1563, 0.7978846
        %v1628 = vmul.f32 %v1564, 0.7978846
        %v1629 = vmul.f32 %v1565, 0.7978846
        %v1630 = vmul.f32 %v1566, 0.7978846
        %v1631 = vmul.f32 %v1567, 0.7978846
        %v1632 = vmul.f32 %v1568, 0.7978846
        %v1633 = vmul.f32 %v1569, 0.7978846
        %v1634 = vmul.f32 %v1570, 0.7978846
        %v1635 = vmul.f32 %v1571, 0.7978846
        %v1636 = vmul.f32 %v1572, 0.7978846
        %v1637 = vmul.f32 %v1573, 0.7978846
        %v1638 = vmul.f32 %v1574, 0.7978846
        %v1639 = vmul.f32 %v1575, 0.7978846
        %v1640 = vmul.f32 %v1576, 0.7978846
        %v1641 = vmul.f32 %v1577, 0.7978846
        %v1642 = vmul.f32 %v1578, 0.7978846
        %v1643 = vmul.f32 %v1579, 0.7978846
        %v1644 = vmul.f32 %v1580, 0.7978846
        %v1645 = vmul.f32 %v1581, 0.7978846
        %v1646 = vmul.f32 %v1582, 0.7978846
        %v1647 = vmul.f32 %v1583, 0.7978846
        %v1648 = vmul.f32 %v1584, 0.7978846
        %v1649 = vmul.f32 %v1585, 0.7978846
        %v1650 = vmul.f32 %v1586, 0.7978846
        %v1651 = vmul.f32 %v1587, 0.7978846
        %v1652 = vmul.f32 %v1588, 0.7978846
        %v1653 = vmul.f32 %v1589, 0.7978846
        %v1654 = vmul.f32 %v1590, 0.7978846
        %v1655 = vmul.f32 %v1591, 0.7978846
        %v1656 = vmul.f32 %v1592, 0.7978846
        %v1657 = vmul.f32 %v1593, 0.7978846
        %v1658 = vmul.f32 %v1594, 0.7978846
        %v1659 = vmul.f32 %v1595, 0.7978846
        %v1660 = vmul.f32 %v1596, 0.7978846
        %v1661 = vmul.f32 %v1597, 0.7978846
        %v1662 = vmul.f32 %v1598, 0.7978846
        %v1663 = vmul.f32 %v1599, 0.7978846
        %v1664 = vmul.f32 %v1600, 0.7978846
        %v1665 = vmul.f32 %v1601, 0.7978846
        %v1666 = vmul.f32 %v1602, 0.7978846
        %v1667 = vmul.f32 %v1603, 0.7978846
        %v1668 = vmul.f32 %v1604, 0.7978846
        %v1669 = vmul.f32 %v1605, 0.7978846
        %v1670 = vmul.f32 %v1606, 0.7978846
        %v1671 = vmul.f32 %v1607, 0.7978846
        %v1672 = vmul.f32 %v1608, 0.7978846
        %v1673 = vmul.f32 %v1609, 0.7978846
        %v1674 = vmul.f32 %v1610, 0.7978846
        %v1675 = vtanh.pop %v1611
        %v1676 = vtanh.pop %v1612
        %v1677 = vtanh.pop %v1613
        %v1678 = vtanh.pop %v1614
        %v1679 = vtanh.pop %v1615
        %v1680 = vtanh.pop %v1616
        %v1681 = vtanh.pop %v1617
        %v1682 = vtanh.pop %v1618
        %v1683 = vtanh.pop %v1619
        %v1684 = vtanh.pop %v1620
        %v1685 = vtanh.pop %v1621
        %v1686 = vtanh.pop %v1622
        %v1687 = vtanh.pop %v1623
        %v1688 = vtanh.pop %v1624
        %v1689 = vtanh.pop %v1625
        %v1690 = vtanh.pop %v1626
        %v1691 = vtanh.pop %v1627
        %v1692 = vtanh.pop %v1628
        %v1693 = vtanh.pop %v1629
        %v1694 = vtanh.pop %v1630
        %v1695 = vtanh.pop %v1631
        %v1696 = vtanh.pop %v1632
        %v1697 = vtanh.pop %v1633
        %v1698 = vtanh.pop %v1634
        %v1699 = vtanh.pop %v1635
        %v1700 = vtanh.pop %v1636
        %v1701 = vtanh.pop %v1637
        %v1702 = vtanh.pop %v1638
        %v1703 = vtanh.pop %v1639
        %v1704 = vtanh.pop %v1640
        %v1705 = vtanh.pop %v1641
        %v1706 = vtanh.pop %v1642
        %v1707 = vtanh.pop %v1643
        %v1708 = vtanh.pop %v1644
        %v1709 = vtanh.pop %v1645
        %v1710 = vtanh.pop %v1646
        %v1711 = vtanh.pop %v1647
        %v1712 = vtanh.pop %v1648
        %v1713 = vtanh.pop %v1649
        %v1714 = vtanh.pop %v1650
        %v1715 = vtanh.pop %v1651
        %v1716 = vtanh.pop %v1652
        %v1717 = vtanh.pop %v1653
        %v1718 = vtanh.pop %v1654
        %v1719 = vtanh.pop %v1655
        %v1720 = vtanh.pop %v1656
        %v1721 = vtanh.pop %v1657
        %v1722 = vtanh.pop %v1658
        %v1723 = vtanh.pop %v1659
        %v1724 = vtanh.pop %v1660
        %v1725 = vtanh.pop %v1661
        %v1726 = vtanh.pop %v1662
        %v1727 = vtanh.pop %v1663
        %v1728 = vtanh.pop %v1664
        %v1729 = vtanh.pop %v1665
        %v1730 = vtanh.pop %v1666
        %v1731 = vtanh.pop %v1667
        %v1732 = vtanh.pop %v1668
        %v1733 = vtanh.pop %v1669
        %v1734 = vtanh.pop %v1670
        %v1735 = vtanh.pop %v1671
        %v1736 = vtanh.pop %v1672
        %v1737 = vtanh.pop %v1673
        %v1738 = vtanh.pop %v1674
        %v1739 = vadd.f32 %v1675, 1.0
        %v1740 = vadd.f32 %v1676, 1.0
        %v1741 = vadd.f32 %v1677, 1.0
        %v1742 = vadd.f32 %v1678, 1.0
        %v1743 = vadd.f32 %v1679, 1.0
        %v1744 = vadd.f32 %v1680, 1.0
        %v1745 = vadd.f32 %v1681, 1.0
        %v1746 = vadd.f32 %v1682, 1.0
        %v1747 = vadd.f32 %v1683, 1.0
        %v1748 = vadd.f32 %v1684, 1.0
        %v1749 = vadd.f32 %v1685, 1.0
        %v1750 = vadd.f32 %v1686, 1.0
        %v1751 = vadd.f32 %v1687, 1.0
        %v1752 = vadd.f32 %v1688, 1.0
        %v1753 = vadd.f32 %v1689, 1.0
        %v1754 = vadd.f32 %v1690, 1.0
        %v1755 = vadd.f32 %v1691, 1.0
        %v1756 = vadd.f32 %v1692, 1.0
        %v1757 = vadd.f32 %v1693, 1.0
        %v1758 = vadd.f32 %v1694, 1.0
        %v1759 = vadd.f32 %v1695, 1.0
        %v1760 = vadd.f32 %v1696, 1.0
        %v1761 = vadd.f32 %v1697, 1.0
        %v1762 = vadd.f32 %v1698, 1.0
        %v1763 = vadd.f32 %v1699, 1.0
        %v1764 = vadd.f32 %v1700, 1.0
        %v1765 = vadd.f32 %v1701, 1.0
        %v1766 = vadd.f32 %v1702, 1.0
        %v1767 = vadd.f32 %v1703, 1.0
        %v1768 = vadd.f32 %v1704, 1.0
        %v1769 = vadd.f32 %v1705, 1.0
        %v1770 = vadd.f32 %v1706, 1.0
        %v1771 = vadd.f32 %v1707, 1.0
        %v1772 = vadd.f32 %v1708, 1.0
        %v1773 = vadd.f32 %v1709, 1.0
        %v1774 = vadd.f32 %v1710, 1.0
        %v1775 = vadd.f32 %v1711, 1.0
        %v1776 = vadd.f32 %v1712, 1.0
        %v1777 = vadd.f32 %v1713, 1.0
        %v1778 = vadd.f32 %v1714, 1.0
        %v1779 = vadd.f32 %v1715, 1.0
        %v1780 = vadd.f32 %v1716, 1.0
        %v1781 = vadd.f32 %v1717, 1.0
        %v1782 = vadd.f32 %v1718, 1.0
        %v1783 = vadd.f32 %v1719, 1.0
        %v1784 = vadd.f32 %v1720, 1.0
        %v1785 = vadd.f32 %v1721, 1.0
        %v1786 = vadd.f32 %v1722, 1.0
        %v1787 = vadd.f32 %v1723, 1.0
        %v1788 = vadd.f32 %v1724, 1.0
        %v1789 = vadd.f32 %v1725, 1.0
        %v1790 = vadd.f32 %v1726, 1.0
        %v1791 = vadd.f32 %v1727, 1.0
        %v1792 = vadd.f32 %v1728, 1.0
        %v1793 = vadd.f32 %v1729, 1.0
        %v1794 = vadd.f32 %v1730, 1.0
        %v1795 = vadd.f32 %v1731, 1.0
        %v1796 = vadd.f32 %v1732, 1.0
        %v1797 = vadd.f32 %v1733, 1.0
        %v1798 = vadd.f32 %v1734, 1.0
        %v1799 = vadd.f32 %v1735, 1.0
        %v1800 = vadd.f32 %v1736, 1.0
        %v1801 = vadd.f32 %v1737, 1.0
        %v1802 = vadd.f32 %v1738, 1.0
        %v1803 = vmul.f32 %v1291, %v1739
        %v1804 = vmul.f32 %v1292, %v1740
        %v1805 = vmul.f32 %v1293, %v1741
        %v1806 = vmul.f32 %v1294, %v1742
        %v1807 = vmul.f32 %v1295, %v1743
        %v1808 = vmul.f32 %v1296, %v1744
        %v1809 = vmul.f32 %v1297, %v1745
        %v1810 = vmul.f32 %v1298, %v1746
        %v1811 = vmul.f32 %v1299, %v1747
        %v1812 = vmul.f32 %v1300, %v1748
        %v1813 = vmul.f32 %v1301, %v1749
        %v1814 = vmul.f32 %v1302, %v1750
        %v1815 = vmul.f32 %v1303, %v1751
        %v1816 = vmul.f32 %v1304, %v1752
        %v1817 = vmul.f32 %v1305, %v1753
        %v1818 = vmul.f32 %v1306, %v1754
        %v1819 = vmul.f32 %v1307, %v1755
        %v1820 = vmul.f32 %v1308, %v1756
        %v1821 = vmul.f32 %v1309, %v1757
        %v1822 = vmul.f32 %v1310, %v1758
        %v1823 = vmul.f32 %v1311, %v1759
        %v1824 = vmul.f32 %v1312, %v1760
        %v1825 = vmul.f32 %v1313, %v1761
        %v1826 = vmul.f32 %v1314, %v1762
        %v1827 = vmul.f32 %v1315, %v1763
        %v1828 = vmul.f32 %v1316, %v1764
        %v1829 = vmul.f32 %v1317, %v1765
        %v1830 = vmul.f32 %v1318, %v1766
        %v1831 = vmul.f32 %v1319, %v1767
        %v1832 = vmul.f32 %v1320, %v1768
        %v1833 = vmul.f32 %v1321, %v1769
        %v1834 = vmul.f32 %v1322, %v1770
        %v1835 = vmul.f32 %v1323, %v1771
        %v1836 = vmul.f32 %v1324, %v1772
        %v1837 = vmul.f32 %v1325, %v1773
        %v1838 = vmul.f32 %v1326, %v1774
        %v1839 = vmul.f32 %v1327, %v1775
        %v1840 = vmul.f32 %v1328, %v1776
        %v1841 = vmul.f32 %v1329, %v1777
        %v1842 = vmul.f32 %v1330, %v1778
        %v1843 = vmul.f32 %v1331, %v1779
        %v1844 = vmul.f32 %v1332, %v1780
        %v1845 = vmul.f32 %v1333, %v1781
        %v1846 = vmul.f32 %v1334, %v1782
        %v1847 = vmul.f32 %v1335, %v1783
        %v1848 = vmul.f32 %v1336, %v1784
        %v1849 = vmul.f32 %v1337, %v1785
        %v1850 = vmul.f32 %v1338, %v1786
        %v1851 = vmul.f32 %v1339, %v1787
        %v1852 = vmul.f32 %v1340, %v1788
        %v1853 = vmul.f32 %v1341, %v1789
        %v1854 = vmul.f32 %v1342, %v1790
        %v1855 = vmul.f32 %v1343, %v1791
        %v1856 = vmul.f32 %v1344, %v1792
        %v1857 = vmul.f32 %v1345, %v1793
        %v1858 = vmul.f32 %v1346, %v1794
        %v1859 = vmul.f32 %v1347, %v1795
        %v1860 = vmul.f32 %v1348, %v1796
        %v1861 = vmul.f32 %v1349, %v1797
        %v1862 = vmul.f32 %v1350, %v1798
        %v1863 = vmul.f32 %v1351, %v1799
        %v1864 = vmul.f32 %v1352, %v1800
        %v1865 = vmul.f32 %v1353, %v1801
        %v1866 = vmul.f32 %v1354, %v1802
        %v1867 = vpack.c.bf16 %v1806, %v1804
        %v1868 = vpack.c.bf16 %v1810, %v1808
        %v1869 = vpack.c.bf16 %v1814, %v1812
        %v1870 = vpack.c.bf16 %v1818, %v1816
        %v1871 = vpack.c.bf16 %v1822, %v1820
        %v1872 = vpack.c.bf16 %v1826, %v1824
        %v1873 = vpack.c.bf16 %v1830, %v1828
        %v1874 = vpack.c.bf16 %v1834, %v1832
        %v1875 = vpack.c.bf16 %v1838, %v1836
        %v1876 = vpack.c.bf16 %v1842, %v1840
        %v1877 = vpack.c.bf16 %v1846, %v1844
        %v1878 = vpack.c.bf16 %v1850, %v1848
        %v1879 = vpack.c.bf16 %v1854, %v1852
        %v1880 = vpack.c.bf16 %v1858, %v1856
        %v1881 = vpack.c.bf16 %v1862, %v1860
        %v1882 = vpack.c.bf16 %v1866, %v1864
        %v1883 = vld [vmem:[#allocation7] sm:$0xf]
        %v1884 = vld [vmem:[#allocation7 + $0x4] sm:$0xf]
        %v1885 = vld [vmem:[#allocation7 + $0x8] sm:$0xf]
        %v1886 = vld [vmem:[#allocation7 + $0xc] sm:$0xf]
        %v1887 = vld [vmem:[#allocation7 + $0x10] sm:$0xf]
        %v1888 = vld [vmem:[#allocation7 + $0x14] sm:$0xf]
        %v1889 = vld [vmem:[#allocation7 + $0x18] sm:$0xf]
        %v1890 = vld [vmem:[#allocation7 + $0x1c] sm:$0xf]
        %v1891 = vld [vmem:[#allocation8] sm:$0xff]
        %v1892 = vld [vmem:[#allocation8 + $0x8] sm:$0xff]
        %v1893 = vld [vmem:[#allocation8 + $0x10] sm:$0xff]
        %v1894 = vld [vmem:[#allocation8 + $0x18] sm:$0xff]
        %v1895 = vld [vmem:[#allocation8 + $0x20] sm:$0xff]
        %v1896 = vld [vmem:[#allocation8 + $0x28] sm:$0xff]
        %v1897 = vld [vmem:[#allocation8 + $0x30] sm:$0xff]
        %v1898 = vld [vmem:[#allocation8 + $0x38] sm:$0xff]
        %v1907 = vunpack.c.l.b16 %v1883
        %v1908 = vunpack.c.l.b16 %v1884
        %v1909 = vunpack.c.l.b16 %v1885
        %v1910 = vunpack.c.l.b16 %v1886
        %v1911 = vunpack.c.l.b16 %v1887
        %v1912 = vunpack.c.l.b16 %v1888
        %v1913 = vunpack.c.l.b16 %v1889
        %v1914 = vunpack.c.l.b16 %v1890
        %v1915 = vpack.c.b16 %v1908, %v1907
        %v1916 = vpack.c.b16 %v1910, %v1909
        %v1917 = vpack.c.b16 %v1912, %v1911
        %v1918 = vpack.c.b16 %v1914, %v1913
        %vm1919 = vcmask 523264
        %v1921 = vsel %vm1919, %v1915, 0
        %v1924 = vsel %vm1919, %v1916, 0
        %v1927 = vsel %vm1919, %v1917, 0
        %v1930 = vsel %vm1919, %v1918, 0
        %1932 = vmatprep.subr.bf16.mxu0 0
        %1933 = vmatpush1.bf16.msra.mxu0 %v1867
        %1934 = vmatprep.subr.bf16.mxu0 0
        %1935 = vmatpush1.bf16.msra.mxu0 %v1868
        %1936 = vmatprep.subr.bf16.mxu0 0
        %1937 = vmatpush1.bf16.msra.mxu0 %v1869
        %1938 = vmatprep.subr.bf16.mxu0 0
        %1939 = vmatpush1.bf16.msra.mxu0 %v1870
        %1940 = vmatprep.subr.bf16.mxu0 0
        %1941 = vmatpush1.bf16.msra.mxu0 0
        %1942 = vmatprep.subr.bf16.mxu0 0
        %1943 = vmatpush1.bf16.msra.mxu0 0
        %1944 = vmatprep.subr.bf16.mxu0 0
        %1945 = vmatpush1.bf16.msra.mxu0 0
        %1946 = vmatprep.subr.bf16.mxu0 0
        %1947 = vmatpush1.bf16.msra.mxu0 0
        %1948 = vmatprep.subr.bf16.mxu0 0
        %1949 = vmatpush1.bf16.msra.mxu0 0
        %1950 = vmatprep.subr.bf16.mxu0 0
        %1951 = vmatpush1.bf16.msra.mxu0 0
        %1952 = vmatprep.subr.bf16.mxu0 0
        %1953 = vmatpush1.bf16.msra.mxu0 0
        %1954 = vmatprep.subr.bf16.mxu0 0
        %1955 = vmatpush1.bf16.msra.mxu0 0
        %1956 = vmatprep.subr.bf16.mxu0 0
        %1957 = vmatpush1.bf16.msra.mxu0 0
        %1958 = vmatprep.subr.bf16.mxu0 0
        %1959 = vmatpush1.bf16.msra.mxu0 0
        %1960 = vmatprep.subr.bf16.mxu0 0
        %1961 = vmatpush1.bf16.msra.mxu0 0
        %1962 = vmatprep.subr.bf16.mxu0 0
        %1963 = vmatpush1.bf16.msra.mxu0 0
        %1964 = vmatprep.mubr.bf16.mxu0 0
        %1965 = vmatmul.mubr.bf16.gmra.mrb[0].mxu0 %v1921
        %v1966 = vpop.f32.mrb[0].mxu0
        %v1967 = vadd.f32 %v1891, %v1966
        %v1968 = vpop.f32.mrb[0].mxu0
        %v1969 = vpop.f32.mrb[0].mxu0
        %v1970 = vadd.f32 %v1892, %v1969
        %v1971 = vpop.f32.mrb[0].mxu0
        %1972 = vmatprep.mubr.bf16.mxu0 0
        %1973 = vmatmul.mubr.bf16.gmra.mrb[0].mxu0 %v1924
        %v1974 = vpop.f32.mrb[0].mxu0
        %v1975 = vadd.f32 %v1893, %v1974
        %v1976 = vpop.f32.mrb[0].mxu0
        %v1977 = vpop.f32.mrb[0].mxu0
        %v1978 = vadd.f32 %v1894, %v1977
        %v1979 = vpop.f32.mrb[0].mxu0
        %1980 = vmatprep.mubr.bf16.mxu0 0
        %1981 = vmatmul.mubr.bf16.gmra.mrb[0].mxu0 %v1927
        %v1982 = vpop.f32.mrb[0].mxu0
        %v1983 = vadd.f32 %v1895, %v1982
        %v1984 = vpop.f32.mrb[0].mxu0
        %v1985 = vpop.f32.mrb[0].mxu0
        %v1986 = vadd.f32 %v1896, %v1985
        %v1987 = vpop.f32.mrb[0].mxu0
        %1988 = vmatprep.mubr.bf16.mxu0 0
        %1989 = vmatmul.mubr.bf16.gmra.mrb[0].mxu0 %v1930
        %v1990 = vpop.f32.mrb[0].mxu0
        %v1991 = vadd.f32 %v1897, %v1990
        %v1992 = vpop.f32.mrb[0].mxu0
        %v1993 = vpop.f32.mrb[0].mxu0
        %v1994 = vadd.f32 %v1898, %v1993
        %v1995 = vpop.f32.mrb[0].mxu0
        %1996 = vdwg.mxu0
        %1997 = vmatprep.subr.bf16.mxu0 0
        %1998 = vmatpush1.bf16.msra.mxu0 %v1871
        %1999 = vmatprep.subr.bf16.mxu0 0
        %2000 = vmatpush1.bf16.msra.mxu0 %v1872
        %2001 = vmatprep.subr.bf16.mxu0 0
        %2002 = vmatpush1.bf16.msra.mxu0 %v1873
        %2003 = vmatprep.subr.bf16.mxu0 0
        %2004 = vmatpush1.bf16.msra.mxu0 %v1874
        %2005 = vmatprep.subr.bf16.mxu0 0
        %2006 = vmatpush1.bf16.msra.mxu0 0
        %2007 = vmatprep.subr.bf16.mxu0 0
        %2008 = vmatpush1.bf16.msra.mxu0 0
        %2009 = vmatprep.subr.bf16.mxu0 0
        %2010 = vmatpush1.bf16.msra.mxu0 0
        %2011 = vmatprep.subr.bf16.mxu0 0
        %2012 = vmatpush1.bf16.msra.mxu0 0
        %2013 = vmatprep.subr.bf16.mxu0 0
        %2014 = vmatpush1.bf16.msra.mxu0 0
        %2015 = vmatprep.subr.bf16.mxu0 0
        %2016 = vmatpush1.bf16.msra.mxu0 0
        %2017 = vmatprep.subr.bf16.mxu0 0
        %2018 = vmatpush1.bf16.msra.mxu0 0
        %2019 = vmatprep.subr.bf16.mxu0 0
        %2020 = vmatpush1.bf16.msra.mxu0 0
        %2021 = vmatprep.subr.bf16.mxu0 0
        %2022 = vmatpush1.bf16.msra.mxu0 0
        %2023 = vmatprep.subr.bf16.mxu0 0
        %2024 = vmatpush1.bf16.msra.mxu0 0
        %2025 = vmatprep.subr.bf16.mxu0 0
        %2026 = vmatpush1.bf16.msra.mxu0 0
        %2027 = vmatprep.subr.bf16.mxu0 0
        %2028 = vmatpush1.bf16.msra.mxu0 0
        %2029 = vmatprep.mubr.bf16.mxu0 0
        %2030 = vmatmul.mubr.bf16.gmra.mrb[0].mxu0 %v1921
        %v2031 = vpop.f32.mrb[0].mxu0
        %v2032 = vadd.f32 %v1891, %v2031
        %v2033 = vpop.f32.mrb[0].mxu0
        %v2034 = vpop.f32.mrb[0].mxu0
        %v2035 = vadd.f32 %v1892, %v2034
        %v2036 = vpop.f32.mrb[0].mxu0
        %2037 = vmatprep.mubr.bf16.mxu0 0
        %2038 = vmatmul.mubr.bf16.gmra.mrb[0].mxu0 %v1924
        %v2039 = vpop.f32.mrb[0].mxu0
        %v2040 = vadd.f32 %v1893, %v2039
        %v2041 = vpop.f32.mrb[0].mxu0
        %v2042 = vpop.f32.mrb[0].mxu0
        %v2043 = vadd.f32 %v1894, %v2042
        %v2044 = vpop.f32.mrb[0].mxu0
        %2045 = vmatprep.mubr.bf16.mxu0 0
        %2046 = vmatmul.mubr.bf16.gmra.mrb[0].mxu0 %v1927
        %v2047 = vpop.f32.mrb[0].mxu0
        %v2048 = vadd.f32 %v1895, %v2047
        %v2049 = vpop.f32.mrb[0].mxu0
        %v2050 = vpop.f32.mrb[0].mxu0
        %v2051 = vadd.f32 %v1896, %v2050
        %v2052 = vpop.f32.mrb[0].mxu0
        %2053 = vmatprep.mubr.bf16.mxu0 0
        %2054 = vmatmul.mubr.bf16.gmra.mrb[0].mxu0 %v1930
        %v2055 = vpop.f32.mrb[0].mxu0
        %v2056 = vadd.f32 %v1897, %v2055
        %v2057 = vpop.f32.mrb[0].mxu0
        %v2058 = vpop.f32.mrb[0].mxu0
        %v2059 = vadd.f32 %v1898, %v2058
        %v2060 = vpop.f32.mrb[0].mxu0
        %2061 = vdwg.mxu0
        %2062 = vmatprep.subr.bf16.mxu0 0
        %2063 = vmatpush1.bf16.msra.mxu0 %v1875
        %2064 = vmatprep.subr.bf16.mxu0 0
        %2065 = vmatpush1.bf16.msra.mxu0 %v1876
        %2066 = vmatprep.subr.bf16.mxu0 0
        %2067 = vmatpush1.bf16.msra.mxu0 %v1877
        %2068 = vmatprep.subr.bf16.mxu0 0
        %2069 = vmatpush1.bf16.msra.mxu0 %v1878
        %2070 = vmatprep.subr.bf16.mxu0 0
        %2071 = vmatpush1.bf16.msra.mxu0 0
        %2072 = vmatprep.subr.bf16.mxu0 0
        %2073 = vmatpush1.bf16.msra.mxu0 0
        %2074 = vmatprep.subr.bf16.mxu0 0
        %2075 = vmatpush1.bf16.msra.mxu0 0
        %2076 = vmatprep.subr.bf16.mxu0 0
        %2077 = vmatpush1.bf16.msra.mxu0 0
        %2078 = vmatprep.subr.bf16.mxu0 0
        %2079 = vmatpush1.bf16.msra.mxu0 0
        %2080 = vmatprep.subr.bf16.mxu0 0
        %2081 = vmatpush1.bf16.msra.mxu0 0
        %2082 = vmatprep.subr.bf16.mxu0 0
        %2083 = vmatpush1.bf16.msra.mxu0 0
        %2084 = vmatprep.subr.bf16.mxu0 0
        %2085 = vmatpush1.bf16.msra.mxu0 0
        %2086 = vmatprep.subr.bf16.mxu0 0
        %2087 = vmatpush1.bf16.msra.mxu0 0
        %2088 = vmatprep.subr.bf16.mxu0 0
        %2089 = vmatpush1.bf16.msra.mxu0 0
        %2090 = vmatprep.subr.bf16.mxu0 0
        %2091 = vmatpush1.bf16.msra.mxu0 0
        %2092 = vmatprep.subr.bf16.mxu0 0
        %2093 = vmatpush1.bf16.msra.mxu0 0
        %2094 = vmatprep.mubr.bf16.mxu0 0
        %2095 = vmatmul.mubr.bf16.gmra.mrb[0].mxu0 %v1921
        %v2096 = vpop.f32.mrb[0].mxu0
        %v2097 = vadd.f32 %v1891, %v2096
        %v2098 = vpop.f32.mrb[0].mxu0
        %v2099 = vpop.f32.mrb[0].mxu0
        %v2100 = vadd.f32 %v1892, %v2099
        %v2101 = vpop.f32.mrb[0].mxu0
        %2102 = vmatprep.mubr.bf16.mxu0 0
        %2103 = vmatmul.mubr.bf16.gmra.mrb[0].mxu0 %v1924
        %v2104 = vpop.f32.mrb[0].mxu0
        %v2105 = vadd.f32 %v1893, %v2104
        %v2106 = vpop.f32.mrb[0].mxu0
        %v2107 = vpop.f32.mrb[0].mxu0
        %v2108 = vadd.f32 %v1894, %v2107
        %v2109 = vpop.f32.mrb[0].mxu0
        %2110 = vmatprep.mubr.bf16.mxu0 0
        %2111 = vmatmul.mubr.bf16.gmra.mrb[0].mxu0 %v1927
        %v2112 = vpop.f32.mrb[0].mxu0
        %v2113 = vadd.f32 %v1895, %v2112
        %v2114 = vpop.f32.mrb[0].mxu0
        %v2115 = vpop.f32.mrb[0].mxu0
        %v2116 = vadd.f32 %v1896, %v2115
        %v2117 = vpop.f32.mrb[0].mxu0
        %2118 = vmatprep.mubr.bf16.mxu0 0
        %2119 = vmatmul.mubr.bf16.gmra.mrb[0].mxu0 %v1930
        %v2120 = vpop.f32.mrb[0].mxu0
        %v2121 = vadd.f32 %v1897, %v2120
        %v2122 = vpop.f32.mrb[0].mxu0
        %v2123 = vpop.f32.mrb[0].mxu0
        %v2124 = vadd.f32 %v1898, %v2123
        %v2125 = vpop.f32.mrb[0].mxu0
        %2126 = vdwg.mxu0
        %2127 = vmatprep.subr.bf16.mxu0 0
        %2128 = vmatpush1.bf16.msra.mxu0 %v1879
        %2129 = vmatprep.subr.bf16.mxu0 0
        %2130 = vmatpush1.bf16.msra.mxu0 %v1880
        %2131 = vmatprep.subr.bf16.mxu0 0
        %2132 = vmatpush1.bf16.msra.mxu0 %v1881
        %2133 = vmatprep.subr.bf16.mxu0 0
        %2134 = vmatpush1.bf16.msra.mxu0 %v1882
        %2135 = vmatprep.subr.bf16.mxu0 0
        %2136 = vmatpush1.bf16.msra.mxu0 0
        %2137 = vmatprep.subr.bf16.mxu0 0
        %2138 = vmatpush1.bf16.msra.mxu0 0
        %2139 = vmatprep.subr.bf16.mxu0 0
        %2140 = vmatpush1.bf16.msra.mxu0 0
        %2141 = vmatprep.subr.bf16.mxu0 0
        %2142 = vmatpush1.bf16.msra.mxu0 0
        %2143 = vmatprep.subr.bf16.mxu0 0
        %2144 = vmatpush1.bf16.msra.mxu0 0
        %2145 = vmatprep.subr.bf16.mxu0 0
        %2146 = vmatpush1.bf16.msra.mxu0 0
        %2147 = vmatprep.subr.bf16.mxu0 0
        %2148 = vmatpush1.bf16.msra.mxu0 0
        %2149 = vmatprep.subr.bf16.mxu0 0
        %2150 = vmatpush1.bf16.msra.mxu0 0
        %2151 = vmatprep.subr.bf16.mxu0 0
        %2152 = vmatpush1.bf16.msra.mxu0 0
        %2153 = vmatprep.subr.bf16.mxu0 0
        %2154 = vmatpush1.bf16.msra.mxu0 0
        %2155 = vmatprep.subr.bf16.mxu0 0
        %2156 = vmatpush1.bf16.msra.mxu0 0
        %2157 = vmatprep.subr.bf16.mxu0 0
        %2158 = vmatpush1.bf16.msra.mxu0 0
        %2159 = vmatprep.mubr.bf16.mxu0 0
        %2160 = vmatmul.mubr.bf16.gmra.mrb[0].mxu0 %v1921
        %v2161 = vpop.f32.mrb[0].mxu0
        %v2162 = vadd.f32 %v1891, %v2161
        %v2163 = vpop.f32.mrb[0].mxu0
        %v2164 = vpop.f32.mrb[0].mxu0
        %v2165 = vadd.f32 %v1892, %v2164
        %v2166 = vpop.f32.mrb[0].mxu0
        %2167 = vmatprep.mubr.bf16.mxu0 0
        %2168 = vmatmul.mubr.bf16.gmra.mrb[0].mxu0 %v1924
        %v2169 = vpop.f32.mrb[0].mxu0
        %v2170 = vadd.f32 %v1893, %v2169
        %v2171 = vpop.f32.mrb[0].mxu0
        %v2172 = vpop.f32.mrb[0].mxu0
        %v2173 = vadd.f32 %v1894, %v2172
        %v2174 = vpop.f32.mrb[0].mxu0
        %2175 = vmatprep.mubr.bf16.mxu0 0
        %2176 = vmatmul.mubr.bf16.gmra.mrb[0].mxu0 %v1927
        %v2177 = vpop.f32.mrb[0].mxu0
        %v2178 = vadd.f32 %v1895, %v2177
        %v2179 = vpop.f32.mrb[0].mxu0
        %v2180 = vpop.f32.mrb[0].mxu0
        %v2181 = vadd.f32 %v1896, %v2180
        %v2182 = vpop.f32.mrb[0].mxu0
        %2183 = vmatprep.mubr.bf16.mxu0 0
        %2184 = vmatmul.mubr.bf16.gmra.mrb[0].mxu0 %v1930
        %v2185 = vpop.f32.mrb[0].mxu0
        %v2186 = vadd.f32 %v1897, %v2185
        %v2187 = vpop.f32.mrb[0].mxu0
        %v2188 = vpop.f32.mrb[0].mxu0
        %v2189 = vadd.f32 %v1898, %v2188
        %v2190 = vpop.f32.mrb[0].mxu0
        %2191 = vdwg.mxu0
        %v2192 = vmul.f32 %v1803, %v1967
        %v2193 = vmul.f32 %v1805, %v1970
        %v2194 = vmul.f32 %v1807, %v1975
        %v2195 = vmul.f32 %v1809, %v1978
        %v2196 = vmul.f32 %v1811, %v1983
        %v2197 = vmul.f32 %v1813, %v1986
        %v2198 = vmul.f32 %v1815, %v1991
        %v2199 = vmul.f32 %v1817, %v1994
        %v2200 = vmul.f32 %v1819, %v2032
        %v2201 = vmul.f32 %v1821, %v2035
        %v2202 = vmul.f32 %v1823, %v2040
        %v2203 = vmul.f32 %v1825, %v2043
        %v2204 = vmul.f32 %v1827, %v2048
        %v2205 = vmul.f32 %v1829, %v2051
        %v2206 = vmul.f32 %v1831, %v2056
        %v2207 = vmul.f32 %v1833, %v2059
        %v2208 = vmul.f32 %v1835, %v2097
        %v2209 = vmul.f32 %v1837, %v2100
        %v2210 = vmul.f32 %v1839, %v2105
        %v2211 = vmul.f32 %v1841, %v2108
        %v2212 = vmul.f32 %v1843, %v2113
        %v2213 = vmul.f32 %v1845, %v2116
        %v2214 = vmul.f32 %v1847, %v2121
        %v2215 = vmul.f32 %v1849, %v2124
        %v2216 = vmul.f32 %v1851, %v2162
        %v2217 = vmul.f32 %v1853, %v2165
        %v2218 = vmul.f32 %v1855, %v2170
        %v2219 = vmul.f32 %v1857, %v2173
        %v2220 = vmul.f32 %v1859, %v2178
        %v2221 = vmul.f32 %v1861, %v2181
        %v2222 = vmul.f32 %v1863, %v2186
        %v2223 = vmul.f32 %v1865, %v2189
        %v2224 = vpack.c.bf16 %v2193, %v2192
        %v2225 = vpack.c.bf16 %v2195, %v2194
        %v2226 = vpack.c.bf16 %v2197, %v2196
        %v2227 = vpack.c.bf16 %v2199, %v2198
        %v2228 = vpack.c.bf16 %v2201, %v2200
        %v2229 = vpack.c.bf16 %v2203, %v2202
        %v2230 = vpack.c.bf16 %v2205, %v2204
        %v2231 = vpack.c.bf16 %v2207, %v2206
        %v2232 = vpack.c.bf16 %v2209, %v2208
        %v2233 = vpack.c.bf16 %v2211, %v2210
        %v2234 = vpack.c.bf16 %v2213, %v2212
        %v2235 = vpack.c.bf16 %v2215, %v2214
        %v2236 = vpack.c.bf16 %v2217, %v2216
        %v2237 = vpack.c.bf16 %v2219, %v2218
        %v2238 = vpack.c.bf16 %v2221, %v2220
        %v2239 = vpack.c.bf16 %v2223, %v2222
        %v2240 = vld [vmem:[#allocation10] sm:$0xf]
        %v2241 = vld [vmem:[#allocation10 + $0x4] sm:$0xf]
        %v2242 = vld [vmem:[#allocation10 + $0x8] sm:$0xf]
        %v2243 = vld [vmem:[#allocation10 + $0xc] sm:$0xf]
        %v2244 = vld [vmem:[#allocation10 + $0x10] sm:$0xf]
        %v2245 = vld [vmem:[#allocation10 + $0x14] sm:$0xf]
        %v2246 = vld [vmem:[#allocation10 + $0x18] sm:$0xf]
        %v2247 = vld [vmem:[#allocation10 + $0x1c] sm:$0xf]
        %v2248 = vld [vmem:[#allocation10 + $0x20] sm:$0xf]
        %v2249 = vld [vmem:[#allocation10 + $0x24] sm:$0xf]
        %v2250 = vld [vmem:[#allocation10 + $0x28] sm:$0xf]
        %v2251 = vld [vmem:[#allocation10 + $0x2c] sm:$0xf]
        %v2252 = vld [vmem:[#allocation10 + $0x30] sm:$0xf]
        %v2253 = vld [vmem:[#allocation10 + $0x34] sm:$0xf]
        %v2254 = vld [vmem:[#allocation10 + $0x38] sm:$0xf]
        %v2255 = vld [vmem:[#allocation10 + $0x3c] sm:$0xf]
        %v2272 = vunpack.c.l.b16 %v2240
        %v2273 = vunpack.c.l.b16 %v2241
        %v2274 = vunpack.c.l.b16 %v2242
        %v2275 = vunpack.c.l.b16 %v2243
        %v2276 = vunpack.c.l.b16 %v2244
        %v2277 = vunpack.c.l.b16 %v2245
        %v2278 = vunpack.c.l.b16 %v2246
        %v2279 = vunpack.c.l.b16 %v2247
        %v2280 = vunpack.c.l.b16 %v2248
        %v2281 = vunpack.c.l.b16 %v2249
        %v2282 = vunpack.c.l.b16 %v2250
        %v2283 = vunpack.c.l.b16 %v2251
        %v2284 = vunpack.c.l.b16 %v2252
        %v2285 = vunpack.c.l.b16 %v2253
        %v2286 = vunpack.c.l.b16 %v2254
        %v2287 = vunpack.c.l.b16 %v2255
        %v2288 = vpack.c.b16 %v2273, %v2272
        %v2289 = vpack.c.b16 %v2275, %v2274
        %v2290 = vpack.c.b16 %v2277, %v2276
        %v2291 = vpack.c.b16 %v2279, %v2278
        %v2292 = vpack.c.b16 %v2281, %v2280
        %v2293 = vpack.c.b16 %v2283, %v2282
        %v2294 = vpack.c.b16 %v2285, %v2284
        %v2295 = vpack.c.b16 %v2287, %v2286
        %2304 = vmatprep.subr.bf16.mxu0 0
        %2305 = vmatpush1.bf16.msra.mxu0 %v2288
        %2306 = vmatprep.subr.bf16.mxu0 0
        %2307 = vmatpush1.bf16.msra.mxu0 %v2289
        %2308 = vmatprep.subr.bf16.mxu0 0
        %2309 = vmatpush1.bf16.msra.mxu0 %v2290
        %2310 = vmatprep.subr.bf16.mxu0 0
        %2311 = vmatpush1.bf16.msra.mxu0 %v2291
        %2312 = vmatprep.subr.bf16.mxu0 0
        %2313 = vmatpush1.bf16.msra.mxu0 %v2292
        %2314 = vmatprep.subr.bf16.mxu0 0
        %2315 = vmatpush1.bf16.msra.mxu0 %v2293
        %2316 = vmatprep.subr.bf16.mxu0 0
        %2317 = vmatpush1.bf16.msra.mxu0 %v2294
        %2318 = vmatprep.subr.bf16.mxu0 0
        %2319 = vmatpush1.bf16.msra.mxu0 %v2295
        %2320 = vmatprep.subr.bf16.mxu0 0
        %2321 = vmatpush1.bf16.msra.mxu0 0
        %2322 = vmatprep.subr.bf16.mxu0 0
        %2323 = vmatpush1.bf16.msra.mxu0 0
        %2324 = vmatprep.subr.bf16.mxu0 0
        %2325 = vmatpush1.bf16.msra.mxu0 0
        %2326 = vmatprep.subr.bf16.mxu0 0
        %2327 = vmatpush1.bf16.msra.mxu0 0
        %2328 = vmatprep.subr.bf16.mxu0 0
        %2329 = vmatpush1.bf16.msra.mxu0 0
        %2330 = vmatprep.subr.bf16.mxu0 0
        %2331 = vmatpush1.bf16.msra.mxu0 0
        %2332 = vmatprep.subr.bf16.mxu0 0
        %2333 = vmatpush1.bf16.msra.mxu0 0
        %2334 = vmatprep.subr.bf16.mxu0 0
        %2335 = vmatpush1.bf16.msra.mxu0 0
        %2336 = vmatprep.mubr.bf16.mxu0 0
        %2337 = vmatmul.mubr.bf16.gmra.mrb[0].mxu0 %v2224
        %v2338 = vpop.f32.mrb[0].mxu0
        %v2339 = vadd.f32 0.0, %v2338
        %v2340 = vpop.f32.mrb[0].mxu0
        %v2341 = vpop.f32.mrb[0].mxu0
        %v2342 = vadd.f32 0.0, %v2341
        %v2343 = vpop.f32.mrb[0].mxu0
        %2344 = vmatprep.mubr.bf16.mxu0 0
        %2345 = vmatmul.mubr.bf16.gmra.mrb[0].mxu0 %v2225
        %v2346 = vpop.f32.mrb[0].mxu0
        %v2347 = vadd.f32 0.0, %v2346
        %v2348 = vpop.f32.mrb[0].mxu0
        %v2349 = vpop.f32.mrb[0].mxu0
        %v2350 = vadd.f32 0.0, %v2349
        %v2351 = vpop.f32.mrb[0].mxu0
        %2352 = vmatprep.mubr.bf16.mxu0 0
        %2353 = vmatmul.mubr.bf16.gmra.mrb[0].mxu0 %v2226
        %v2354 = vpop.f32.mrb[0].mxu0
        %v2355 = vadd.f32 0.0, %v2354
        %v2356 = vpop.f32.mrb[0].mxu0
        %v2357 = vpop.f32.mrb[0].mxu0
        %v2358 = vadd.f32 0.0, %v2357
        %v2359 = vpop.f32.mrb[0].mxu0
        %2360 = vmatprep.mubr.bf16.mxu0 0
        %2361 = vmatmul.mubr.bf16.gmra.mrb[0].mxu0 %v2227
        %v2362 = vpop.f32.mrb[0].mxu0
        %v2363 = vadd.f32 0.0, %v2362
        %v2364 = vpop.f32.mrb[0].mxu0
        %v2365 = vpop.f32.mrb[0].mxu0
        %v2366 = vadd.f32 0.0, %v2365
        %v2367 = vpop.f32.mrb[0].mxu0
        %2368 = vmatprep.mubr.bf16.mxu0 0
        %2369 = vmatmul.mubr.bf16.gmra.mrb[0].mxu0 %v2228
        %v2370 = vpop.f32.mrb[0].mxu0
        %v2371 = vadd.f32 0.0, %v2370
        %v2372 = vpop.f32.mrb[0].mxu0
        %v2373 = vpop.f32.mrb[0].mxu0
        %v2374 = vadd.f32 0.0, %v2373
        %v2375 = vpop.f32.mrb[0].mxu0
        %2376 = vmatprep.mubr.bf16.mxu0 0
        %2377 = vmatmul.mubr.bf16.gmra.mrb[0].mxu0 %v2229
        %v2378 = vpop.f32.mrb[0].mxu0
        %v2379 = vadd.f32 0.0, %v2378
        %v2380 = vpop.f32.mrb[0].mxu0
        %v2381 = vpop.f32.mrb[0].mxu0
        %v2382 = vadd.f32 0.0, %v2381
        %v2383 = vpop.f32.mrb[0].mxu0
        %2384 = vmatprep.mubr.bf16.mxu0 0
        %2385 = vmatmul.mubr.bf16.gmra.mrb[0].mxu0 %v2230
        %v2386 = vpop.f32.mrb[0].mxu0
        %v2387 = vadd.f32 0.0, %v2386
        %v2388 = vpop.f32.mrb[0].mxu0
        %v2389 = vpop.f32.mrb[0].mxu0
        %v2390 = vadd.f32 0.0, %v2389
        %v2391 = vpop.f32.mrb[0].mxu0
        %2392 = vmatprep.mubr.bf16.mxu0 0
        %2393 = vmatmul.mubr.bf16.gmra.mrb[0].mxu0 %v2231
        %v2394 = vpop.f32.mrb[0].mxu0
        %v2395 = vadd.f32 0.0, %v2394
        %v2396 = vpop.f32.mrb[0].mxu0
        %v2397 = vpop.f32.mrb[0].mxu0
        %v2398 = vadd.f32 0.0, %v2397
        %v2399 = vpop.f32.mrb[0].mxu0
        %2400 = vmatprep.mubr.bf16.mxu0 0
        %2401 = vmatmul.mubr.bf16.gmra.mrb[0].mxu0 %v2232
        %v2402 = vpop.f32.mrb[0].mxu0
        %v2403 = vadd.f32 0.0, %v2402
        %v2404 = vpop.f32.mrb[0].mxu0
        %v2405 = vpop.f32.mrb[0].mxu0
        %v2406 = vadd.f32 0.0, %v2405
        %v2407 = vpop.f32.mrb[0].mxu0
        %2408 = vmatprep.mubr.bf16.mxu0 0
        %2409 = vmatmul.mubr.bf16.gmra.mrb[0].mxu0 %v2233
        %v2410 = vpop.f32.mrb[0].mxu0
        %v2411 = vadd.f32 0.0, %v2410
        %v2412 = vpop.f32.mrb[0].mxu0
        %v2413 = vpop.f32.mrb[0].mxu0
        %v2414 = vadd.f32 0.0, %v2413
        %v2415 = vpop.f32.mrb[0].mxu0
        %2416 = vmatprep.mubr.bf16.mxu0 0
        %2417 = vmatmul.mubr.bf16.gmra.mrb[0].mxu0 %v2234
        %v2418 = vpop.f32.mrb[0].mxu0
        %v2419 = vadd.f32 0.0, %v2418
        %v2420 = vpop.f32.mrb[0].mxu0
        %v2421 = vpop.f32.mrb[0].mxu0
        %v2422 = vadd.f32 0.0, %v2421
        %v2423 = vpop.f32.mrb[0].mxu0
        %2424 = vmatprep.mubr.bf16.mxu0 0
        %2425 = vmatmul.mubr.bf16.gmra.mrb[0].mxu0 %v2235
        %v2426 = vpop.f32.mrb[0].mxu0
        %v2427 = vadd.f32 0.0, %v2426
        %v2428 = vpop.f32.mrb[0].mxu0
        %v2429 = vpop.f32.mrb[0].mxu0
        %v2430 = vadd.f32 0.0, %v2429
        %v2431 = vpop.f32.mrb[0].mxu0
        %2432 = vmatprep.mubr.bf16.mxu0 0
        %2433 = vmatmul.mubr.bf16.gmra.mrb[0].mxu0 %v2236
        %v2434 = vpop.f32.mrb[0].mxu0
        %v2435 = vadd.f32 0.0, %v2434
        %v2436 = vpop.f32.mrb[0].mxu0
        %v2437 = vpop.f32.mrb[0].mxu0
        %v2438 = vadd.f32 0.0, %v2437
        %v2439 = vpop.f32.mrb[0].mxu0
        %2440 = vmatprep.mubr.bf16.mxu0 0
        %2441 = vmatmul.mubr.bf16.gmra.mrb[0].mxu0 %v2237
        %v2442 = vpop.f32.mrb[0].mxu0
        %v2443 = vadd.f32 0.0, %v2442
        %v2444 = vpop.f32.mrb[0].mxu0
        %v2445 = vpop.f32.mrb[0].mxu0
        %v2446 = vadd.f32 0.0, %v2445
        %v2447 = vpop.f32.mrb[0].mxu0
        %2448 = vmatprep.mubr.bf16.mxu0 0
        %2449 = vmatmul.mubr.bf16.gmra.mrb[0].mxu0 %v2238
        %v2450 = vpop.f32.mrb[0].mxu0
        %v2451 = vadd.f32 0.0, %v2450
        %v2452 = vpop.f32.mrb[0].mxu0
        %v2453 = vpop.f32.mrb[0].mxu0
        %v2454 = vadd.f32 0.0, %v2453
        %v2455 = vpop.f32.mrb[0].mxu0
        %2456 = vmatprep.mubr.bf16.mxu0 0
        %2457 = vmatmul.mubr.bf16.gmra.mrb[0].mxu0 %v2239
        %v2458 = vpop.f32.mrb[0].mxu0
        %v2459 = vadd.f32 0.0, %v2458
        %v2460 = vpop.f32.mrb[0].mxu0
        %v2461 = vpop.f32.mrb[0].mxu0
        %v2462 = vadd.f32 0.0, %v2461
        %v2463 = vpop.f32.mrb[0].mxu0
        %2464 = vdwg.mxu0
        %v2465 = vadd.f32 %v550, %v2339
        %v2466 = vadd.f32 %v551, %v2342
        %v2467 = vadd.f32 %v552, %v2347
        %v2468 = vadd.f32 %v553, %v2350
        %v2469 = vadd.f32 %v554, %v2355
        %v2470 = vadd.f32 %v555, %v2358
        %v2471 = vadd.f32 %v556, %v2363
        %v2472 = vadd.f32 %v557, %v2366
        %v2473 = vadd.f32 %v558, %v2371
        %v2474 = vadd.f32 %v559, %v2374
        %v2475 = vadd.f32 %v560, %v2379
        %v2476 = vadd.f32 %v561, %v2382
        %v2477 = vadd.f32 %v562, %v2387
        %v2478 = vadd.f32 %v563, %v2390
        %v2479 = vadd.f32 %v564, %v2395
        %v2480 = vadd.f32 %v565, %v2398
        %v2481 = vadd.f32 %v566, %v2403
        %v2482 = vadd.f32 %v567, %v2406
        %v2483 = vadd.f32 %v568, %v2411
        %v2484 = vadd.f32 %v569, %v2414
        %v2485 = vadd.f32 %v570, %v2419
        %v2486 = vadd.f32 %v571, %v2422
        %v2487 = vadd.f32 %v572, %v2427
        %v2488 = vadd.f32 %v573, %v2430
        %v2489 = vadd.f32 %v574, %v2435
        %v2490 = vadd.f32 %v575, %v2438
        %v2491 = vadd.f32 %v576, %v2443
        %v2492 = vadd.f32 %v577, %v2446
        %v2493 = vadd.f32 %v578, %v2451
        %v2494 = vadd.f32 %v579, %v2454
        %v2495 = vadd.f32 %v580, %v2459
        %v2496 = vadd.f32 %v581, %v2462
        %v2497 = vld [vmem:[%s7] sm:$0x1]
        %v2499 = vlaneseq
        %v2500 = vshrl.u32 %v2499, 7
        %v2501 = vsub.s32 0, %v2500
        %v2502 = vrot.slane %v2497, %v2501
        %v2504 = vadd.f32 %v2465, %v2502
        %v2505 = vadd.f32 %v2466, %v2502
        %v2506 = vadd.f32 %v2467, %v2502
        %v2507 = vadd.f32 %v2468, %v2502
        %v2508 = vadd.f32 %v2469, %v2502
        %v2509 = vadd.f32 %v2470, %v2502
        %v2510 = vadd.f32 %v2471, %v2502
        %v2511 = vadd.f32 %v2472, %v2502
        %v2512 = vadd.f32 %v2473, %v2502
        %v2513 = vadd.f32 %v2474, %v2502
        %v2514 = vadd.f32 %v2475, %v2502
        %v2515 = vadd.f32 %v2476, %v2502
        %v2516 = vadd.f32 %v2477, %v2502
        %v2517 = vadd.f32 %v2478, %v2502
        %v2518 = vadd.f32 %v2479, %v2502
        %v2519 = vadd.f32 %v2480, %v2502
        %v2520 = vadd.f32 %v2481, %v2502
        %v2521 = vadd.f32 %v2482, %v2502
        %v2522 = vadd.f32 %v2483, %v2502
        %v2523 = vadd.f32 %v2484, %v2502
        %v2524 = vadd.f32 %v2485, %v2502
        %v2525 = vadd.f32 %v2486, %v2502
        %v2526 = vadd.f32 %v2487, %v2502
        %v2527 = vadd.f32 %v2488, %v2502
        %v2528 = vadd.f32 %v2489, %v2502
        %v2529 = vadd.f32 %v2490, %v2502
        %v2530 = vadd.f32 %v2491, %v2502
        %v2531 = vadd.f32 %v2492, %v2502
        %v2532 = vadd.f32 %v2493, %v2502
        %v2533 = vadd.f32 %v2494, %v2502
        %v2534 = vadd.f32 %v2495, %v2502
        %v2535 = vadd.f32 %v2496, %v2502
        %v2536 = vld [vmem:[%s8] sm:$0x1]
        %2537 = vadd.xlane.f32.xlu0 %v2504
        %v2538 = vpop.xlane.xlu0 %2537
        %2539 = vadd.xlane.f32.xlu0 %v2505
        %v2540 = vpop.xlane.xlu0 %2539
        %2541 = vadd.xlane.f32.xlu0 %v2506
        %v2542 = vpop.xlane.xlu0 %2541
        %2543 = vadd.xlane.f32.xlu0 %v2507
        %v2544 = vpop.xlane.xlu0 %2543
        %2545 = vadd.xlane.f32.xlu0 %v2508
        %v2546 = vpop.xlane.xlu0 %2545
        %2547 = vadd.xlane.f32.xlu0 %v2509
        %v2548 = vpop.xlane.xlu0 %2547
        %2549 = vadd.xlane.f32.xlu0 %v2510
        %v2550 = vpop.xlane.xlu0 %2549
        %2551 = vadd.xlane.f32.xlu0 %v2511
        %v2552 = vpop.xlane.xlu0 %2551
        %2553 = vadd.xlane.f32.xlu0 %v2512
        %v2554 = vpop.xlane.xlu0 %2553
        %2555 = vadd.xlane.f32.xlu0 %v2513
        %v2556 = vpop.xlane.xlu0 %2555
        %2557 = vadd.xlane.f32.xlu0 %v2514
        %v2558 = vpop.xlane.xlu0 %2557
        %2559 = vadd.xlane.f32.xlu0 %v2515
        %v2560 = vpop.xlane.xlu0 %2559
        %2561 = vadd.xlane.f32.xlu0 %v2516
        %v2562 = vpop.xlane.xlu0 %2561
        %2563 = vadd.xlane.f32.xlu0 %v2517
        %v2564 = vpop.xlane.xlu0 %2563
        %2565 = vadd.xlane.f32.xlu0 %v2518
        %v2566 = vpop.xlane.xlu0 %2565
        %2567 = vadd.xlane.f32.xlu0 %v2519
        %v2568 = vpop.xlane.xlu0 %2567
        %2569 = vadd.xlane.f32.xlu0 %v2520
        %v2570 = vpop.xlane.xlu0 %2569
        %2571 = vadd.xlane.f32.xlu0 %v2521
        %v2572 = vpop.xlane.xlu0 %2571
        %2573 = vadd.xlane.f32.xlu0 %v2522
        %v2574 = vpop.xlane.xlu0 %2573
        %2575 = vadd.xlane.f32.xlu0 %v2523
        %v2576 = vpop.xlane.xlu0 %2575
        %2577 = vadd.xlane.f32.xlu0 %v2524
        %v2578 = vpop.xlane.xlu0 %2577
        %2579 = vadd.xlane.f32.xlu0 %v2525
        %v2580 = vpop.xlane.xlu0 %2579
        %2581 = vadd.xlane.f32.xlu0 %v2526
        %v2582 = vpop.xlane.xlu0 %2581
        %2583 = vadd.xlane.f32.xlu0 %v2527
        %v2584 = vpop.xlane.xlu0 %2583
        %2585 = vadd.xlane.f32.xlu0 %v2528
        %v2586 = vpop.xlane.xlu0 %2585
        %2587 = vadd.xlane.f32.xlu0 %v2529
        %v2588 = vpop.xlane.xlu0 %2587
        %2589 = vadd.xlane.f32.xlu0 %v2530
        %v2590 = vpop.xlane.xlu0 %2589
        %2591 = vadd.xlane.f32.xlu0 %v2531
        %v2592 = vpop.xlane.xlu0 %2591
        %2593 = vadd.xlane.f32.xlu0 %v2532
        %v2594 = vpop.xlane.xlu0 %2593
        %2595 = vadd.xlane.f32.xlu0 %v2533
        %v2596 = vpop.xlane.xlu0 %2595
        %2597 = vadd.xlane.f32.xlu0 %v2534
        %v2598 = vpop.xlane.xlu0 %2597
        %2599 = vadd.xlane.f32.xlu0 %v2535
        %v2600 = vpop.xlane.xlu0 %2599
        %v2601 = vmul.f32 %v2538, %v647
        %v2602 = vmul.f32 %v2540, %v647
        %v2603 = vmul.f32 %v2542, %v647
        %v2604 = vmul.f32 %v2544, %v647
        %v2605 = vmul.f32 %v2546, %v647
        %v2606 = vmul.f32 %v2548, %v647
        %v2607 = vmul.f32 %v2550, %v647
        %v2608 = vmul.f32 %v2552, %v647
        %v2609 = vmul.f32 %v2554, %v647
        %v2610 = vmul.f32 %v2556, %v647
        %v2611 = vmul.f32 %v2558, %v647
        %v2612 = vmul.f32 %v2560, %v647
        %v2613 = vmul.f32 %v2562, %v647
        %v2614 = vmul.f32 %v2564, %v647
        %v2615 = vmul.f32 %v2566, %v647
        %v2616 = vmul.f32 %v2568, %v647
        %v2617 = vmul.f32 %v2570, %v647
        %v2618 = vmul.f32 %v2572, %v647
        %v2619 = vmul.f32 %v2574, %v647
        %v2620 = vmul.f32 %v2576, %v647
        %v2621 = vmul.f32 %v2578, %v647
        %v2622 = vmul.f32 %v2580, %v647
        %v2623 = vmul.f32 %v2582, %v647
        %v2624 = vmul.f32 %v2584, %v647
        %v2625 = vmul.f32 %v2586, %v647
        %v2626 = vmul.f32 %v2588, %v647
        %v2627 = vmul.f32 %v2590, %v647
        %v2628 = vmul.f32 %v2592, %v647
        %v2629 = vmul.f32 %v2594, %v647
        %v2630 = vmul.f32 %v2596, %v647
        %v2631 = vmul.f32 %v2598, %v647
        %v2632 = vmul.f32 %v2600, %v647
        %v2633 = vsub.f32 %v2504, %v2601
        %v2634 = vsub.f32 %v2505, %v2602
        %v2635 = vsub.f32 %v2506, %v2603
        %v2636 = vsub.f32 %v2507, %v2604
        %v2637 = vsub.f32 %v2508, %v2605
        %v2638 = vsub.f32 %v2509, %v2606
        %v2639 = vsub.f32 %v2510, %v2607
        %v2640 = vsub.f32 %v2511, %v2608
        %v2641 = vsub.f32 %v2512, %v2609
        %v2642 = vsub.f32 %v2513, %v2610
        %v2643 = vsub.f32 %v2514, %v2611
        %v2644 = vsub.f32 %v2515, %v2612
        %v2645 = vsub.f32 %v2516, %v2613
        %v2646 = vsub.f32 %v2517, %v2614
        %v2647 = vsub.f32 %v2518, %v2615
        %v2648 = vsub.f32 %v2519, %v2616
        %v2649 = vsub.f32 %v2520, %v2617
        %v2650 = vsub.f32 %v2521, %v2618
        %v2651 = vsub.f32 %v2522, %v2619
        %v2652 = vsub.f32 %v2523, %v2620
        %v2653 = vsub.f32 %v2524, %v2621
        %v2654 = vsub.f32 %v2525, %v2622
        %v2655 = vsub.f32 %v2526, %v2623
        %v2656 = vsub.f32 %v2527, %v2624
        %v2657 = vsub.f32 %v2528, %v2625
        %v2658 = vsub.f32 %v2529, %v2626
        %v2659 = vsub.f32 %v2530, %v2627
        %v2660 = vsub.f32 %v2531, %v2628
        %v2661 = vsub.f32 %v2532, %v2629
        %v2662 = vsub.f32 %v2533, %v2630
        %v2663 = vsub.f32 %v2534, %v2631
        %v2664 = vsub.f32 %v2535, %v2632
        %v2665 = vmul.f32 %v2633, %v2633
        %v2666 = vmul.f32 %v2634, %v2634
        %v2667 = vmul.f32 %v2635, %v2635
        %v2668 = vmul.f32 %v2636, %v2636
        %v2669 = vmul.f32 %v2637, %v2637
        %v2670 = vmul.f32 %v2638, %v2638
        %v2671 = vmul.f32 %v2639, %v2639
        %v2672 = vmul.f32 %v2640, %v2640
        %v2673 = vmul.f32 %v2641, %v2641
        %v2674 = vmul.f32 %v2642, %v2642
        %v2675 = vmul.f32 %v2643, %v2643
        %v2676 = vmul.f32 %v2644, %v2644
        %v2677 = vmul.f32 %v2645, %v2645
        %v2678 = vmul.f32 %v2646, %v2646
        %v2679 = vmul.f32 %v2647, %v2647
        %v2680 = vmul.f32 %v2648, %v2648
        %v2681 = vmul.f32 %v2649, %v2649
        %v2682 = vmul.f32 %v2650, %v2650
        %v2683 = vmul.f32 %v2651, %v2651
        %v2684 = vmul.f32 %v2652, %v2652
        %v2685 = vmul.f32 %v2653, %v2653
        %v2686 = vmul.f32 %v2654, %v2654
        %v2687 = vmul.f32 %v2655, %v2655
        %v2688 = vmul.f32 %v2656, %v2656
        %v2689 = vmul.f32 %v2657, %v2657
        %v2690 = vmul.f32 %v2658, %v2658
        %v2691 = vmul.f32 %v2659, %v2659
        %v2692 = vmul.f32 %v2660, %v2660
        %v2693 = vmul.f32 %v2661, %v2661
        %v2694 = vmul.f32 %v2662, %v2662
        %v2695 = vmul.f32 %v2663, %v2663
        %v2696 = vmul.f32 %v2664, %v2664
        %2697 = vadd.xlane.f32.xlu0 %v2665
        %v2698 = vpop.xlane.xlu0 %2697
        %2699 = vadd.xlane.f32.xlu0 %v2666
        %v2700 = vpop.xlane.xlu0 %2699
        %2701 = vadd.xlane.f32.xlu0 %v2667
        %v2702 = vpop.xlane.xlu0 %2701
        %2703 = vadd.xlane.f32.xlu0 %v2668
        %v2704 = vpop.xlane.xlu0 %2703
        %2705 = vadd.xlane.f32.xlu0 %v2669
        %v2706 = vpop.xlane.xlu0 %2705
        %2707 = vadd.xlane.f32.xlu0 %v2670
        %v2708 = vpop.xlane.xlu0 %2707
        %2709 = vadd.xlane.f32.xlu0 %v2671
        %v2710 = vpop.xlane.xlu0 %2709
        %2711 = vadd.xlane.f32.xlu0 %v2672
        %v2712 = vpop.xlane.xlu0 %2711
        %2713 = vadd.xlane.f32.xlu0 %v2673
        %v2714 = vpop.xlane.xlu0 %2713
        %2715 = vadd.xlane.f32.xlu0 %v2674
        %v2716 = vpop.xlane.xlu0 %2715
        %2717 = vadd.xlane.f32.xlu0 %v2675
        %v2718 = vpop.xlane.xlu0 %2717
        %2719 = vadd.xlane.f32.xlu0 %v2676
        %v2720 = vpop.xlane.xlu0 %2719
        %2721 = vadd.xlane.f32.xlu0 %v2677
        %v2722 = vpop.xlane.xlu0 %2721
        %2723 = vadd.xlane.f32.xlu0 %v2678
        %v2724 = vpop.xlane.xlu0 %2723
        %2725 = vadd.xlane.f32.xlu0 %v2679
        %v2726 = vpop.xlane.xlu0 %2725
        %2727 = vadd.xlane.f32.xlu0 %v2680
        %v2728 = vpop.xlane.xlu0 %2727
        %2729 = vadd.xlane.f32.xlu0 %v2681
        %v2730 = vpop.xlane.xlu0 %2729
        %2731 = vadd.xlane.f32.xlu0 %v2682
        %v2732 = vpop.xlane.xlu0 %2731
        %2733 = vadd.xlane.f32.xlu0 %v2683
        %v2734 = vpop.xlane.xlu0 %2733
        %2735 = vadd.xlane.f32.xlu0 %v2684
        %v2736 = vpop.xlane.xlu0 %2735
        %2737 = vadd.xlane.f32.xlu0 %v2685
        %v2738 = vpop.xlane.xlu0 %2737
        %2739 = vadd.xlane.f32.xlu0 %v2686
        %v2740 = vpop.xlane.xlu0 %2739
        %2741 = vadd.xlane.f32.xlu0 %v2687
        %v2742 = vpop.xlane.xlu0 %2741
        %2743 = vadd.xlane.f32.xlu0 %v2688
        %v2744 = vpop.xlane.xlu0 %2743
        %2745 = vadd.xlane.f32.xlu0 %v2689
        %v2746 = vpop.xlane.xlu0 %2745
        %2747 = vadd.xlane.f32.xlu0 %v2690
        %v2748 = vpop.xlane.xlu0 %2747
        %2749 = vadd.xlane.f32.xlu0 %v2691
        %v2750 = vpop.xlane.xlu0 %2749
        %2751 = vadd.xlane.f32.xlu0 %v2692
        %v2752 = vpop.xlane.xlu0 %2751
        %2753 = vadd.xlane.f32.xlu0 %v2693
        %v2754 = vpop.xlane.xlu0 %2753
        %2755 = vadd.xlane.f32.xlu0 %v2694
        %v2756 = vpop.xlane.xlu0 %2755
        %2757 = vadd.xlane.f32.xlu0 %v2695
        %v2758 = vpop.xlane.xlu0 %2757
        %2759 = vadd.xlane.f32.xlu0 %v2696
        %v2760 = vpop.xlane.xlu0 %2759
        %v2761 = vmul.f32 %v2698, %v647
        %v2762 = vmul.f32 %v2700, %v647
        %v2763 = vmul.f32 %v2702, %v647
        %v2764 = vmul.f32 %v2704, %v647
        %v2765 = vmul.f32 %v2706, %v647
        %v2766 = vmul.f32 %v2708, %v647
        %v2767 = vmul.f32 %v2710, %v647
        %v2768 = vmul.f32 %v2712, %v647
        %v2769 = vmul.f32 %v2714, %v647
        %v2770 = vmul.f32 %v2716, %v647
        %v2771 = vmul.f32 %v2718, %v647
        %v2772 = vmul.f32 %v2720, %v647
        %v2773 = vmul.f32 %v2722, %v647
        %v2774 = vmul.f32 %v2724, %v647
        %v2775 = vmul.f32 %v2726, %v647
        %v2776 = vmul.f32 %v2728, %v647
        %v2777 = vmul.f32 %v2730, %v647
        %v2778 = vmul.f32 %v2732, %v647
        %v2779 = vmul.f32 %v2734, %v647
        %v2780 = vmul.f32 %v2736, %v647
        %v2781 = vmul.f32 %v2738, %v647
        %v2782 = vmul.f32 %v2740, %v647
        %v2783 = vmul.f32 %v2742, %v647
        %v2784 = vmul.f32 %v2744, %v647
        %v2785 = vmul.f32 %v2746, %v647
        %v2786 = vmul.f32 %v2748, %v647
        %v2787 = vmul.f32 %v2750, %v647
        %v2788 = vmul.f32 %v2752, %v647
        %v2789 = vmul.f32 %v2754, %v647
        %v2790 = vmul.f32 %v2756, %v647
        %v2791 = vmul.f32 %v2758, %v647
        %v2792 = vmul.f32 %v2760, %v647
        %v2793 = vadd.f32 %v2761, 1e-05
        %v2794 = vadd.f32 %v2762, 1e-05
        %v2795 = vadd.f32 %v2763, 1e-05
        %v2796 = vadd.f32 %v2764, 1e-05
        %v2797 = vadd.f32 %v2765, 1e-05
        %v2798 = vadd.f32 %v2766, 1e-05
        %v2799 = vadd.f32 %v2767, 1e-05
        %v2800 = vadd.f32 %v2768, 1e-05
        %v2801 = vadd.f32 %v2769, 1e-05
        %v2802 = vadd.f32 %v2770, 1e-05
        %v2803 = vadd.f32 %v2771, 1e-05
        %v2804 = vadd.f32 %v2772, 1e-05
        %v2805 = vadd.f32 %v2773, 1e-05
        %v2806 = vadd.f32 %v2774, 1e-05
        %v2807 = vadd.f32 %v2775, 1e-05
        %v2808 = vadd.f32 %v2776, 1e-05
        %v2809 = vadd.f32 %v2777, 1e-05
        %v2810 = vadd.f32 %v2778, 1e-05
        %v2811 = vadd.f32 %v2779, 1e-05
        %v2812 = vadd.f32 %v2780, 1e-05
        %v2813 = vadd.f32 %v2781, 1e-05
        %v2814 = vadd.f32 %v2782, 1e-05
        %v2815 = vadd.f32 %v2783, 1e-05
        %v2816 = vadd.f32 %v2784, 1e-05
        %v2817 = vadd.f32 %v2785, 1e-05
        %v2818 = vadd.f32 %v2786, 1e-05
        %v2819 = vadd.f32 %v2787, 1e-05
        %v2820 = vadd.f32 %v2788, 1e-05
        %v2821 = vadd.f32 %v2789, 1e-05
        %v2822 = vadd.f32 %v2790, 1e-05
        %v2823 = vadd.f32 %v2791, 1e-05
        %v2824 = vadd.f32 %v2792, 1e-05
        %v2825 = vrsqrt.pop %v2793
        %v2826 = vrsqrt.pop %v2794
        %v2827 = vrsqrt.pop %v2795
        %v2828 = vrsqrt.pop %v2796
        %v2829 = vrsqrt.pop %v2797
        %v2830 = vrsqrt.pop %v2798
        %v2831 = vrsqrt.pop %v2799
        %v2832 = vrsqrt.pop %v2800
        %v2833 = vrsqrt.pop %v2801
        %v2834 = vrsqrt.pop %v2802
        %v2835 = vrsqrt.pop %v2803
        %v2836 = vrsqrt.pop %v2804
        %v2837 = vrsqrt.pop %v2805
        %v2838 = vrsqrt.pop %v2806
        %v2839 = vrsqrt.pop %v2807
        %v2840 = vrsqrt.pop %v2808
        %v2841 = vrsqrt.pop %v2809
        %v2842 = vrsqrt.pop %v2810
        %v2843 = vrsqrt.pop %v2811
        %v2844 = vrsqrt.pop %v2812
        %v2845 = vrsqrt.pop %v2813
        %v2846 = vrsqrt.pop %v2814
        %v2847 = vrsqrt.pop %v2815
        %v2848 = vrsqrt.pop %v2816
        %v2849 = vrsqrt.pop %v2817
        %v2850 = vrsqrt.pop %v2818
        %v2851 = vrsqrt.pop %v2819
        %v2852 = vrsqrt.pop %v2820
        %v2853 = vrsqrt.pop %v2821
        %v2854 = vrsqrt.pop %v2822
        %v2855 = vrsqrt.pop %v2823
        %v2856 = vrsqrt.pop %v2824
        %v2857 = vmul.f32 %v2633, %v2825
        %v2858 = vmul.f32 %v2634, %v2826
        %v2859 = vmul.f32 %v2635, %v2827
        %v2860 = vmul.f32 %v2636, %v2828
        %v2861 = vmul.f32 %v2637, %v2829
        %v2862 = vmul.f32 %v2638, %v2830
        %v2863 = vmul.f32 %v2639, %v2831
        %v2864 = vmul.f32 %v2640, %v2832
        %v2865 = vmul.f32 %v2641, %v2833
        %v2866 = vmul.f32 %v2642, %v2834
        %v2867 = vmul.f32 %v2643, %v2835
        %v2868 = vmul.f32 %v2644, %v2836
        %v2869 = vmul.f32 %v2645, %v2837
        %v2870 = vmul.f32 %v2646, %v2838
        %v2871 = vmul.f32 %v2647, %v2839
        %v2872 = vmul.f32 %v2648, %v2840
        %v2873 = vmul.f32 %v2649, %v2841
        %v2874 = vmul.f32 %v2650, %v2842
        %v2875 = vmul.f32 %v2651, %v2843
        %v2876 = vmul.f32 %v2652, %v2844
        %v2877 = vmul.f32 %v2653, %v2845
        %v2878 = vmul.f32 %v2654, %v2846
        %v2879 = vmul.f32 %v2655, %v2847
        %v2880 = vmul.f32 %v2656, %v2848
        %v2881 = vmul.f32 %v2657, %v2849
        %v2882 = vmul.f32 %v2658, %v2850
        %v2883 = vmul.f32 %v2659, %v2851
        %v2884 = vmul.f32 %v2660, %v2852
        %v2885 = vmul.f32 %v2661, %v2853
        %v2886 = vmul.f32 %v2662, %v2854
        %v2887 = vmul.f32 %v2663, %v2855
        %v2888 = vmul.f32 %v2664, %v2856
        %v2890 = vlaneseq
        %v2891 = vshrl.u32 %v2890, 7
        %v2892 = vsub.s32 0, %v2891
        %v2893 = vrot.slane %v2536, %v2892
        %v2895 = vmul.f32 %v2857, %v2893
        %v2896 = vmul.f32 %v2858, %v2893
        %v2897 = vmul.f32 %v2859, %v2893
        %v2898 = vmul.f32 %v2860, %v2893
        %v2899 = vmul.f32 %v2861, %v2893
        %v2900 = vmul.f32 %v2862, %v2893
        %v2901 = vmul.f32 %v2863, %v2893
        %v2902 = vmul.f32 %v2864, %v2893
        %v2903 = vmul.f32 %v2865, %v2893
        %v2904 = vmul.f32 %v2866, %v2893
        %v2905 = vmul.f32 %v2867, %v2893
        %v2906 = vmul.f32 %v2868, %v2893
        %v2907 = vmul.f32 %v2869, %v2893
        %v2908 = vmul.f32 %v2870, %v2893
        %v2909 = vmul.f32 %v2871, %v2893
        %v2910 = vmul.f32 %v2872, %v2893
        %v2911 = vmul.f32 %v2873, %v2893
        %v2912 = vmul.f32 %v2874, %v2893
        %v2913 = vmul.f32 %v2875, %v2893
        %v2914 = vmul.f32 %v2876, %v2893
        %v2915 = vmul.f32 %v2877, %v2893
        %v2916 = vmul.f32 %v2878, %v2893
        %v2917 = vmul.f32 %v2879, %v2893
        %v2918 = vmul.f32 %v2880, %v2893
        %v2919 = vmul.f32 %v2881, %v2893
        %v2920 = vmul.f32 %v2882, %v2893
        %v2921 = vmul.f32 %v2883, %v2893
        %v2922 = vmul.f32 %v2884, %v2893
        %v2923 = vmul.f32 %v2885, %v2893
        %v2924 = vmul.f32 %v2886, %v2893
        %v2925 = vmul.f32 %v2887, %v2893
        %v2926 = vmul.f32 %v2888, %v2893
        %v2927 = vpack.c.bf16 %v2896, %v2895
        %v2928 = vpack.c.bf16 %v2898, %v2897
        %v2929 = vpack.c.bf16 %v2900, %v2899
        %v2930 = vpack.c.bf16 %v2902, %v2901
        %v2931 = vpack.c.bf16 %v2904, %v2903
        %v2932 = vpack.c.bf16 %v2906, %v2905
        %v2933 = vpack.c.bf16 %v2908, %v2907
        %v2934 = vpack.c.bf16 %v2910, %v2909
        %v2935 = vpack.c.bf16 %v2912, %v2911
        %v2936 = vpack.c.bf16 %v2914, %v2913
        %v2937 = vpack.c.bf16 %v2916, %v2915
        %v2938 = vpack.c.bf16 %v2918, %v2917
        %v2939 = vpack.c.bf16 %v2920, %v2919
        %v2940 = vpack.c.bf16 %v2922, %v2921
        %v2941 = vpack.c.bf16 %v2924, %v2923
        %v2942 = vpack.c.bf16 %v2926, %v2925
        %v2943 = vld [vmem:[#allocation11] sm:$0xff]
        %v2944 = vld [vmem:[#allocation11 + $0x10] sm:$0xff]
        %v2945 = vld [vmem:[#allocation11 + $0x20] sm:$0xff]
        %v2946 = vld [vmem:[#allocation11 + $0x30] sm:$0xff]
        %v2947 = vld [vmem:[#allocation11 + $0x40] sm:$0xff]
        %v2948 = vld [vmem:[#allocation11 + $0x50] sm:$0xff]
        %v2949 = vld [vmem:[#allocation11 + $0x60] sm:$0xff]
        %v2950 = vld [vmem:[#allocation11 + $0x70] sm:$0xff]
        %v2951 = vld [vmem:[#allocation11 + $0x80] sm:$0xff]
        %v2952 = vld [vmem:[#allocation11 + $0x90] sm:$0xff]
        %v2953 = vld [vmem:[#allocation11 + $0xa0] sm:$0xff]
        %v2954 = vld [vmem:[#allocation11 + $0xb0] sm:$0xff]
        %v2955 = vld [vmem:[#allocation11 + $0xc0] sm:$0xff]
        %v2956 = vld [vmem:[#allocation11 + $0xd0] sm:$0xff]
        %v2957 = vld [vmem:[#allocation11 + $0xe0] sm:$0xff]
        %v2958 = vld [vmem:[#allocation11 + $0xf0] sm:$0xff]
        %v2959 = vld [vmem:[%s10] sm:$0x3]
        %v2961 = vlaneseq
        %v2962 = vshrl.u32 %v2961, 7
        %v2963 = vsub.s32 0, %v2962
        %v2964 = vrot.slane %v2959, %v2963
        %v2965 = vlaneseq
        %v2966 = vshrl.u32 %v2965, 7
        %v2967 = vsub.s32 1, %v2966
        %v2968 = vrot.slane %v2959, %v2967
        %v2987 = vunpack.c.l.b16 %v2943
        %v2988 = vunpack.c.h.b16 %v2943
        %v2989 = vunpack.c.l.b16 %v2944
        %v2990 = vunpack.c.h.b16 %v2944
        %v2991 = vunpack.c.l.b16 %v2945
        %v2992 = vunpack.c.h.b16 %v2945
        %v2993 = vunpack.c.l.b16 %v2946
        %v2994 = vunpack.c.h.b16 %v2946
        %v2995 = vunpack.c.l.b16 %v2947
        %v2996 = vunpack.c.h.b16 %v2947
        %v2997 = vunpack.c.l.b16 %v2948
        %v2998 = vunpack.c.h.b16 %v2948
        %v2999 = vunpack.c.l.b16 %v2949
        %v3000 = vunpack.c.h.b16 %v2949
        %v3001 = vunpack.c.l.b16 %v2950
        %v3002 = vunpack.c.h.b16 %v2950
        %v3003 = vunpack.c.l.b16 %v2951
        %v3004 = vunpack.c.h.b16 %v2951
        %v3005 = vunpack.c.l.b16 %v2952
        %v3006 = vunpack.c.h.b16 %v2952
        %v3007 = vunpack.c.l.b16 %v2953
        %v3008 = vunpack.c.h.b16 %v2953
        %v3009 = vunpack.c.l.b16 %v2954
        %v3010 = vunpack.c.h.b16 %v2954
        %v3011 = vunpack.c.l.b16 %v2955
        %v3012 = vunpack.c.h.b16 %v2955
        %v3013 = vunpack.c.l.b16 %v2956
        %v3014 = vunpack.c.h.b16 %v2956
        %v3015 = vunpack.c.l.b16 %v2957
        %v3016 = vunpack.c.h.b16 %v2957
        %v3017 = vunpack.c.l.b16 %v2958
        %v3018 = vunpack.c.h.b16 %v2958
        %v3019 = vpack.c.b16 %v2989, %v2987
        %v3020 = vpack.c.b16 %v2990, %v2988
        %v3021 = vpack.c.b16 %v2993, %v2991
        %v3022 = vpack.c.b16 %v2994, %v2992
        %v3023 = vpack.c.b16 %v2997, %v2995
        %v3024 = vpack.c.b16 %v2998, %v2996
        %v3025 = vpack.c.b16 %v3001, %v2999
        %v3026 = vpack.c.b16 %v3002, %v3000
        %v3027 = vpack.c.b16 %v3005, %v3003
        %v3028 = vpack.c.b16 %v3006, %v3004
        %v3029 = vpack.c.b16 %v3009, %v3007
        %v3030 = vpack.c.b16 %v3010, %v3008
        %v3031 = vpack.c.b16 %v3013, %v3011
        %v3032 = vpack.c.b16 %v3014, %v3012
        %v3033 = vpack.c.b16 %v3017, %v3015
        %v3034 = vpack.c.b16 %v3018, %v3016
        %3051 = vmatprep.subr.bf16.mxu0 %v3020
        %3052 = vmatpush1.bf16.msra.mxu0 %v3019
        %3053 = vmatprep.subr.bf16.mxu0 %v3022
        %3054 = vmatpush1.bf16.msra.mxu0 %v3021
        %3055 = vmatprep.subr.bf16.mxu0 %v3024
        %3056 = vmatpush1.bf16.msra.mxu0 %v3023
        %3057 = vmatprep.subr.bf16.mxu0 %v3026
        %3058 = vmatpush1.bf16.msra.mxu0 %v3025
        %3059 = vmatprep.subr.bf16.mxu0 %v3028
        %3060 = vmatpush1.bf16.msra.mxu0 %v3027
        %3061 = vmatprep.subr.bf16.mxu0 %v3030
        %3062 = vmatpush1.bf16.msra.mxu0 %v3029
        %3063 = vmatprep.subr.bf16.mxu0 %v3032
        %3064 = vmatpush1.bf16.msra.mxu0 %v3031
        %3065 = vmatprep.subr.bf16.mxu0 %v3034
        %3066 = vmatpush1.bf16.msra.mxu0 %v3033
        %3067 = vmatprep.subr.bf16.mxu0 0
        %3068 = vmatpush1.bf16.msra.mxu0 0
        %3069 = vmatprep.subr.bf16.mxu0 0
        %3070 = vmatpush1.bf16.msra.mxu0 0
        %3071 = vmatprep.subr.bf16.mxu0 0
        %3072 = vmatpush1.bf16.msra.mxu0 0
        %3073 = vmatprep.subr.bf16.mxu0 0
        %3074 = vmatpush1.bf16.msra.mxu0 0
        %3075 = vmatprep.subr.bf16.mxu0 0
        %3076 = vmatpush1.bf16.msra.mxu0 0
        %3077 = vmatprep.subr.bf16.mxu0 0
        %3078 = vmatpush1.bf16.msra.mxu0 0
        %3079 = vmatprep.subr.bf16.mxu0 0
        %3080 = vmatpush1.bf16.msra.mxu0 0
        %3081 = vmatprep.subr.bf16.mxu0 0
        %3082 = vmatpush1.bf16.msra.mxu0 0
        %3083 = vmatprep.mubr.bf16.mxu0 0
        %3084 = vmatmul.mubr.bf16.gmra.mrb[0].mxu0 %v2927
        %v3085 = vpop.f32.mrb[0].mxu0
        %v3086 = vadd.f32 %v2964, %v3085
        %v3087 = vpop.f32.mrb[0].mxu0
        %v3088 = vadd.f32 %v2968, %v3087
        %v3089 = vpop.f32.mrb[0].mxu0
        %v3090 = vadd.f32 %v2964, %v3089
        %v3091 = vpop.f32.mrb[0].mxu0
        %v3092 = vadd.f32 %v2968, %v3091
        %3093 = vmatprep.mubr.bf16.mxu0 0
        %3094 = vmatmul.mubr.bf16.gmra.mrb[0].mxu0 %v2928
        %v3095 = vpop.f32.mrb[0].mxu0
        %v3096 = vadd.f32 %v2964, %v3095
        %v3097 = vpop.f32.mrb[0].mxu0
        %v3098 = vadd.f32 %v2968, %v3097
        %v3099 = vpop.f32.mrb[0].mxu0
        %v3100 = vadd.f32 %v2964, %v3099
        %v3101 = vpop.f32.mrb[0].mxu0
        %v3102 = vadd.f32 %v2968, %v3101
        %3103 = vmatprep.mubr.bf16.mxu0 0
        %3104 = vmatmul.mubr.bf16.gmra.mrb[0].mxu0 %v2929
        %v3105 = vpop.f32.mrb[0].mxu0
        %v3106 = vadd.f32 %v2964, %v3105
        %v3107 = vpop.f32.mrb[0].mxu0
        %v3108 = vadd.f32 %v2968, %v3107
        %v3109 = vpop.f32.mrb[0].mxu0
        %v3110 = vadd.f32 %v2964, %v3109
        %v3111 = vpop.f32.mrb[0].mxu0
        %v3112 = vadd.f32 %v2968, %v3111
        %3113 = vmatprep.mubr.bf16.mxu0 0
        %3114 = vmatmul.mubr.bf16.gmra.mrb[0].mxu0 %v2930
        %v3115 = vpop.f32.mrb[0].mxu0
        %v3116 = vadd.f32 %v2964, %v3115
        %v3117 = vpop.f32.mrb[0].mxu0
        %v3118 = vadd.f32 %v2968, %v3117
        %v3119 = vpop.f32.mrb[0].mxu0
        %v3120 = vadd.f32 %v2964, %v3119
        %v3121 = vpop.f32.mrb[0].mxu0
        %v3122 = vadd.f32 %v2968, %v3121
        %3123 = vmatprep.mubr.bf16.mxu0 0
        %3124 = vmatmul.mubr.bf16.gmra.mrb[0].mxu0 %v2931
        %v3125 = vpop.f32.mrb[0].mxu0
        %v3126 = vadd.f32 %v2964, %v3125
        %v3127 = vpop.f32.mrb[0].mxu0
        %v3128 = vadd.f32 %v2968, %v3127
        %v3129 = vpop.f32.mrb[0].mxu0
        %v3130 = vadd.f32 %v2964, %v3129
        %v3131 = vpop.f32.mrb[0].mxu0
        %v3132 = vadd.f32 %v2968, %v3131
        %3133 = vmatprep.mubr.bf16.mxu0 0
        %3134 = vmatmul.mubr.bf16.gmra.mrb[0].mxu0 %v2932
        %v3135 = vpop.f32.mrb[0].mxu0
        %v3136 = vadd.f32 %v2964, %v3135
        %v3137 = vpop.f32.mrb[0].mxu0
        %v3138 = vadd.f32 %v2968, %v3137
        %v3139 = vpop.f32.mrb[0].mxu0
        %v3140 = vadd.f32 %v2964, %v3139
        %v3141 = vpop.f32.mrb[0].mxu0
        %v3142 = vadd.f32 %v2968, %v3141
        %3143 = vmatprep.mubr.bf16.mxu0 0
        %3144 = vmatmul.mubr.bf16.gmra.mrb[0].mxu0 %v2933
        %v3145 = vpop.f32.mrb[0].mxu0
        %v3146 = vadd.f32 %v2964, %v3145
        %v3147 = vpop.f32.mrb[0].mxu0
        %v3148 = vadd.f32 %v2968, %v3147
        %v3149 = vpop.f32.mrb[0].mxu0
        %v3150 = vadd.f32 %v2964, %v3149
        %v3151 = vpop.f32.mrb[0].mxu0
        %v3152 = vadd.f32 %v2968, %v3151
        %3153 = vmatprep.mubr.bf16.mxu0 0
        %3154 = vmatmul.mubr.bf16.gmra.mrb[0].mxu0 %v2934
        %v3155 = vpop.f32.mrb[0].mxu0
        %v3156 = vadd.f32 %v2964, %v3155
        %v3157 = vpop.f32.mrb[0].mxu0
        %v3158 = vadd.f32 %v2968, %v3157
        %v3159 = vpop.f32.mrb[0].mxu0
        %v3160 = vadd.f32 %v2964, %v3159
        %v3161 = vpop.f32.mrb[0].mxu0
        %v3162 = vadd.f32 %v2968, %v3161
        %3163 = vmatprep.mubr.bf16.mxu0 0
        %3164 = vmatmul.mubr.bf16.gmra.mrb[0].mxu0 %v2935
        %v3165 = vpop.f32.mrb[0].mxu0
        %v3166 = vadd.f32 %v2964, %v3165
        %v3167 = vpop.f32.mrb[0].mxu0
        %v3168 = vadd.f32 %v2968, %v3167
        %v3169 = vpop.f32.mrb[0].mxu0
        %v3170 = vadd.f32 %v2964, %v3169
        %v3171 = vpop.f32.mrb[0].mxu0
        %v3172 = vadd.f32 %v2968, %v3171
        %3173 = vmatprep.mubr.bf16.mxu0 0
        %3174 = vmatmul.mubr.bf16.gmra.mrb[0].mxu0 %v2936
        %v3175 = vpop.f32.mrb[0].mxu0
        %v3176 = vadd.f32 %v2964, %v3175
        %v3177 = vpop.f32.mrb[0].mxu0
        %v3178 = vadd.f32 %v2968, %v3177
        %v3179 = vpop.f32.mrb[0].mxu0
        %v3180 = vadd.f32 %v2964, %v3179
        %v3181 = vpop.f32.mrb[0].mxu0
        %v3182 = vadd.f32 %v2968, %v3181
        %3183 = vmatprep.mubr.bf16.mxu0 0
        %3184 = vmatmul.mubr.bf16.gmra.mrb[0].mxu0 %v2937
        %v3185 = vpop.f32.mrb[0].mxu0
        %v3186 = vadd.f32 %v2964, %v3185
        %v3187 = vpop.f32.mrb[0].mxu0
        %v3188 = vadd.f32 %v2968, %v3187
        %v3189 = vpop.f32.mrb[0].mxu0
        %v3190 = vadd.f32 %v2964, %v3189
        %v3191 = vpop.f32.mrb[0].mxu0
        %v3192 = vadd.f32 %v2968, %v3191
        %3193 = vmatprep.mubr.bf16.mxu0 0
        %3194 = vmatmul.mubr.bf16.gmra.mrb[0].mxu0 %v2938
        %v3195 = vpop.f32.mrb[0].mxu0
        %v3196 = vadd.f32 %v2964, %v3195
        %v3197 = vpop.f32.mrb[0].mxu0
        %v3198 = vadd.f32 %v2968, %v3197
        %v3199 = vpop.f32.mrb[0].mxu0
        %v3200 = vadd.f32 %v2964, %v3199
        %v3201 = vpop.f32.mrb[0].mxu0
        %v3202 = vadd.f32 %v2968, %v3201
        %3203 = vmatprep.mubr.bf16.mxu0 0
        %3204 = vmatmul.mubr.bf16.gmra.mrb[0].mxu0 %v2939
        %v3205 = vpop.f32.mrb[0].mxu0
        %v3206 = vadd.f32 %v2964, %v3205
        %v3207 = vpop.f32.mrb[0].mxu0
        %v3208 = vadd.f32 %v2968, %v3207
        %v3209 = vpop.f32.mrb[0].mxu0
        %v3210 = vadd.f32 %v2964, %v3209
        %v3211 = vpop.f32.mrb[0].mxu0
        %v3212 = vadd.f32 %v2968, %v3211
        %3213 = vmatprep.mubr.bf16.mxu0 0
        %3214 = vmatmul.mubr.bf16.gmra.mrb[0].mxu0 %v2940
        %v3215 = vpop.f32.mrb[0].mxu0
        %v3216 = vadd.f32 %v2964, %v3215
        %v3217 = vpop.f32.mrb[0].mxu0
        %v3218 = vadd.f32 %v2968, %v3217
        %v3219 = vpop.f32.mrb[0].mxu0
        %v3220 = vadd.f32 %v2964, %v3219
        %v3221 = vpop.f32.mrb[0].mxu0
        %v3222 = vadd.f32 %v2968, %v3221
        %3223 = vmatprep.mubr.bf16.mxu0 0
        %3224 = vmatmul.mubr.bf16.gmra.mrb[0].mxu0 %v2941
        %v3225 = vpop.f32.mrb[0].mxu0
        %v3226 = vadd.f32 %v2964, %v3225
        %v3227 = vpop.f32.mrb[0].mxu0
        %v3228 = vadd.f32 %v2968, %v3227
        %v3229 = vpop.f32.mrb[0].mxu0
        %v3230 = vadd.f32 %v2964, %v3229
        %v3231 = vpop.f32.mrb[0].mxu0
        %v3232 = vadd.f32 %v2968, %v3231
        %3233 = vmatprep.mubr.bf16.mxu0 0
        %3234 = vmatmul.mubr.bf16.gmra.mrb[0].mxu0 %v2942
        %v3235 = vpop.f32.mrb[0].mxu0
        %v3236 = vadd.f32 %v2964, %v3235
        %v3237 = vpop.f32.mrb[0].mxu0
        %v3238 = vadd.f32 %v2968, %v3237
        %v3239 = vpop.f32.mrb[0].mxu0
        %v3240 = vadd.f32 %v2964, %v3239
        %v3241 = vpop.f32.mrb[0].mxu0
        %v3242 = vadd.f32 %v2968, %v3241
        %3243 = vdwg.mxu0
        %v3244 = vmul.f32 %v3086, 0.5
        %v3245 = vmul.f32 %v3088, 0.5
        %v3246 = vmul.f32 %v3090, 0.5
        %v3247 = vmul.f32 %v3092, 0.5
        %v3248 = vmul.f32 %v3096, 0.5
        %v3249 = vmul.f32 %v3098, 0.5
        %v3250 = vmul.f32 %v3100, 0.5
        %v3251 = vmul.f32 %v3102, 0.5
        %v3252 = vmul.f32 %v3106, 0.5
        %v3253 = vmul.f32 %v3108, 0.5
        %v3254 = vmul.f32 %v3110, 0.5
        %v3255 = vmul.f32 %v3112, 0.5
        %v3256 = vmul.f32 %v3116, 0.5
        %v3257 = vmul.f32 %v3118, 0.5
        %v3258 = vmul.f32 %v3120, 0.5
        %v3259 = vmul.f32 %v3122, 0.5
        %v3260 = vmul.f32 %v3126, 0.5
        %v3261 = vmul.f32 %v3128, 0.5
        %v3262 = vmul.f32 %v3130, 0.5
        %v3263 = vmul.f32 %v3132, 0.5
        %v3264 = vmul.f32 %v3136, 0.5
        %v3265 = vmul.f32 %v3138, 0.5
        %v3266 = vmul.f32 %v3140, 0.5
        %v3267 = vmul.f32 %v3142, 0.5
        %v3268 = vmul.f32 %v3146, 0.5
        %v3269 = vmul.f32 %v3148, 0.5
        %v3270 = vmul.f32 %v3150, 0.5
        %v3271 = vmul.f32 %v3152, 0.5
        %v3272 = vmul.f32 %v3156, 0.5
        %v3273 = vmul.f32 %v3158, 0.5
        %v3274 = vmul.f32 %v3160, 0.5
        %v3275 = vmul.f32 %v3162, 0.5
        %v3276 = vmul.f32 %v3166, 0.5
        %v3277 = vmul.f32 %v3168, 0.5
        %v3278 = vmul.f32 %v3170, 0.5
        %v3279 = vmul.f32 %v3172, 0.5
        %v3280 = vmul.f32 %v3176, 0.5
        %v3281 = vmul.f32 %v3178, 0.5
        %v3282 = vmul.f32 %v3180, 0.5
        %v3283 = vmul.f32 %v3182, 0.5
        %v3284 = vmul.f32 %v3186, 0.5
        %v3285 = vmul.f32 %v3188, 0.5
        %v3286 = vmul.f32 %v3190, 0.5
        %v3287 = vmul.f32 %v3192, 0.5
        %v3288 = vmul.f32 %v3196, 0.5
        %v3289 = vmul.f32 %v3198, 0.5
        %v3290 = vmul.f32 %v3200, 0.5
        %v3291 = vmul.f32 %v3202, 0.5
        %v3292 = vmul.f32 %v3206, 0.5
        %v3293 = vmul.f32 %v3208, 0.5
        %v3294 = vmul.f32 %v3210, 0.5
        %v3295 = vmul.f32 %v3212, 0.5
        %v3296 = vmul.f32 %v3216, 0.5
        %v3297 = vmul.f32 %v3218, 0.5
        %v3298 = vmul.f32 %v3220, 0.5
        %v3299 = vmul.f32 %v3222, 0.5
        %v3300 = vmul.f32 %v3226, 0.5
        %v3301 = vmul.f32 %v3228, 0.5
        %v3302 = vmul.f32 %v3230, 0.5
        %v3303 = vmul.f32 %v3232, 0.5
        %v3304 = vmul.f32 %v3236, 0.5
        %v3305 = vmul.f32 %v3238, 0.5
        %v3306 = vmul.f32 %v3240, 0.5
        %v3307 = vmul.f32 %v3242, 0.5
        %v3308 = vmul.f32 %v3086, 0.044715
        %v3309 = vmul.f32 %v3088, 0.044715
        %v3310 = vmul.f32 %v3090, 0.044715
        %v3311 = vmul.f32 %v3092, 0.044715
        %v3312 = vmul.f32 %v3096, 0.044715
        %v3313 = vmul.f32 %v3098, 0.044715
        %v3314 = vmul.f32 %v3100, 0.044715
        %v3315 = vmul.f32 %v3102, 0.044715
        %v3316 = vmul.f32 %v3106, 0.044715
        %v3317 = vmul.f32 %v3108, 0.044715
        %v3318 = vmul.f32 %v3110, 0.044715
        %v3319 = vmul.f32 %v3112, 0.044715
        %v3320 = vmul.f32 %v3116, 0.044715
        %v3321 = vmul.f32 %v3118, 0.044715
        %v3322 = vmul.f32 %v3120, 0.044715
        %v3323 = vmul.f32 %v3122, 0.044715
        %v3324 = vmul.f32 %v3126, 0.044715
        %v3325 = vmul.f32 %v3128, 0.044715
        %v3326 = vmul.f32 %v3130, 0.044715
        %v3327 = vmul.f32 %v3132, 0.044715
        %v3328 = vmul.f32 %v3136, 0.044715
        %v3329 = vmul.f32 %v3138, 0.044715
        %v3330 = vmul.f32 %v3140, 0.044715
        %v3331 = vmul.f32 %v3142, 0.044715
        %v3332 = vmul.f32 %v3146, 0.044715
        %v3333 = vmul.f32 %v3148, 0.044715
        %v3334 = vmul.f32 %v3150, 0.044715
        %v3335 = vmul.f32 %v3152, 0.044715
        %v3336 = vmul.f32 %v3156, 0.044715
        %v3337 = vmul.f32 %v3158, 0.044715
        %v3338 = vmul.f32 %v3160, 0.044715
        %v3339 = vmul.f32 %v3162, 0.044715
        %v3340 = vmul.f32 %v3166, 0.044715
        %v3341 = vmul.f32 %v3168, 0.044715
        %v3342 = vmul.f32 %v3170, 0.044715
        %v3343 = vmul.f32 %v3172, 0.044715
        %v3344 = vmul.f32 %v3176, 0.044715
        %v3345 = vmul.f32 %v3178, 0.044715
        %v3346 = vmul.f32 %v3180, 0.044715
        %v3347 = vmul.f32 %v3182, 0.044715
        %v3348 = vmul.f32 %v3186, 0.044715
        %v3349 = vmul.f32 %v3188, 0.044715
        %v3350 = vmul.f32 %v3190, 0.044715
        %v3351 = vmul.f32 %v3192, 0.044715
        %v3352 = vmul.f32 %v3196, 0.044715
        %v3353 = vmul.f32 %v3198, 0.044715
        %v3354 = vmul.f32 %v3200, 0.044715
        %v3355 = vmul.f32 %v3202, 0.044715
        %v3356 = vmul.f32 %v3206, 0.044715
        %v3357 = vmul.f32 %v3208, 0.044715
        %v3358 = vmul.f32 %v3210, 0.044715
        %v3359 = vmul.f32 %v3212, 0.044715
        %v3360 = vmul.f32 %v3216, 0.044715
        %v3361 = vmul.f32 %v3218, 0.044715
        %v3362 = vmul.f32 %v3220, 0.044715
        %v3363 = vmul.f32 %v3222, 0.044715
        %v3364 = vmul.f32 %v3226, 0.044715
        %v3365 = vmul.f32 %v3228, 0.044715
        %v3366 = vmul.f32 %v3230, 0.044715
        %v3367 = vmul.f32 %v3232, 0.044715
        %v3368 = vmul.f32 %v3236, 0.044715
        %v3369 = vmul.f32 %v3238, 0.044715
        %v3370 = vmul.f32 %v3240, 0.044715
        %v3371 = vmul.f32 %v3242, 0.044715
        %v3372 = vmul.f32 %v3308, %v3086
        %v3373 = vmul.f32 %v3309, %v3088
        %v3374 = vmul.f32 %v3310, %v3090
        %v3375 = vmul.f32 %v3311, %v3092
        %v3376 = vmul.f32 %v3312, %v3096
        %v3377 = vmul.f32 %v3313, %v3098
        %v3378 = vmul.f32 %v3314, %v3100
        %v3379 = vmul.f32 %v3315, %v3102
        %v3380 = vmul.f32 %v3316, %v3106
        %v3381 = vmul.f32 %v3317, %v3108
        %v3382 = vmul.f32 %v3318, %v3110
        %v3383 = vmul.f32 %v3319, %v3112
        %v3384 = vmul.f32 %v3320, %v3116
        %v3385 = vmul.f32 %v3321, %v3118
        %v3386 = vmul.f32 %v3322, %v3120
        %v3387 = vmul.f32 %v3323, %v3122
        %v3388 = vmul.f32 %v3324, %v3126
        %v3389 = vmul.f32 %v3325, %v3128
        %v3390 = vmul.f32 %v3326, %v3130
        %v3391 = vmul.f32 %v3327, %v3132
        %v3392 = vmul.f32 %v3328, %v3136
        %v3393 = vmul.f32 %v3329, %v3138
        %v3394 = vmul.f32 %v3330, %v3140
        %v3395 = vmul.f32 %v3331, %v3142
        %v3396 = vmul.f32 %v3332, %v3146
        %v3397 = vmul.f32 %v3333, %v3148
        %v3398 = vmul.f32 %v3334, %v3150
        %v3399 = vmul.f32 %v3335, %v3152
        %v3400 = vmul.f32 %v3336, %v3156
        %v3401 = vmul.f32 %v3337, %v3158
        %v3402 = vmul.f32 %v3338, %v3160
        %v3403 = vmul.f32 %v3339, %v3162
        %v3404 = vmul.f32 %v3340, %v3166
        %v3405 = vmul.f32 %v3341, %v3168
        %v3406 = vmul.f32 %v3342, %v3170
        %v3407 = vmul.f32 %v3343, %v3172
        %v3408 = vmul.f32 %v3344, %v3176
        %v3409 = vmul.f32 %v3345, %v3178
        %v3410 = vmul.f32 %v3346, %v3180
        %v3411 = vmul.f32 %v3347, %v3182
        %v3412 = vmul.f32 %v3348, %v3186
        %v3413 = vmul.f32 %v3349, %v3188
        %v3414 = vmul.f32 %v3350, %v3190
        %v3415 = vmul.f32 %v3351, %v3192
        %v3416 = vmul.f32 %v3352, %v3196
        %v3417 = vmul.f32 %v3353, %v3198
        %v3418 = vmul.f32 %v3354, %v3200
        %v3419 = vmul.f32 %v3355, %v3202
        %v3420 = vmul.f32 %v3356, %v3206
        %v3421 = vmul.f32 %v3357, %v3208
        %v3422 = vmul.f32 %v3358, %v3210
        %v3423 = vmul.f32 %v3359, %v3212
        %v3424 = vmul.f32 %v3360, %v3216
        %v3425 = vmul.f32 %v3361, %v3218
        %v3426 = vmul.f32 %v3362, %v3220
        %v3427 = vmul.f32 %v3363, %v3222
        %v3428 = vmul.f32 %v3364, %v3226
        %v3429 = vmul.f32 %v3365, %v3228
        %v3430 = vmul.f32 %v3366, %v3230
        %v3431 = vmul.f32 %v3367, %v3232
        %v3432 = vmul.f32 %v3368, %v3236
        %v3433 = vmul.f32 %v3369, %v3238
        %v3434 = vmul.f32 %v3370, %v3240
        %v3435 = vmul.f32 %v3371, %v3242
        %v3436 = vmul.f32 %v3372, %v3086
        %v3437 = vmul.f32 %v3373, %v3088
        %v3438 = vmul.f32 %v3374, %v3090
        %v3439 = vmul.f32 %v3375, %v3092
        %v3440 = vmul.f32 %v3376, %v3096
        %v3441 = vmul.f32 %v3377, %v3098
        %v3442 = vmul.f32 %v3378, %v3100
        %v3443 = vmul.f32 %v3379, %v3102
        %v3444 = vmul.f32 %v3380, %v3106
        %v3445 = vmul.f32 %v3381, %v3108
        %v3446 = vmul.f32 %v3382, %v3110
        %v3447 = vmul.f32 %v3383, %v3112
        %v3448 = vmul.f32 %v3384, %v3116
        %v3449 = vmul.f32 %v3385, %v3118
        %v3450 = vmul.f32 %v3386, %v3120
        %v3451 = vmul.f32 %v3387, %v3122
        %v3452 = vmul.f32 %v3388, %v3126
        %v3453 = vmul.f32 %v3389, %v3128
        %v3454 = vmul.f32 %v3390, %v3130
        %v3455 = vmul.f32 %v3391, %v3132
        %v3456 = vmul.f32 %v3392, %v3136
        %v3457 = vmul.f32 %v3393, %v3138
        %v3458 = vmul.f32 %v3394, %v3140
        %v3459 = vmul.f32 %v3395, %v3142
        %v3460 = vmul.f32 %v3396, %v3146
        %v3461 = vmul.f32 %v3397, %v3148
        %v3462 = vmul.f32 %v3398, %v3150
        %v3463 = vmul.f32 %v3399, %v3152
        %v3464 = vmul.f32 %v3400, %v3156
        %v3465 = vmul.f32 %v3401, %v3158
        %v3466 = vmul.f32 %v3402, %v3160
        %v3467 = vmul.f32 %v3403, %v3162
        %v3468 = vmul.f32 %v3404, %v3166
        %v3469 = vmul.f32 %v3405, %v3168
        %v3470 = vmul.f32 %v3406, %v3170
        %v3471 = vmul.f32 %v3407, %v3172
        %v3472 = vmul.f32 %v3408, %v3176
        %v3473 = vmul.f32 %v3409, %v3178
        %v3474 = vmul.f32 %v3410, %v3180
        %v3475 = vmul.f32 %v3411, %v3182
        %v3476 = vmul.f32 %v3412, %v3186
        %v3477 = vmul.f32 %v3413, %v3188
        %v3478 = vmul.f32 %v3414, %v3190
        %v3479 = vmul.f32 %v3415, %v3192
        %v3480 = vmul.f32 %v3416, %v3196
        %v3481 = vmul.f32 %v3417, %v3198
        %v3482 = vmul.f32 %v3418, %v3200
        %v3483 = vmul.f32 %v3419, %v3202
        %v3484 = vmul.f32 %v3420, %v3206
        %v3485 = vmul.f32 %v3421, %v3208
        %v3486 = vmul.f32 %v3422, %v3210
        %v3487 = vmul.f32 %v3423, %v3212
        %v3488 = vmul.f32 %v3424, %v3216
        %v3489 = vmul.f32 %v3425, %v3218
        %v3490 = vmul.f32 %v3426, %v3220
        %v3491 = vmul.f32 %v3427, %v3222
        %v3492 = vmul.f32 %v3428, %v3226
        %v3493 = vmul.f32 %v3429, %v3228
        %v3494 = vmul.f32 %v3430, %v3230
        %v3495 = vmul.f32 %v3431, %v3232
        %v3496 = vmul.f32 %v3432, %v3236
        %v3497 = vmul.f32 %v3433, %v3238
        %v3498 = vmul.f32 %v3434, %v3240
        %v3499 = vmul.f32 %v3435, %v3242
        %v3500 = vadd.f32 %v3086, %v3436
        %v3501 = vadd.f32 %v3088, %v3437
        %v3502 = vadd.f32 %v3090, %v3438
        %v3503 = vadd.f32 %v3092, %v3439
        %v3504 = vadd.f32 %v3096, %v3440
        %v3505 = vadd.f32 %v3098, %v3441
        %v3506 = vadd.f32 %v3100, %v3442
        %v3507 = vadd.f32 %v3102, %v3443
        %v3508 = vadd.f32 %v3106, %v3444
        %v3509 = vadd.f32 %v3108, %v3445
        %v3510 = vadd.f32 %v3110, %v3446
        %v3511 = vadd.f32 %v3112, %v3447
        %v3512 = vadd.f32 %v3116, %v3448
        %v3513 = vadd.f32 %v3118, %v3449
        %v3514 = vadd.f32 %v3120, %v3450
        %v3515 = vadd.f32 %v3122, %v3451
        %v3516 = vadd.f32 %v3126, %v3452
        %v3517 = vadd.f32 %v3128, %v3453
        %v3518 = vadd.f32 %v3130, %v3454
        %v3519 = vadd.f32 %v3132, %v3455
        %v3520 = vadd.f32 %v3136, %v3456
        %v3521 = vadd.f32 %v3138, %v3457
        %v3522 = vadd.f32 %v3140, %v3458
        %v3523 = vadd.f32 %v3142, %v3459
        %v3524 = vadd.f32 %v3146, %v3460
        %v3525 = vadd.f32 %v3148, %v3461
        %v3526 = vadd.f32 %v3150, %v3462
        %v3527 = vadd.f32 %v3152, %v3463
        %v3528 = vadd.f32 %v3156, %v3464
        %v3529 = vadd.f32 %v3158, %v3465
        %v3530 = vadd.f32 %v3160, %v3466
        %v3531 = vadd.f32 %v3162, %v3467
        %v3532 = vadd.f32 %v3166, %v3468
        %v3533 = vadd.f32 %v3168, %v3469
        %v3534 = vadd.f32 %v3170, %v3470
        %v3535 = vadd.f32 %v3172, %v3471
        %v3536 = vadd.f32 %v3176, %v3472
        %v3537 = vadd.f32 %v3178, %v3473
        %v3538 = vadd.f32 %v3180, %v3474
        %v3539 = vadd.f32 %v3182, %v3475
        %v3540 = vadd.f32 %v3186, %v3476
        %v3541 = vadd.f32 %v3188, %v3477
        %v3542 = vadd.f32 %v3190, %v3478
        %v3543 = vadd.f32 %v3192, %v3479
        %v3544 = vadd.f32 %v3196, %v3480
        %v3545 = vadd.f32 %v3198, %v3481
        %v3546 = vadd.f32 %v3200, %v3482
        %v3547 = vadd.f32 %v3202, %v3483
        %v3548 = vadd.f32 %v3206, %v3484
        %v3549 = vadd.f32 %v3208, %v3485
        %v3550 = vadd.f32 %v3210, %v3486
        %v3551 = vadd.f32 %v3212, %v3487
        %v3552 = vadd.f32 %v3216, %v3488
        %v3553 = vadd.f32 %v3218, %v3489
        %v3554 = vadd.f32 %v3220, %v3490
        %v3555 = vadd.f32 %v3222, %v3491
        %v3556 = vadd.f32 %v3226, %v3492
        %v3557 = vadd.f32 %v3228, %v3493
        %v3558 = vadd.f32 %v3230, %v3494
        %v3559 = vadd.f32 %v3232, %v3495
        %v3560 = vadd.f32 %v3236, %v3496
        %v3561 = vadd.f32 %v3238, %v3497
        %v3562 = vadd.f32 %v3240, %v3498
        %v3563 = vadd.f32 %v3242, %v3499
        %v3564 = vmul.f32 %v3500, 0.7978846
        %v3565 = vmul.f32 %v3501, 0.7978846
        %v3566 = vmul.f32 %v3502, 0.7978846
        %v3567 = vmul.f32 %v3503, 0.7978846
        %v3568 = vmul.f32 %v3504, 0.7978846
        %v3569 = vmul.f32 %v3505, 0.7978846
        %v3570 = vmul.f32 %v3506, 0.7978846
        %v3571 = vmul.f32 %v3507, 0.7978846
        %v3572 = vmul.f32 %v3508, 0.7978846
        %v3573 = vmul.f32 %v3509, 0.7978846
        %v3574 = vmul.f32 %v3510, 0.7978846
        %v3575 = vmul.f32 %v3511, 0.7978846
        %v3576 = vmul.f32 %v3512, 0.7978846
        %v3577 = vmul.f32 %v3513, 0.7978846
        %v3578 = vmul.f32 %v3514, 0.7978846
        %v3579 = vmul.f32 %v3515, 0.7978846
        %v3580 = vmul.f32 %v3516, 0.7978846
        %v3581 = vmul.f32 %v3517, 0.7978846
        %v3582 = vmul.f32 %v3518, 0.7978846
        %v3583 = vmul.f32 %v3519, 0.7978846
        %v3584 = vmul.f32 %v3520, 0.7978846
        %v3585 = vmul.f32 %v3521, 0.7978846
        %v3586 = vmul.f32 %v3522, 0.7978846
        %v3587 = vmul.f32 %v3523, 0.7978846
        %v3588 = vmul.f32 %v3524, 0.7978846
        %v3589 = vmul.f32 %v3525, 0.7978846
        %v3590 = vmul.f32 %v3526, 0.7978846
        %v3591 = vmul.f32 %v3527, 0.7978846
        %v3592 = vmul.f32 %v3528, 0.7978846
        %v3593 = vmul.f32 %v3529, 0.7978846
        %v3594 = vmul.f32 %v3530, 0.7978846
        %v3595 = vmul.f32 %v3531, 0.7978846
        %v3596 = vmul.f32 %v3532, 0.7978846
        %v3597 = vmul.f32 %v3533, 0.7978846
        %v3598 = vmul.f32 %v3534, 0.7978846
        %v3599 = vmul.f32 %v3535, 0.7978846
        %v3600 = vmul.f32 %v3536, 0.7978846
        %v3601 = vmul.f32 %v3537, 0.7978846
        %v3602 = vmul.f32 %v3538, 0.7978846
        %v3603 = vmul.f32 %v3539, 0.7978846
        %v3604 = vmul.f32 %v3540, 0.7978846
        %v3605 = vmul.f32 %v3541, 0.7978846
        %v3606 = vmul.f32 %v3542, 0.7978846
        %v3607 = vmul.f32 %v3543, 0.7978846
        %v3608 = vmul.f32 %v3544, 0.7978846
        %v3609 = vmul.f32 %v3545, 0.7978846
        %v3610 = vmul.f32 %v3546, 0.7978846
        %v3611 = vmul.f32 %v3547, 0.7978846
        %v3612 = vmul.f32 %v3548, 0.7978846
        %v3613 = vmul.f32 %v3549, 0.7978846
        %v3614 = vmul.f32 %v3550, 0.7978846
        %v3615 = vmul.f32 %v3551, 0.7978846
        %v3616 = vmul.f32 %v3552, 0.7978846
        %v3617 = vmul.f32 %v3553, 0.7978846
        %v3618 = vmul.f32 %v3554, 0.7978846
        %v3619 = vmul.f32 %v3555, 0.7978846
        %v3620 = vmul.f32 %v3556, 0.7978846
        %v3621 = vmul.f32 %v3557, 0.7978846
        %v3622 = vmul.f32 %v3558, 0.7978846
        %v3623 = vmul.f32 %v3559, 0.7978846
        %v3624 = vmul.f32 %v3560, 0.7978846
        %v3625 = vmul.f32 %v3561, 0.7978846
        %v3626 = vmul.f32 %v3562, 0.7978846
        %v3627 = vmul.f32 %v3563, 0.7978846
        %v3628 = vtanh.pop %v3564
        %v3629 = vtanh.pop %v3565
        %v3630 = vtanh.pop %v3566
        %v3631 = vtanh.pop %v3567
        %v3632 = vtanh.pop %v3568
        %v3633 = vtanh.pop %v3569
        %v3634 = vtanh.pop %v3570
        %v3635 = vtanh.pop %v3571
        %v3636 = vtanh.pop %v3572
        %v3637 = vtanh.pop %v3573
        %v3638 = vtanh.pop %v3574
        %v3639 = vtanh.pop %v3575
        %v3640 = vtanh.pop %v3576
        %v3641 = vtanh.pop %v3577
        %v3642 = vtanh.pop %v3578
        %v3643 = vtanh.pop %v3579
        %v3644 = vtanh.pop %v3580
        %v3645 = vtanh.pop %v3581
        %v3646 = vtanh.pop %v3582
        %v3647 = vtanh.pop %v3583
        %v3648 = vtanh.pop %v3584
        %v3649 = vtanh.pop %v3585
        %v3650 = vtanh.pop %v3586
        %v3651 = vtanh.pop %v3587
        %v3652 = vtanh.pop %v3588
        %v3653 = vtanh.pop %v3589
        %v3654 = vtanh.pop %v3590
        %v3655 = vtanh.pop %v3591
        %v3656 = vtanh.pop %v3592
        %v3657 = vtanh.pop %v3593
        %v3658 = vtanh.pop %v3594
        %v3659 = vtanh.pop %v3595
        %v3660 = vtanh.pop %v3596
        %v3661 = vtanh.pop %v3597
        %v3662 = vtanh.pop %v3598
        %v3663 = vtanh.pop %v3599
        %v3664 = vtanh.pop %v3600
        %v3665 = vtanh.pop %v3601
        %v3666 = vtanh.pop %v3602
        %v3667 = vtanh.pop %v3603
        %v3668 = vtanh.pop %v3604
        %v3669 = vtanh.pop %v3605
        %v3670 = vtanh.pop %v3606
        %v3671 = vtanh.pop %v3607
        %v3672 = vtanh.pop %v3608
        %v3673 = vtanh.pop %v3609
        %v3674 = vtanh.pop %v3610
        %v3675 = vtanh.pop %v3611
        %v3676 = vtanh.pop %v3612
        %v3677 = vtanh.pop %v3613
        %v3678 = vtanh.pop %v3614
        %v3679 = vtanh.pop %v3615
        %v3680 = vtanh.pop %v3616
        %v3681 = vtanh.pop %v3617
        %v3682 = vtanh.pop %v3618
        %v3683 = vtanh.pop %v3619
        %v3684 = vtanh.pop %v3620
        %v3685 = vtanh.pop %v3621
        %v3686 = vtanh.pop %v3622
        %v3687 = vtanh.pop %v3623
        %v3688 = vtanh.pop %v3624
        %v3689 = vtanh.pop %v3625
        %v3690 = vtanh.pop %v3626
        %v3691 = vtanh.pop %v3627
        %v3692 = vadd.f32 %v3628, 1.0
        %v3693 = vadd.f32 %v3629, 1.0
        %v3694 = vadd.f32 %v3630, 1.0
        %v3695 = vadd.f32 %v3631, 1.0
        %v3696 = vadd.f32 %v3632, 1.0
        %v3697 = vadd.f32 %v3633, 1.0
        %v3698 = vadd.f32 %v3634, 1.0
        %v3699 = vadd.f32 %v3635, 1.0
        %v3700 = vadd.f32 %v3636, 1.0
        %v3701 = vadd.f32 %v3637, 1.0
        %v3702 = vadd.f32 %v3638, 1.0
        %v3703 = vadd.f32 %v3639, 1.0
        %v3704 = vadd.f32 %v3640, 1.0
        %v3705 = vadd.f32 %v3641, 1.0
        %v3706 = vadd.f32 %v3642, 1.0
        %v3707 = vadd.f32 %v3643, 1.0
        %v3708 = vadd.f32 %v3644, 1.0
        %v3709 = vadd.f32 %v3645, 1.0
        %v3710 = vadd.f32 %v3646, 1.0
        %v3711 = vadd.f32 %v3647, 1.0
        %v3712 = vadd.f32 %v3648, 1.0
        %v3713 = vadd.f32 %v3649, 1.0
        %v3714 = vadd.f32 %v3650, 1.0
        %v3715 = vadd.f32 %v3651, 1.0
        %v3716 = vadd.f32 %v3652, 1.0
        %v3717 = vadd.f32 %v3653, 1.0
        %v3718 = vadd.f32 %v3654, 1.0
        %v3719 = vadd.f32 %v3655, 1.0
        %v3720 = vadd.f32 %v3656, 1.0
        %v3721 = vadd.f32 %v3657, 1.0
        %v3722 = vadd.f32 %v3658, 1.0
        %v3723 = vadd.f32 %v3659, 1.0
        %v3724 = vadd.f32 %v3660, 1.0
        %v3725 = vadd.f32 %v3661, 1.0
        %v3726 = vadd.f32 %v3662, 1.0
        %v3727 = vadd.f32 %v3663, 1.0
        %v3728 = vadd.f32 %v3664, 1.0
        %v3729 = vadd.f32 %v3665, 1.0
        %v3730 = vadd.f32 %v3666, 1.0
        %v3731 = vadd.f32 %v3667, 1.0
        %v3732 = vadd.f32 %v3668, 1.0
        %v3733 = vadd.f32 %v3669, 1.0
        %v3734 = vadd.f32 %v3670, 1.0
        %v3735 = vadd.f32 %v3671, 1.0
        %v3736 = vadd.f32 %v3672, 1.0
        %v3737 = vadd.f32 %v3673, 1.0
        %v3738 = vadd.f32 %v3674, 1.0
        %v3739 = vadd.f32 %v3675, 1.0
        %v3740 = vadd.f32 %v3676, 1.0
        %v3741 = vadd.f32 %v3677, 1.0
        %v3742 = vadd.f32 %v3678, 1.0
        %v3743 = vadd.f32 %v3679, 1.0
        %v3744 = vadd.f32 %v3680, 1.0
        %v3745 = vadd.f32 %v3681, 1.0
        %v3746 = vadd.f32 %v3682, 1.0
        %v3747 = vadd.f32 %v3683, 1.0
        %v3748 = vadd.f32 %v3684, 1.0
        %v3749 = vadd.f32 %v3685, 1.0
        %v3750 = vadd.f32 %v3686, 1.0
        %v3751 = vadd.f32 %v3687, 1.0
        %v3752 = vadd.f32 %v3688, 1.0
        %v3753 = vadd.f32 %v3689, 1.0
        %v3754 = vadd.f32 %v3690, 1.0
        %v3755 = vadd.f32 %v3691, 1.0
        %v3756 = vmul.f32 %v3244, %v3692
        %v3757 = vmul.f32 %v3245, %v3693
        %v3758 = vmul.f32 %v3246, %v3694
        %v3759 = vmul.f32 %v3247, %v3695
        %v3760 = vmul.f32 %v3248, %v3696
        %v3761 = vmul.f32 %v3249, %v3697
        %v3762 = vmul.f32 %v3250, %v3698
        %v3763 = vmul.f32 %v3251, %v3699
        %v3764 = vmul.f32 %v3252, %v3700
        %v3765 = vmul.f32 %v3253, %v3701
        %v3766 = vmul.f32 %v3254, %v3702
        %v3767 = vmul.f32 %v3255, %v3703
        %v3768 = vmul.f32 %v3256, %v3704
        %v3769 = vmul.f32 %v3257, %v3705
        %v3770 = vmul.f32 %v3258, %v3706
        %v3771 = vmul.f32 %v3259, %v3707
        %v3772 = vmul.f32 %v3260, %v3708
        %v3773 = vmul.f32 %v3261, %v3709
        %v3774 = vmul.f32 %v3262, %v3710
        %v3775 = vmul.f32 %v3263, %v3711
        %v3776 = vmul.f32 %v3264, %v3712
        %v3777 = vmul.f32 %v3265, %v3713
        %v3778 = vmul.f32 %v3266, %v3714
        %v3779 = vmul.f32 %v3267, %v3715
        %v3780 = vmul.f32 %v3268, %v3716
        %v3781 = vmul.f32 %v3269, %v3717
        %v3782 = vmul.f32 %v3270, %v3718
        %v3783 = vmul.f32 %v3271, %v3719
        %v3784 = vmul.f32 %v3272, %v3720
        %v3785 = vmul.f32 %v3273, %v3721
        %v3786 = vmul.f32 %v3274, %v3722
        %v3787 = vmul.f32 %v3275, %v3723
        %v3788 = vmul.f32 %v3276, %v3724
        %v3789 = vmul.f32 %v3277, %v3725
        %v3790 = vmul.f32 %v3278, %v3726
        %v3791 = vmul.f32 %v3279, %v3727
        %v3792 = vmul.f32 %v3280, %v3728
        %v3793 = vmul.f32 %v3281, %v3729
        %v3794 = vmul.f32 %v3282, %v3730
        %v3795 = vmul.f32 %v3283, %v3731
        %v3796 = vmul.f32 %v3284, %v3732
        %v3797 = vmul.f32 %v3285, %v3733
        %v3798 = vmul.f32 %v3286, %v3734
        %v3799 = vmul.f32 %v3287, %v3735
        %v3800 = vmul.f32 %v3288, %v3736
        %v3801 = vmul.f32 %v3289, %v3737
        %v3802 = vmul.f32 %v3290, %v3738
        %v3803 = vmul.f32 %v3291, %v3739
        %v3804 = vmul.f32 %v3292, %v3740
        %v3805 = vmul.f32 %v3293, %v3741
        %v3806 = vmul.f32 %v3294, %v3742
        %v3807 = vmul.f32 %v3295, %v3743
        %v3808 = vmul.f32 %v3296, %v3744
        %v3809 = vmul.f32 %v3297, %v3745
        %v3810 = vmul.f32 %v3298, %v3746
        %v3811 = vmul.f32 %v3299, %v3747
        %v3812 = vmul.f32 %v3300, %v3748
        %v3813 = vmul.f32 %v3301, %v3749
        %v3814 = vmul.f32 %v3302, %v3750
        %v3815 = vmul.f32 %v3303, %v3751
        %v3816 = vmul.f32 %v3304, %v3752
        %v3817 = vmul.f32 %v3305, %v3753
        %v3818 = vmul.f32 %v3306, %v3754
        %v3819 = vmul.f32 %v3307, %v3755
        %v3820 = vpack.c.bf16 %v3758, %v3756
        %v3821 = vpack.c.bf16 %v3759, %v3757
        %v3822 = vpack.c.bf16 %v3762, %v3760
        %v3823 = vpack.c.bf16 %v3763, %v3761
        %v3824 = vpack.c.bf16 %v3766, %v3764
        %v3825 = vpack.c.bf16 %v3767, %v3765
        %v3826 = vpack.c.bf16 %v3770, %v3768
        %v3827 = vpack.c.bf16 %v3771, %v3769
        %v3828 = vpack.c.bf16 %v3774, %v3772
        %v3829 = vpack.c.bf16 %v3775, %v3773
        %v3830 = vpack.c.bf16 %v3778, %v3776
        %v3831 = vpack.c.bf16 %v3779, %v3777
        %v3832 = vpack.c.bf16 %v3782, %v3780
        %v3833 = vpack.c.bf16 %v3783, %v3781
        %v3834 = vpack.c.bf16 %v3786, %v3784
        %v3835 = vpack.c.bf16 %v3787, %v3785
        %v3836 = vpack.c.bf16 %v3790, %v3788
        %v3837 = vpack.c.bf16 %v3791, %v3789
        %v3838 = vpack.c.bf16 %v3794, %v3792
        %v3839 = vpack.c.bf16 %v3795, %v3793
        %v3840 = vpack.c.bf16 %v3798, %v3796
        %v3841 = vpack.c.bf16 %v3799, %v3797
        %v3842 = vpack.c.bf16 %v3802, %v3800
        %v3843 = vpack.c.bf16 %v3803, %v3801
        %v3844 = vpack.c.bf16 %v3806, %v3804
        %v3845 = vpack.c.bf16 %v3807, %v3805
        %v3846 = vpack.c.bf16 %v3810, %v3808
        %v3847 = vpack.c.bf16 %v3811, %v3809
        %v3848 = vpack.c.bf16 %v3814, %v3812
        %v3849 = vpack.c.bf16 %v3815, %v3813
        %v3850 = vpack.c.bf16 %v3818, %v3816
        %v3851 = vpack.c.bf16 %v3819, %v3817
        %v3852 = vld [vmem:[#allocation13] sm:$0xf]
        %v3853 = vld [vmem:[#allocation13 + $0x4] sm:$0xf]
        %v3854 = vld [vmem:[#allocation13 + $0x8] sm:$0xf]
        %v3855 = vld [vmem:[#allocation13 + $0xc] sm:$0xf]
        %v3856 = vld [vmem:[#allocation13 + $0x10] sm:$0xf]
        %v3857 = vld [vmem:[#allocation13 + $0x14] sm:$0xf]
        %v3858 = vld [vmem:[#allocation13 + $0x18] sm:$0xf]
        %v3859 = vld [vmem:[#allocation13 + $0x1c] sm:$0xf]
        %v3860 = vld [vmem:[#allocation13 + $0x20] sm:$0xf]
        %v3861 = vld [vmem:[#allocation13 + $0x24] sm:$0xf]
        %v3862 = vld [vmem:[#allocation13 + $0x28] sm:$0xf]
        %v3863 = vld [vmem:[#allocation13 + $0x2c] sm:$0xf]
        %v3864 = vld [vmem:[#allocation13 + $0x30] sm:$0xf]
        %v3865 = vld [vmem:[#allocation13 + $0x34] sm:$0xf]
        %v3866 = vld [vmem:[#allocation13 + $0x38] sm:$0xf]
        %v3867 = vld [vmem:[#allocation13 + $0x3c] sm:$0xf]
        %v3868 = vld [vmem:[#allocation13 + $0x40] sm:$0xf]
        %v3869 = vld [vmem:[#allocation13 + $0x44] sm:$0xf]
        %v3870 = vld [vmem:[#allocation13 + $0x48] sm:$0xf]
        %v3871 = vld [vmem:[#allocation13 + $0x4c] sm:$0xf]
        %v3872 = vld [vmem:[#allocation13 + $0x50] sm:$0xf]
        %v3873 = vld [vmem:[#allocation13 + $0x54] sm:$0xf]
        %v3874 = vld [vmem:[#allocation13 + $0x58] sm:$0xf]
        %v3875 = vld [vmem:[#allocation13 + $0x5c] sm:$0xf]
        %v3876 = vld [vmem:[#allocation13 + $0x60] sm:$0xf]
        %v3877 = vld [vmem:[#allocation13 + $0x64] sm:$0xf]
        %v3878 = vld [vmem:[#allocation13 + $0x68] sm:$0xf]
        %v3879 = vld [vmem:[#allocation13 + $0x6c] sm:$0xf]
        %v3880 = vld [vmem:[#allocation13 + $0x70] sm:$0xf]
        %v3881 = vld [vmem:[#allocation13 + $0x74] sm:$0xf]
        %v3882 = vld [vmem:[#allocation13 + $0x78] sm:$0xf]
        %v3883 = vld [vmem:[#allocation13 + $0x7c] sm:$0xf]
        %v3884 = vld [vmem:[#allocation11 + $0x8] sm:$0xff]
        %v3885 = vld [vmem:[#allocation11 + $0x18] sm:$0xff]
        %v3886 = vld [vmem:[#allocation11 + $0x28] sm:$0xff]
        %v3887 = vld [vmem:[#allocation11 + $0x38] sm:$0xff]
        %v3888 = vld [vmem:[#allocation11 + $0x48] sm:$0xff]
        %v3889 = vld [vmem:[#allocation11 + $0x58] sm:$0xff]
        %v3890 = vld [vmem:[#allocation11 + $0x68] sm:$0xff]
        %v3891 = vld [vmem:[#allocation11 + $0x78] sm:$0xff]
        %v3892 = vld [vmem:[#allocation11 + $0x88] sm:$0xff]
        %v3893 = vld [vmem:[#allocation11 + $0x98] sm:$0xff]
        %v3894 = vld [vmem:[#allocation11 + $0xa8] sm:$0xff]
        %v3895 = vld [vmem:[#allocation11 + $0xb8] sm:$0xff]
        %v3896 = vld [vmem:[#allocation11 + $0xc8] sm:$0xff]
        %v3897 = vld [vmem:[#allocation11 + $0xd8] sm:$0xff]
        %v3898 = vld [vmem:[#allocation11 + $0xe8] sm:$0xff]
        %v3899 = vld [vmem:[#allocation11 + $0xf8] sm:$0xff]
        %v3900 = vld [vmem:[%s10 + $0x2] sm:$0x3]
        %v3902 = vlaneseq
        %v3903 = vshrl.u32 %v3902, 7
        %v3904 = vsub.s32 0, %v3903
        %v3905 = vrot.slane %v3900, %v3904
        %v3906 = vlaneseq
        %v3907 = vshrl.u32 %v3906, 7
        %v3908 = vsub.s32 1, %v3907
        %v3909 = vrot.slane %v3900, %v3908
        %v3928 = vunpack.c.l.b16 %v3884
        %v3929 = vunpack.c.h.b16 %v3884
        %v3930 = vunpack.c.l.b16 %v3885
        %v3931 = vunpack.c.h.b16 %v3885
        %v3932 = vunpack.c.l.b16 %v3886
        %v3933 = vunpack.c.h.b16 %v3886
        %v3934 = vunpack.c.l.b16 %v3887
        %v3935 = vunpack.c.h.b16 %v3887
        %v3936 = vunpack.c.l.b16 %v3888
        %v3937 = vunpack.c.h.b16 %v3888
        %v3938 = vunpack.c.l.b16 %v3889
        %v3939 = vunpack.c.h.b16 %v3889
        %v3940 = vunpack.c.l.b16 %v3890
        %v3941 = vunpack.c.h.b16 %v3890
        %v3942 = vunpack.c.l.b16 %v3891
        %v3943 = vunpack.c.h.b16 %v3891
        %v3944 = vunpack.c.l.b16 %v3892
        %v3945 = vunpack.c.h.b16 %v3892
        %v3946 = vunpack.c.l.b16 %v3893
        %v3947 = vunpack.c.h.b16 %v3893
        %v3948 = vunpack.c.l.b16 %v3894
        %v3949 = vunpack.c.h.b16 %v3894
        %v3950 = vunpack.c.l.b16 %v3895
        %v3951 = vunpack.c.h.b16 %v3895
        %v3952 = vunpack.c.l.b16 %v3896
        %v3953 = vunpack.c.h.b16 %v3896
        %v3954 = vunpack.c.l.b16 %v3897
        %v3955 = vunpack.c.h.b16 %v3897
        %v3956 = vunpack.c.l.b16 %v3898
        %v3957 = vunpack.c.h.b16 %v3898
        %v3958 = vunpack.c.l.b16 %v3899
        %v3959 = vunpack.c.h.b16 %v3899
        %v3960 = vpack.c.b16 %v3930, %v3928
        %v3961 = vpack.c.b16 %v3931, %v3929
        %v3962 = vpack.c.b16 %v3934, %v3932
        %v3963 = vpack.c.b16 %v3935, %v3933
        %v3964 = vpack.c.b16 %v3938, %v3936
        %v3965 = vpack.c.b16 %v3939, %v3937
        %v3966 = vpack.c.b16 %v3942, %v3940
        %v3967 = vpack.c.b16 %v3943, %v3941
        %v3968 = vpack.c.b16 %v3946, %v3944
        %v3969 = vpack.c.b16 %v3947, %v3945
        %v3970 = vpack.c.b16 %v3950, %v3948
        %v3971 = vpack.c.b16 %v3951, %v3949
        %v3972 = vpack.c.b16 %v3954, %v3952
        %v3973 = vpack.c.b16 %v3955, %v3953
        %v3974 = vpack.c.b16 %v3958, %v3956
        %v3975 = vpack.c.b16 %v3959, %v3957
        %3992 = vmatprep.subr.bf16.mxu0 %v3961
        %3993 = vmatpush1.bf16.msra.mxu0 %v3960
        %3994 = vmatprep.subr.bf16.mxu0 %v3963
        %3995 = vmatpush1.bf16.msra.mxu0 %v3962
        %3996 = vmatprep.subr.bf16.mxu0 %v3965
        %3997 = vmatpush1.bf16.msra.mxu0 %v3964
        %3998 = vmatprep.subr.bf16.mxu0 %v3967
        %3999 = vmatpush1.bf16.msra.mxu0 %v3966
        %4000 = vmatprep.subr.bf16.mxu0 %v3969
        %4001 = vmatpush1.bf16.msra.mxu0 %v3968
        %4002 = vmatprep.subr.bf16.mxu0 %v3971
        %4003 = vmatpush1.bf16.msra.mxu0 %v3970
        %4004 = vmatprep.subr.bf16.mxu0 %v3973
        %4005 = vmatpush1.bf16.msra.mxu0 %v3972
        %4006 = vmatprep.subr.bf16.mxu0 %v3975
        %4007 = vmatpush1.bf16.msra.mxu0 %v3974
        %4008 = vmatprep.subr.bf16.mxu0 0
        %4009 = vmatpush1.bf16.msra.mxu0 0
        %4010 = vmatprep.subr.bf16.mxu0 0
        %4011 = vmatpush1.bf16.msra.mxu0 0
        %4012 = vmatprep.subr.bf16.mxu0 0
        %4013 = vmatpush1.bf16.msra.mxu0 0
        %4014 = vmatprep.subr.bf16.mxu0 0
        %4015 = vmatpush1.bf16.msra.mxu0 0
        %4016 = vmatprep.subr.bf16.mxu0 0
        %4017 = vmatpush1.bf16.msra.mxu0 0
        %4018 = vmatprep.subr.bf16.mxu0 0
        %4019 = vmatpush1.bf16.msra.mxu0 0
        %4020 = vmatprep.subr.bf16.mxu0 0
        %4021 = vmatpush1.bf16.msra.mxu0 0
        %4022 = vmatprep.subr.bf16.mxu0 0
        %4023 = vmatpush1.bf16.msra.mxu0 0
        %4024 = vmatprep.mubr.bf16.mxu0 0
        %4025 = vmatmul.mubr.bf16.gmra.mrb[0].mxu0 %v2927
        %v4026 = vpop.f32.mrb[0].mxu0
        %v4027 = vadd.f32 %v3905, %v4026
        %v4028 = vpop.f32.mrb[0].mxu0
        %v4029 = vadd.f32 %v3909, %v4028
        %v4030 = vpop.f32.mrb[0].mxu0
        %v4031 = vadd.f32 %v3905, %v4030
        %v4032 = vpop.f32.mrb[0].mxu0
        %v4033 = vadd.f32 %v3909, %v4032
        %4034 = vmatprep.mubr.bf16.mxu0 0
        %4035 = vmatmul.mubr.bf16.gmra.mrb[0].mxu0 %v2928
        %v4036 = vpop.f32.mrb[0].mxu0
        %v4037 = vadd.f32 %v3905, %v4036
        %v4038 = vpop.f32.mrb[0].mxu0
        %v4039 = vadd.f32 %v3909, %v4038
        %v4040 = vpop.f32.mrb[0].mxu0
        %v4041 = vadd.f32 %v3905, %v4040
        %v4042 = vpop.f32.mrb[0].mxu0
        %v4043 = vadd.f32 %v3909, %v4042
        %4044 = vmatprep.mubr.bf16.mxu0 0
        %4045 = vmatmul.mubr.bf16.gmra.mrb[0].mxu0 %v2929
        %v4046 = vpop.f32.mrb[0].mxu0
        %v4047 = vadd.f32 %v3905, %v4046
        %v4048 = vpop.f32.mrb[0].mxu0
        %v4049 = vadd.f32 %v3909, %v4048
        %v4050 = vpop.f32.mrb[0].mxu0
        %v4051 = vadd.f32 %v3905, %v4050
        %v4052 = vpop.f32.mrb[0].mxu0
        %v4053 = vadd.f32 %v3909, %v4052
        %4054 = vmatprep.mubr.bf16.mxu0 0
        %4055 = vmatmul.mubr.bf16.gmra.mrb[0].mxu0 %v2930
        %v4056 = vpop.f32.mrb[0].mxu0
        %v4057 = vadd.f32 %v3905, %v4056
        %v4058 = vpop.f32.mrb[0].mxu0
        %v4059 = vadd.f32 %v3909, %v4058
        %v4060 = vpop.f32.mrb[0].mxu0
        %v4061 = vadd.f32 %v3905, %v4060
        %v4062 = vpop.f32.mrb[0].mxu0
        %v4063 = vadd.f32 %v3909, %v4062
        %4064 = vmatprep.mubr.bf16.mxu0 0
        %4065 = vmatmul.mubr.bf16.gmra.mrb[0].mxu0 %v2931
        %v4066 = vpop.f32.mrb[0].mxu0
        %v4067 = vadd.f32 %v3905, %v4066
        %v4068 = vpop.f32.mrb[0].mxu0
        %v4069 = vadd.f32 %v3909, %v4068
        %v4070 = vpop.f32.mrb[0].mxu0
        %v4071 = vadd.f32 %v3905, %v4070
        %v4072 = vpop.f32.mrb[0].mxu0
        %v4073 = vadd.f32 %v3909, %v4072
        %4074 = vmatprep.mubr.bf16.mxu0 0
        %4075 = vmatmul.mubr.bf16.gmra.mrb[0].mxu0 %v2932
        %v4076 = vpop.f32.mrb[0].mxu0
        %v4077 = vadd.f32 %v3905, %v4076
        %v4078 = vpop.f32.mrb[0].mxu0
        %v4079 = vadd.f32 %v3909, %v4078
        %v4080 = vpop.f32.mrb[0].mxu0
        %v4081 = vadd.f32 %v3905, %v4080
        %v4082 = vpop.f32.mrb[0].mxu0
        %v4083 = vadd.f32 %v3909, %v4082
        %4084 = vmatprep.mubr.bf16.mxu0 0
        %4085 = vmatmul.mubr.bf16.gmra.mrb[0].mxu0 %v2933
        %v4086 = vpop.f32.mrb[0].mxu0
        %v4087 = vadd.f32 %v3905, %v4086
        %v4088 = vpop.f32.mrb[0].mxu0
        %v4089 = vadd.f32 %v3909, %v4088
        %v4090 = vpop.f32.mrb[0].mxu0
        %v4091 = vadd.f32 %v3905, %v4090
        %v4092 = vpop.f32.mrb[0].mxu0
        %v4093 = vadd.f32 %v3909, %v4092
        %4094 = vmatprep.mubr.bf16.mxu0 0
        %4095 = vmatmul.mubr.bf16.gmra.mrb[0].mxu0 %v2934
        %v4096 = vpop.f32.mrb[0].mxu0
        %v4097 = vadd.f32 %v3905, %v4096
        %v4098 = vpop.f32.mrb[0].mxu0
        %v4099 = vadd.f32 %v3909, %v4098
        %v4100 = vpop.f32.mrb[0].mxu0
        %v4101 = vadd.f32 %v3905, %v4100
        %v4102 = vpop.f32.mrb[0].mxu0
        %v4103 = vadd.f32 %v3909, %v4102
        %4104 = vmatprep.mubr.bf16.mxu0 0
        %4105 = vmatmul.mubr.bf16.gmra.mrb[0].mxu0 %v2935
        %v4106 = vpop.f32.mrb[0].mxu0
        %v4107 = vadd.f32 %v3905, %v4106
        %v4108 = vpop.f32.mrb[0].mxu0
        %v4109 = vadd.f32 %v3909, %v4108
        %v4110 = vpop.f32.mrb[0].mxu0
        %v4111 = vadd.f32 %v3905, %v4110
        %v4112 = vpop.f32.mrb[0].mxu0
        %v4113 = vadd.f32 %v3909, %v4112
        %4114 = vmatprep.mubr.bf16.mxu0 0
        %4115 = vmatmul.mubr.bf16.gmra.mrb[0].mxu0 %v2936
        %v4116 = vpop.f32.mrb[0].mxu0
        %v4117 = vadd.f32 %v3905, %v4116
        %v4118 = vpop.f32.mrb[0].mxu0
        %v4119 = vadd.f32 %v3909, %v4118
        %v4120 = vpop.f32.mrb[0].mxu0
        %v4121 = vadd.f32 %v3905, %v4120
        %v4122 = vpop.f32.mrb[0].mxu0
        %v4123 = vadd.f32 %v3909, %v4122
        %4124 = vmatprep.mubr.bf16.mxu0 0
        %4125 = vmatmul.mubr.bf16.gmra.mrb[0].mxu0 %v2937
        %v4126 = vpop.f32.mrb[0].mxu0
        %v4127 = vadd.f32 %v3905, %v4126
        %v4128 = vpop.f32.mrb[0].mxu0
        %v4129 = vadd.f32 %v3909, %v4128
        %v4130 = vpop.f32.mrb[0].mxu0
        %v4131 = vadd.f32 %v3905, %v4130
        %v4132 = vpop.f32.mrb[0].mxu0
        %v4133 = vadd.f32 %v3909, %v4132
        %4134 = vmatprep.mubr.bf16.mxu0 0
        %4135 = vmatmul.mubr.bf16.gmra.mrb[0].mxu0 %v2938
        %v4136 = vpop.f32.mrb[0].mxu0
        %v4137 = vadd.f32 %v3905, %v4136
        %v4138 = vpop.f32.mrb[0].mxu0
        %v4139 = vadd.f32 %v3909, %v4138
        %v4140 = vpop.f32.mrb[0].mxu0
        %v4141 = vadd.f32 %v3905, %v4140
        %v4142 = vpop.f32.mrb[0].mxu0
        %v4143 = vadd.f32 %v3909, %v4142
        %4144 = vmatprep.mubr.bf16.mxu0 0
        %4145 = vmatmul.mubr.bf16.gmra.mrb[0].mxu0 %v2939
        %v4146 = vpop.f32.mrb[0].mxu0
        %v4147 = vadd.f32 %v3905, %v4146
        %v4148 = vpop.f32.mrb[0].mxu0
        %v4149 = vadd.f32 %v3909, %v4148
        %v4150 = vpop.f32.mrb[0].mxu0
        %v4151 = vadd.f32 %v3905, %v4150
        %v4152 = vpop.f32.mrb[0].mxu0
        %v4153 = vadd.f32 %v3909, %v4152
        %4154 = vmatprep.mubr.bf16.mxu0 0
        %4155 = vmatmul.mubr.bf16.gmra.mrb[0].mxu0 %v2940
        %v4156 = vpop.f32.mrb[0].mxu0
        %v4157 = vadd.f32 %v3905, %v4156
        %v4158 = vpop.f32.mrb[0].mxu0
        %v4159 = vadd.f32 %v3909, %v4158
        %v4160 = vpop.f32.mrb[0].mxu0
        %v4161 = vadd.f32 %v3905, %v4160
        %v4162 = vpop.f32.mrb[0].mxu0
        %v4163 = vadd.f32 %v3909, %v4162
        %4164 = vmatprep.mubr.bf16.mxu0 0
        %4165 = vmatmul.mubr.bf16.gmra.mrb[0].mxu0 %v2941
        %v4166 = vpop.f32.mrb[0].mxu0
        %v4167 = vadd.f32 %v3905, %v4166
        %v4168 = vpop.f32.mrb[0].mxu0
        %v4169 = vadd.f32 %v3909, %v4168
        %v4170 = vpop.f32.mrb[0].mxu0
        %v4171 = vadd.f32 %v3905, %v4170
        %v4172 = vpop.f32.mrb[0].mxu0
        %v4173 = vadd.f32 %v3909, %v4172
        %4174 = vmatprep.mubr.bf16.mxu0 0
        %4175 = vmatmul.mubr.bf16.gmra.mrb[0].mxu0 %v2942
        %v4176 = vpop.f32.mrb[0].mxu0
        %v4177 = vadd.f32 %v3905, %v4176
        %v4178 = vpop.f32.mrb[0].mxu0
        %v4179 = vadd.f32 %v3909, %v4178
        %v4180 = vpop.f32.mrb[0].mxu0
        %v4181 = vadd.f32 %v3905, %v4180
        %v4182 = vpop.f32.mrb[0].mxu0
        %v4183 = vadd.f32 %v3909, %v4182
        %4184 = vdwg.mxu0
        %v4185 = vmul.f32 %v4027, 0.5
        %v4186 = vmul.f32 %v4029, 0.5
        %v4187 = vmul.f32 %v4031, 0.5
        %v4188 = vmul.f32 %v4033, 0.5
        %v4189 = vmul.f32 %v4037, 0.5
        %v4190 = vmul.f32 %v4039, 0.5
        %v4191 = vmul.f32 %v4041, 0.5
        %v4192 = vmul.f32 %v4043, 0.5
        %v4193 = vmul.f32 %v4047, 0.5
        %v4194 = vmul.f32 %v4049, 0.5
        %v4195 = vmul.f32 %v4051, 0.5
        %v4196 = vmul.f32 %v4053, 0.5
        %v4197 = vmul.f32 %v4057, 0.5
        %v4198 = vmul.f32 %v4059, 0.5
        %v4199 = vmul.f32 %v4061, 0.5
        %v4200 = vmul.f32 %v4063, 0.5
        %v4201 = vmul.f32 %v4067, 0.5
        %v4202 = vmul.f32 %v4069, 0.5
        %v4203 = vmul.f32 %v4071, 0.5
        %v4204 = vmul.f32 %v4073, 0.5
        %v4205 = vmul.f32 %v4077, 0.5
        %v4206 = vmul.f32 %v4079, 0.5
        %v4207 = vmul.f32 %v4081, 0.5
        %v4208 = vmul.f32 %v4083, 0.5
        %v4209 = vmul.f32 %v4087, 0.5
        %v4210 = vmul.f32 %v4089, 0.5
        %v4211 = vmul.f32 %v4091, 0.5
        %v4212 = vmul.f32 %v4093, 0.5
        %v4213 = vmul.f32 %v4097, 0.5
        %v4214 = vmul.f32 %v4099, 0.5
        %v4215 = vmul.f32 %v4101, 0.5
        %v4216 = vmul.f32 %v4103, 0.5
        %v4217 = vmul.f32 %v4107, 0.5
        %v4218 = vmul.f32 %v4109, 0.5
        %v4219 = vmul.f32 %v4111, 0.5
        %v4220 = vmul.f32 %v4113, 0.5
        %v4221 = vmul.f32 %v4117, 0.5
        %v4222 = vmul.f32 %v4119, 0.5
        %v4223 = vmul.f32 %v4121, 0.5
        %v4224 = vmul.f32 %v4123, 0.5
        %v4225 = vmul.f32 %v4127, 0.5
        %v4226 = vmul.f32 %v4129, 0.5
        %v4227 = vmul.f32 %v4131, 0.5
        %v4228 = vmul.f32 %v4133, 0.5
        %v4229 = vmul.f32 %v4137, 0.5
        %v4230 = vmul.f32 %v4139, 0.5
        %v4231 = vmul.f32 %v4141, 0.5
        %v4232 = vmul.f32 %v4143, 0.5
        %v4233 = vmul.f32 %v4147, 0.5
        %v4234 = vmul.f32 %v4149, 0.5
        %v4235 = vmul.f32 %v4151, 0.5
        %v4236 = vmul.f32 %v4153, 0.5
        %v4237 = vmul.f32 %v4157, 0.5
        %v4238 = vmul.f32 %v4159, 0.5
        %v4239 = vmul.f32 %v4161, 0.5
        %v4240 = vmul.f32 %v4163, 0.5
        %v4241 = vmul.f32 %v4167, 0.5
        %v4242 = vmul.f32 %v4169, 0.5
        %v4243 = vmul.f32 %v4171, 0.5
        %v4244 = vmul.f32 %v4173, 0.5
        %v4245 = vmul.f32 %v4177, 0.5
        %v4246 = vmul.f32 %v4179, 0.5
        %v4247 = vmul.f32 %v4181, 0.5
        %v4248 = vmul.f32 %v4183, 0.5
        %v4249 = vmul.f32 %v4027, 0.044715
        %v4250 = vmul.f32 %v4029, 0.044715
        %v4251 = vmul.f32 %v4031, 0.044715
        %v4252 = vmul.f32 %v4033, 0.044715
        %v4253 = vmul.f32 %v4037, 0.044715
        %v4254 = vmul.f32 %v4039, 0.044715
        %v4255 = vmul.f32 %v4041, 0.044715
        %v4256 = vmul.f32 %v4043, 0.044715
        %v4257 = vmul.f32 %v4047, 0.044715
        %v4258 = vmul.f32 %v4049, 0.044715
        %v4259 = vmul.f32 %v4051, 0.044715
        %v4260 = vmul.f32 %v4053, 0.044715
        %v4261 = vmul.f32 %v4057, 0.044715
        %v4262 = vmul.f32 %v4059, 0.044715
        %v4263 = vmul.f32 %v4061, 0.044715
        %v4264 = vmul.f32 %v4063, 0.044715
        %v4265 = vmul.f32 %v4067, 0.044715
        %v4266 = vmul.f32 %v4069, 0.044715
        %v4267 = vmul.f32 %v4071, 0.044715
        %v4268 = vmul.f32 %v4073, 0.044715
        %v4269 = vmul.f32 %v4077, 0.044715
        %v4270 = vmul.f32 %v4079, 0.044715
        %v4271 = vmul.f32 %v4081, 0.044715
        %v4272 = vmul.f32 %v4083, 0.044715
        %v4273 = vmul.f32 %v4087, 0.044715
        %v4274 = vmul.f32 %v4089, 0.044715
        %v4275 = vmul.f32 %v4091, 0.044715
        %v4276 = vmul.f32 %v4093, 0.044715
        %v4277 = vmul.f32 %v4097, 0.044715
        %v4278 = vmul.f32 %v4099, 0.044715
        %v4279 = vmul.f32 %v4101, 0.044715
        %v4280 = vmul.f32 %v4103, 0.044715
        %v4281 = vmul.f32 %v4107, 0.044715
        %v4282 = vmul.f32 %v4109, 0.044715
        %v4283 = vmul.f32 %v4111, 0.044715
        %v4284 = vmul.f32 %v4113, 0.044715
        %v4285 = vmul.f32 %v4117, 0.044715
        %v4286 = vmul.f32 %v4119, 0.044715
        %v4287 = vmul.f32 %v4121, 0.044715
        %v4288 = vmul.f32 %v4123, 0.044715
        %v4289 = vmul.f32 %v4127, 0.044715
        %v4290 = vmul.f32 %v4129, 0.044715
        %v4291 = vmul.f32 %v4131, 0.044715
        %v4292 = vmul.f32 %v4133, 0.044715
        %v4293 = vmul.f32 %v4137, 0.044715
        %v4294 = vmul.f32 %v4139, 0.044715
        %v4295 = vmul.f32 %v4141, 0.044715
        %v4296 = vmul.f32 %v4143, 0.044715
        %v4297 = vmul.f32 %v4147, 0.044715
        %v4298 = vmul.f32 %v4149, 0.044715
        %v4299 = vmul.f32 %v4151, 0.044715
        %v4300 = vmul.f32 %v4153, 0.044715
        %v4301 = vmul.f32 %v4157, 0.044715
        %v4302 = vmul.f32 %v4159, 0.044715
        %v4303 = vmul.f32 %v4161, 0.044715
        %v4304 = vmul.f32 %v4163, 0.044715
        %v4305 = vmul.f32 %v4167, 0.044715
        %v4306 = vmul.f32 %v4169, 0.044715
        %v4307 = vmul.f32 %v4171, 0.044715
        %v4308 = vmul.f32 %v4173, 0.044715
        %v4309 = vmul.f32 %v4177, 0.044715
        %v4310 = vmul.f32 %v4179, 0.044715
        %v4311 = vmul.f32 %v4181, 0.044715
        %v4312 = vmul.f32 %v4183, 0.044715
        %v4313 = vmul.f32 %v4249, %v4027
        %v4314 = vmul.f32 %v4250, %v4029
        %v4315 = vmul.f32 %v4251, %v4031
        %v4316 = vmul.f32 %v4252, %v4033
        %v4317 = vmul.f32 %v4253, %v4037
        %v4318 = vmul.f32 %v4254, %v4039
        %v4319 = vmul.f32 %v4255, %v4041
        %v4320 = vmul.f32 %v4256, %v4043
        %v4321 = vmul.f32 %v4257, %v4047
        %v4322 = vmul.f32 %v4258, %v4049
        %v4323 = vmul.f32 %v4259, %v4051
        %v4324 = vmul.f32 %v4260, %v4053
        %v4325 = vmul.f32 %v4261, %v4057
        %v4326 = vmul.f32 %v4262, %v4059
        %v4327 = vmul.f32 %v4263, %v4061
        %v4328 = vmul.f32 %v4264, %v4063
        %v4329 = vmul.f32 %v4265, %v4067
        %v4330 = vmul.f32 %v4266, %v4069
        %v4331 = vmul.f32 %v4267, %v4071
        %v4332 = vmul.f32 %v4268, %v4073
        %v4333 = vmul.f32 %v4269, %v4077
        %v4334 = vmul.f32 %v4270, %v4079
        %v4335 = vmul.f32 %v4271, %v4081
        %v4336 = vmul.f32 %v4272, %v4083
        %v4337 = vmul.f32 %v4273, %v4087
        %v4338 = vmul.f32 %v4274, %v4089
        %v4339 = vmul.f32 %v4275, %v4091
        %v4340 = vmul.f32 %v4276, %v4093
        %v4341 = vmul.f32 %v4277, %v4097
        %v4342 = vmul.f32 %v4278, %v4099
        %v4343 = vmul.f32 %v4279, %v4101
        %v4344 = vmul.f32 %v4280, %v4103
        %v4345 = vmul.f32 %v4281, %v4107
        %v4346 = vmul.f32 %v4282, %v4109
        %v4347 = vmul.f32 %v4283, %v4111
        %v4348 = vmul.f32 %v4284, %v4113
        %v4349 = vmul.f32 %v4285, %v4117
        %v4350 = vmul.f32 %v4286, %v4119
        %v4351 = vmul.f32 %v4287, %v4121
        %v4352 = vmul.f32 %v4288, %v4123
        %v4353 = vmul.f32 %v4289, %v4127
        %v4354 = vmul.f32 %v4290, %v4129
        %v4355 = vmul.f32 %v4291, %v4131
        %v4356 = vmul.f32 %v4292, %v4133
        %v4357 = vmul.f32 %v4293, %v4137
        %v4358 = vmul.f32 %v4294, %v4139
        %v4359 = vmul.f32 %v4295, %v4141
        %v4360 = vmul.f32 %v4296, %v4143
        %v4361 = vmul.f32 %v4297, %v4147
        %v4362 = vmul.f32 %v4298, %v4149
        %v4363 = vmul.f32 %v4299, %v4151
        %v4364 = vmul.f32 %v4300, %v4153
        %v4365 = vmul.f32 %v4301, %v4157
        %v4366 = vmul.f32 %v4302, %v4159
        %v4367 = vmul.f32 %v4303, %v4161
        %v4368 = vmul.f32 %v4304, %v4163
        %v4369 = vmul.f32 %v4305, %v4167
        %v4370 = vmul.f32 %v4306, %v4169
        %v4371 = vmul.f32 %v4307, %v4171
        %v4372 = vmul.f32 %v4308, %v4173
        %v4373 = vmul.f32 %v4309, %v4177
        %v4374 = vmul.f32 %v4310, %v4179
        %v4375 = vmul.f32 %v4311, %v4181
        %v4376 = vmul.f32 %v4312, %v4183
        %v4377 = vmul.f32 %v4313, %v4027
        %v4378 = vmul.f32 %v4314, %v4029
        %v4379 = vmul.f32 %v4315, %v4031
        %v4380 = vmul.f32 %v4316, %v4033
        %v4381 = vmul.f32 %v4317, %v4037
        %v4382 = vmul.f32 %v4318, %v4039
        %v4383 = vmul.f32 %v4319, %v4041
        %v4384 = vmul.f32 %v4320, %v4043
        %v4385 = vmul.f32 %v4321, %v4047
        %v4386 = vmul.f32 %v4322, %v4049
        %v4387 = vmul.f32 %v4323, %v4051
        %v4388 = vmul.f32 %v4324, %v4053
        %v4389 = vmul.f32 %v4325, %v4057
        %v4390 = vmul.f32 %v4326, %v4059
        %v4391 = vmul.f32 %v4327, %v4061
        %v4392 = vmul.f32 %v4328, %v4063
        %v4393 = vmul.f32 %v4329, %v4067
        %v4394 = vmul.f32 %v4330, %v4069
        %v4395 = vmul.f32 %v4331, %v4071
        %v4396 = vmul.f32 %v4332, %v4073
        %v4397 = vmul.f32 %v4333, %v4077
        %v4398 = vmul.f32 %v4334, %v4079
        %v4399 = vmul.f32 %v4335, %v4081
        %v4400 = vmul.f32 %v4336, %v4083
        %v4401 = vmul.f32 %v4337, %v4087
        %v4402 = vmul.f32 %v4338, %v4089
        %v4403 = vmul.f32 %v4339, %v4091
        %v4404 = vmul.f32 %v4340, %v4093
        %v4405 = vmul.f32 %v4341, %v4097
        %v4406 = vmul.f32 %v4342, %v4099
        %v4407 = vmul.f32 %v4343, %v4101
        %v4408 = vmul.f32 %v4344, %v4103
        %v4409 = vmul.f32 %v4345, %v4107
        %v4410 = vmul.f32 %v4346, %v4109
        %v4411 = vmul.f32 %v4347, %v4111
        %v4412 = vmul.f32 %v4348, %v4113
        %v4413 = vmul.f32 %v4349, %v4117
        %v4414 = vmul.f32 %v4350, %v4119
        %v4415 = vmul.f32 %v4351, %v4121
        %v4416 = vmul.f32 %v4352, %v4123
        %v4417 = vmul.f32 %v4353, %v4127
        %v4418 = vmul.f32 %v4354, %v4129
        %v4419 = vmul.f32 %v4355, %v4131
        %v4420 = vmul.f32 %v4356, %v4133
        %v4421 = vmul.f32 %v4357, %v4137
        %v4422 = vmul.f32 %v4358, %v4139
        %v4423 = vmul.f32 %v4359, %v4141
        %v4424 = vmul.f32 %v4360, %v4143
        %v4425 = vmul.f32 %v4361, %v4147
        %v4426 = vmul.f32 %v4362, %v4149
        %v4427 = vmul.f32 %v4363, %v4151
        %v4428 = vmul.f32 %v4364, %v4153
        %v4429 = vmul.f32 %v4365, %v4157
        %v4430 = vmul.f32 %v4366, %v4159
        %v4431 = vmul.f32 %v4367, %v4161
        %v4432 = vmul.f32 %v4368, %v4163
        %v4433 = vmul.f32 %v4369, %v4167
        %v4434 = vmul.f32 %v4370, %v4169
        %v4435 = vmul.f32 %v4371, %v4171
        %v4436 = vmul.f32 %v4372, %v4173
        %v4437 = vmul.f32 %v4373, %v4177
        %v4438 = vmul.f32 %v4374, %v4179
        %v4439 = vmul.f32 %v4375, %v4181
        %v4440 = vmul.f32 %v4376, %v4183
        %v4441 = vadd.f32 %v4027, %v4377
        %v4442 = vadd.f32 %v4029, %v4378
        %v4443 = vadd.f32 %v4031, %v4379
        %v4444 = vadd.f32 %v4033, %v4380
        %v4445 = vadd.f32 %v4037, %v4381
        %v4446 = vadd.f32 %v4039, %v4382
        %v4447 = vadd.f32 %v4041, %v4383
        %v4448 = vadd.f32 %v4043, %v4384
        %v4449 = vadd.f32 %v4047, %v4385
        %v4450 = vadd.f32 %v4049, %v4386
        %v4451 = vadd.f32 %v4051, %v4387
        %v4452 = vadd.f32 %v4053, %v4388
        %v4453 = vadd.f32 %v4057, %v4389
        %v4454 = vadd.f32 %v4059, %v4390
        %v4455 = vadd.f32 %v4061, %v4391
        %v4456 = vadd.f32 %v4063, %v4392
        %v4457 = vadd.f32 %v4067, %v4393
        %v4458 = vadd.f32 %v4069, %v4394
        %v4459 = vadd.f32 %v4071, %v4395
        %v4460 = vadd.f32 %v4073, %v4396
        %v4461 = vadd.f32 %v4077, %v4397
        %v4462 = vadd.f32 %v4079, %v4398
        %v4463 = vadd.f32 %v4081, %v4399
        %v4464 = vadd.f32 %v4083, %v4400
        %v4465 = vadd.f32 %v4087, %v4401
        %v4466 = vadd.f32 %v4089, %v4402
        %v4467 = vadd.f32 %v4091, %v4403
        %v4468 = vadd.f32 %v4093, %v4404
        %v4469 = vadd.f32 %v4097, %v4405
        %v4470 = vadd.f32 %v4099, %v4406
        %v4471 = vadd.f32 %v4101, %v4407
        %v4472 = vadd.f32 %v4103, %v4408
        %v4473 = vadd.f32 %v4107, %v4409
        %v4474 = vadd.f32 %v4109, %v4410
        %v4475 = vadd.f32 %v4111, %v4411
        %v4476 = vadd.f32 %v4113, %v4412
        %v4477 = vadd.f32 %v4117, %v4413
        %v4478 = vadd.f32 %v4119, %v4414
        %v4479 = vadd.f32 %v4121, %v4415
        %v4480 = vadd.f32 %v4123, %v4416
        %v4481 = vadd.f32 %v4127, %v4417
        %v4482 = vadd.f32 %v4129, %v4418
        %v4483 = vadd.f32 %v4131, %v4419
        %v4484 = vadd.f32 %v4133, %v4420
        %v4485 = vadd.f32 %v4137, %v4421
        %v4486 = vadd.f32 %v4139, %v4422
        %v4487 = vadd.f32 %v4141, %v4423
        %v4488 = vadd.f32 %v4143, %v4424
        %v4489 = vadd.f32 %v4147, %v4425
        %v4490 = vadd.f32 %v4149, %v4426
        %v4491 = vadd.f32 %v4151, %v4427
        %v4492 = vadd.f32 %v4153, %v4428
        %v4493 = vadd.f32 %v4157, %v4429
        %v4494 = vadd.f32 %v4159, %v4430
        %v4495 = vadd.f32 %v4161, %v4431
        %v4496 = vadd.f32 %v4163, %v4432
        %v4497 = vadd.f32 %v4167, %v4433
        %v4498 = vadd.f32 %v4169, %v4434
        %v4499 = vadd.f32 %v4171, %v4435
        %v4500 = vadd.f32 %v4173, %v4436
        %v4501 = vadd.f32 %v4177, %v4437
        %v4502 = vadd.f32 %v4179, %v4438
        %v4503 = vadd.f32 %v4181, %v4439
        %v4504 = vadd.f32 %v4183, %v4440
        %v4505 = vmul.f32 %v4441, 0.7978846
        %v4506 = vmul.f32 %v4442, 0.7978846
        %v4507 = vmul.f32 %v4443, 0.7978846
        %v4508 = vmul.f32 %v4444, 0.7978846
        %v4509 = vmul.f32 %v4445, 0.7978846
        %v4510 = vmul.f32 %v4446, 0.7978846
        %v4511 = vmul.f32 %v4447, 0.7978846
        %v4512 = vmul.f32 %v4448, 0.7978846
        %v4513 = vmul.f32 %v4449, 0.7978846
        %v4514 = vmul.f32 %v4450, 0.7978846
        %v4515 = vmul.f32 %v4451, 0.7978846
        %v4516 = vmul.f32 %v4452, 0.7978846
        %v4517 = vmul.f32 %v4453, 0.7978846
        %v4518 = vmul.f32 %v4454, 0.7978846
        %v4519 = vmul.f32 %v4455, 0.7978846
        %v4520 = vmul.f32 %v4456, 0.7978846
        %v4521 = vmul.f32 %v4457, 0.7978846
        %v4522 = vmul.f32 %v4458, 0.7978846
        %v4523 = vmul.f32 %v4459, 0.7978846
        %v4524 = vmul.f32 %v4460, 0.7978846
        %v4525 = vmul.f32 %v4461, 0.7978846
        %v4526 = vmul.f32 %v4462, 0.7978846
        %v4527 = vmul.f32 %v4463, 0.7978846
        %v4528 = vmul.f32 %v4464, 0.7978846
        %v4529 = vmul.f32 %v4465, 0.7978846
        %v4530 = vmul.f32 %v4466, 0.7978846
        %v4531 = vmul.f32 %v4467, 0.7978846
        %v4532 = vmul.f32 %v4468, 0.7978846
        %v4533 = vmul.f32 %v4469, 0.7978846
        %v4534 = vmul.f32 %v4470, 0.7978846
        %v4535 = vmul.f32 %v4471, 0.7978846
        %v4536 = vmul.f32 %v4472, 0.7978846
        %v4537 = vmul.f32 %v4473, 0.7978846
        %v4538 = vmul.f32 %v4474, 0.7978846
        %v4539 = vmul.f32 %v4475, 0.7978846
        %v4540 = vmul.f32 %v4476, 0.7978846
        %v4541 = vmul.f32 %v4477, 0.7978846
        %v4542 = vmul.f32 %v4478, 0.7978846
        %v4543 = vmul.f32 %v4479, 0.7978846
        %v4544 = vmul.f32 %v4480, 0.7978846
        %v4545 = vmul.f32 %v4481, 0.7978846
        %v4546 = vmul.f32 %v4482, 0.7978846
        %v4547 = vmul.f32 %v4483, 0.7978846
        %v4548 = vmul.f32 %v4484, 0.7978846
        %v4549 = vmul.f32 %v4485, 0.7978846
        %v4550 = vmul.f32 %v4486, 0.7978846
        %v4551 = vmul.f32 %v4487, 0.7978846
        %v4552 = vmul.f32 %v4488, 0.7978846
        %v4553 = vmul.f32 %v4489, 0.7978846
        %v4554 = vmul.f32 %v4490, 0.7978846
        %v4555 = vmul.f32 %v4491, 0.7978846
        %v4556 = vmul.f32 %v4492, 0.7978846
        %v4557 = vmul.f32 %v4493, 0.7978846
        %v4558 = vmul.f32 %v4494, 0.7978846
        %v4559 = vmul.f32 %v4495, 0.7978846
        %v4560 = vmul.f32 %v4496, 0.7978846
        %v4561 = vmul.f32 %v4497, 0.7978846
        %v4562 = vmul.f32 %v4498, 0.7978846
        %v4563 = vmul.f32 %v4499, 0.7978846
        %v4564 = vmul.f32 %v4500, 0.7978846
        %v4565 = vmul.f32 %v4501, 0.7978846
        %v4566 = vmul.f32 %v4502, 0.7978846
        %v4567 = vmul.f32 %v4503, 0.7978846
        %v4568 = vmul.f32 %v4504, 0.7978846
        %v4569 = vtanh.pop %v4505
        %v4570 = vtanh.pop %v4506
        %v4571 = vtanh.pop %v4507
        %v4572 = vtanh.pop %v4508
        %v4573 = vtanh.pop %v4509
        %v4574 = vtanh.pop %v4510
        %v4575 = vtanh.pop %v4511
        %v4576 = vtanh.pop %v4512
        %v4577 = vtanh.pop %v4513
        %v4578 = vtanh.pop %v4514
        %v4579 = vtanh.pop %v4515
        %v4580 = vtanh.pop %v4516
        %v4581 = vtanh.pop %v4517
        %v4582 = vtanh.pop %v4518
        %v4583 = vtanh.pop %v4519
        %v4584 = vtanh.pop %v4520
        %v4585 = vtanh.pop %v4521
        %v4586 = vtanh.pop %v4522
        %v4587 = vtanh.pop %v4523
        %v4588 = vtanh.pop %v4524
        %v4589 = vtanh.pop %v4525
        %v4590 = vtanh.pop %v4526
        %v4591 = vtanh.pop %v4527
        %v4592 = vtanh.pop %v4528
        %v4593 = vtanh.pop %v4529
        %v4594 = vtanh.pop %v4530
        %v4595 = vtanh.pop %v4531
        %v4596 = vtanh.pop %v4532
        %v4597 = vtanh.pop %v4533
        %v4598 = vtanh.pop %v4534
        %v4599 = vtanh.pop %v4535
        %v4600 = vtanh.pop %v4536
        %v4601 = vtanh.pop %v4537
        %v4602 = vtanh.pop %v4538
        %v4603 = vtanh.pop %v4539
        %v4604 = vtanh.pop %v4540
        %v4605 = vtanh.pop %v4541
        %v4606 = vtanh.pop %v4542
        %v4607 = vtanh.pop %v4543
        %v4608 = vtanh.pop %v4544
        %v4609 = vtanh.pop %v4545
        %v4610 = vtanh.pop %v4546
        %v4611 = vtanh.pop %v4547
        %v4612 = vtanh.pop %v4548
        %v4613 = vtanh.pop %v4549
        %v4614 = vtanh.pop %v4550
        %v4615 = vtanh.pop %v4551
        %v4616 = vtanh.pop %v4552
        %v4617 = vtanh.pop %v4553
        %v4618 = vtanh.pop %v4554
        %v4619 = vtanh.pop %v4555
        %v4620 = vtanh.pop %v4556
        %v4621 = vtanh.pop %v4557
        %v4622 = vtanh.pop %v4558
        %v4623 = vtanh.pop %v4559
        %v4624 = vtanh.pop %v4560
        %v4625 = vtanh.pop %v4561
        %v4626 = vtanh.pop %v4562
        %v4627 = vtanh.pop %v4563
        %v4628 = vtanh.pop %v4564
        %v4629 = vtanh.pop %v4565
        %v4630 = vtanh.pop %v4566
        %v4631 = vtanh.pop %v4567
        %v4632 = vtanh.pop %v4568
        %v4633 = vadd.f32 %v4569, 1.0
        %v4634 = vadd.f32 %v4570, 1.0
        %v4635 = vadd.f32 %v4571, 1.0
        %v4636 = vadd.f32 %v4572, 1.0
        %v4637 = vadd.f32 %v4573, 1.0
        %v4638 = vadd.f32 %v4574, 1.0
        %v4639 = vadd.f32 %v4575, 1.0
        %v4640 = vadd.f32 %v4576, 1.0
        %v4641 = vadd.f32 %v4577, 1.0
        %v4642 = vadd.f32 %v4578, 1.0
        %v4643 = vadd.f32 %v4579, 1.0
        %v4644 = vadd.f32 %v4580, 1.0
        %v4645 = vadd.f32 %v4581, 1.0
        %v4646 = vadd.f32 %v4582, 1.0
        %v4647 = vadd.f32 %v4583, 1.0
        %v4648 = vadd.f32 %v4584, 1.0
        %v4649 = vadd.f32 %v4585, 1.0
        %v4650 = vadd.f32 %v4586, 1.0
        %v4651 = vadd.f32 %v4587, 1.0
        %v4652 = vadd.f32 %v4588, 1.0
        %v4653 = vadd.f32 %v4589, 1.0
        %v4654 = vadd.f32 %v4590, 1.0
        %v4655 = vadd.f32 %v4591, 1.0
        %v4656 = vadd.f32 %v4592, 1.0
        %v4657 = vadd.f32 %v4593, 1.0
        %v4658 = vadd.f32 %v4594, 1.0
        %v4659 = vadd.f32 %v4595, 1.0
        %v4660 = vadd.f32 %v4596, 1.0
        %v4661 = vadd.f32 %v4597, 1.0
        %v4662 = vadd.f32 %v4598, 1.0
        %v4663 = vadd.f32 %v4599, 1.0
        %v4664 = vadd.f32 %v4600, 1.0
        %v4665 = vadd.f32 %v4601, 1.0
        %v4666 = vadd.f32 %v4602, 1.0
        %v4667 = vadd.f32 %v4603, 1.0
        %v4668 = vadd.f32 %v4604, 1.0
        %v4669 = vadd.f32 %v4605, 1.0
        %v4670 = vadd.f32 %v4606, 1.0
        %v4671 = vadd.f32 %v4607, 1.0
        %v4672 = vadd.f32 %v4608, 1.0
        %v4673 = vadd.f32 %v4609, 1.0
        %v4674 = vadd.f32 %v4610, 1.0
        %v4675 = vadd.f32 %v4611, 1.0
        %v4676 = vadd.f32 %v4612, 1.0
        %v4677 = vadd.f32 %v4613, 1.0
        %v4678 = vadd.f32 %v4614, 1.0
        %v4679 = vadd.f32 %v4615, 1.0
        %v4680 = vadd.f32 %v4616, 1.0
        %v4681 = vadd.f32 %v4617, 1.0
        %v4682 = vadd.f32 %v4618, 1.0
        %v4683 = vadd.f32 %v4619, 1.0
        %v4684 = vadd.f32 %v4620, 1.0
        %v4685 = vadd.f32 %v4621, 1.0
        %v4686 = vadd.f32 %v4622, 1.0
        %v4687 = vadd.f32 %v4623, 1.0
        %v4688 = vadd.f32 %v4624, 1.0
        %v4689 = vadd.f32 %v4625, 1.0
        %v4690 = vadd.f32 %v4626, 1.0
        %v4691 = vadd.f32 %v4627, 1.0
        %v4692 = vadd.f32 %v4628, 1.0
        %v4693 = vadd.f32 %v4629, 1.0
        %v4694 = vadd.f32 %v4630, 1.0
        %v4695 = vadd.f32 %v4631, 1.0
        %v4696 = vadd.f32 %v4632, 1.0
        %v4697 = vmul.f32 %v4185, %v4633
        %v4698 = vmul.f32 %v4186, %v4634
        %v4699 = vmul.f32 %v4187, %v4635
        %v4700 = vmul.f32 %v4188, %v4636
        %v4701 = vmul.f32 %v4189, %v4637
        %v4702 = vmul.f32 %v4190, %v4638
        %v4703 = vmul.f32 %v4191, %v4639
        %v4704 = vmul.f32 %v4192, %v4640
        %v4705 = vmul.f32 %v4193, %v4641
        %v4706 = vmul.f32 %v4194, %v4642
        %v4707 = vmul.f32 %v4195, %v4643
        %v4708 = vmul.f32 %v4196, %v4644
        %v4709 = vmul.f32 %v4197, %v4645
        %v4710 = vmul.f32 %v4198, %v4646
        %v4711 = vmul.f32 %v4199, %v4647
        %v4712 = vmul.f32 %v4200, %v4648
        %v4713 = vmul.f32 %v4201, %v4649
        %v4714 = vmul.f32 %v4202, %v4650
        %v4715 = vmul.f32 %v4203, %v4651
        %v4716 = vmul.f32 %v4204, %v4652
        %v4717 = vmul.f32 %v4205, %v4653
        %v4718 = vmul.f32 %v4206, %v4654
        %v4719 = vmul.f32 %v4207, %v4655
        %v4720 = vmul.f32 %v4208, %v4656
        %v4721 = vmul.f32 %v4209, %v4657
        %v4722 = vmul.f32 %v4210, %v4658
        %v4723 = vmul.f32 %v4211, %v4659
        %v4724 = vmul.f32 %v4212, %v4660
        %v4725 = vmul.f32 %v4213, %v4661
        %v4726 = vmul.f32 %v4214, %v4662
        %v4727 = vmul.f32 %v4215, %v4663
        %v4728 = vmul.f32 %v4216, %v4664
        %v4729 = vmul.f32 %v4217, %v4665
        %v4730 = vmul.f32 %v4218, %v4666
        %v4731 = vmul.f32 %v4219, %v4667
        %v4732 = vmul.f32 %v4220, %v4668
        %v4733 = vmul.f32 %v4221, %v4669
        %v4734 = vmul.f32 %v4222, %v4670
        %v4735 = vmul.f32 %v4223, %v4671
        %v4736 = vmul.f32 %v4224, %v4672
        %v4737 = vmul.f32 %v4225, %v4673
        %v4738 = vmul.f32 %v4226, %v4674
        %v4739 = vmul.f32 %v4227, %v4675
        %v4740 = vmul.f32 %v4228, %v4676
        %v4741 = vmul.f32 %v4229, %v4677
        %v4742 = vmul.f32 %v4230, %v4678
        %v4743 = vmul.f32 %v4231, %v4679
        %v4744 = vmul.f32 %v4232, %v4680
        %v4745 = vmul.f32 %v4233, %v4681
        %v4746 = vmul.f32 %v4234, %v4682
        %v4747 = vmul.f32 %v4235, %v4683
        %v4748 = vmul.f32 %v4236, %v4684
        %v4749 = vmul.f32 %v4237, %v4685
        %v4750 = vmul.f32 %v4238, %v4686
        %v4751 = vmul.f32 %v4239, %v4687
        %v4752 = vmul.f32 %v4240, %v4688
        %v4753 = vmul.f32 %v4241, %v4689
        %v4754 = vmul.f32 %v4242, %v4690
        %v4755 = vmul.f32 %v4243, %v4691
        %v4756 = vmul.f32 %v4244, %v4692
        %v4757 = vmul.f32 %v4245, %v4693
        %v4758 = vmul.f32 %v4246, %v4694
        %v4759 = vmul.f32 %v4247, %v4695
        %v4760 = vmul.f32 %v4248, %v4696
        %v4761 = vpack.c.bf16 %v4699, %v4697
        %v4762 = vpack.c.bf16 %v4700, %v4698
        %v4763 = vpack.c.bf16 %v4703, %v4701
        %v4764 = vpack.c.bf16 %v4704, %v4702
        %v4765 = vpack.c.bf16 %v4707, %v4705
        %v4766 = vpack.c.bf16 %v4708, %v4706
        %v4767 = vpack.c.bf16 %v4711, %v4709
        %v4768 = vpack.c.bf16 %v4712, %v4710
        %v4769 = vpack.c.bf16 %v4715, %v4713
        %v4770 = vpack.c.bf16 %v4716, %v4714
        %v4771 = vpack.c.bf16 %v4719, %v4717
        %v4772 = vpack.c.bf16 %v4720, %v4718
        %v4773 = vpack.c.bf16 %v4723, %v4721
        %v4774 = vpack.c.bf16 %v4724, %v4722
        %v4775 = vpack.c.bf16 %v4727, %v4725
        %v4776 = vpack.c.bf16 %v4728, %v4726
        %v4777 = vpack.c.bf16 %v4731, %v4729
        %v4778 = vpack.c.bf16 %v4732, %v4730
        %v4779 = vpack.c.bf16 %v4735, %v4733
        %v4780 = vpack.c.bf16 %v4736, %v4734
        %v4781 = vpack.c.bf16 %v4739, %v4737
        %v4782 = vpack.c.bf16 %v4740, %v4738
        %v4783 = vpack.c.bf16 %v4743, %v4741
        %v4784 = vpack.c.bf16 %v4744, %v4742
        %v4785 = vpack.c.bf16 %v4747, %v4745
        %v4786 = vpack.c.bf16 %v4748, %v4746
        %v4787 = vpack.c.bf16 %v4751, %v4749
        %v4788 = vpack.c.bf16 %v4752, %v4750
        %v4789 = vpack.c.bf16 %v4755, %v4753
        %v4790 = vpack.c.bf16 %v4756, %v4754
        %v4791 = vpack.c.bf16 %v4759, %v4757
        %v4792 = vpack.c.bf16 %v4760, %v4758
        %v4793 = vld [vmem:[#allocation13 + $0x80] sm:$0xf]
        %v4794 = vld [vmem:[#allocation13 + $0x84] sm:$0xf]
        %v4795 = vld [vmem:[#allocation13 + $0x88] sm:$0xf]
        %v4796 = vld [vmem:[#allocation13 + $0x8c] sm:$0xf]
        %v4797 = vld [vmem:[#allocation13 + $0x90] sm:$0xf]
        %v4798 = vld [vmem:[#allocation13 + $0x94] sm:$0xf]
        %v4799 = vld [vmem:[#allocation13 + $0x98] sm:$0xf]
        %v4800 = vld [vmem:[#allocation13 + $0x9c] sm:$0xf]
        %v4801 = vld [vmem:[#allocation13 + $0xa0] sm:$0xf]
        %v4802 = vld [vmem:[#allocation13 + $0xa4] sm:$0xf]
        %v4803 = vld [vmem:[#allocation13 + $0xa8] sm:$0xf]
        %v4804 = vld [vmem:[#allocation13 + $0xac] sm:$0xf]
        %v4805 = vld [vmem:[#allocation13 + $0xb0] sm:$0xf]
        %v4806 = vld [vmem:[#allocation13 + $0xb4] sm:$0xf]
        %v4807 = vld [vmem:[#allocation13 + $0xb8] sm:$0xf]
        %v4808 = vld [vmem:[#allocation13 + $0xbc] sm:$0xf]
        %v4809 = vld [vmem:[#allocation13 + $0xc0] sm:$0xf]
        %v4810 = vld [vmem:[#allocation13 + $0xc4] sm:$0xf]
        %v4811 = vld [vmem:[#allocation13 + $0xc8] sm:$0xf]
        %v4812 = vld [vmem:[#allocation13 + $0xcc] sm:$0xf]
        %v4813 = vld [vmem:[#allocation13 + $0xd0] sm:$0xf]
        %v4814 = vld [vmem:[#allocation13 + $0xd4] sm:$0xf]
        %v4815 = vld [vmem:[#allocation13 + $0xd8] sm:$0xf]
        %v4816 = vld [vmem:[#allocation13 + $0xdc] sm:$0xf]
        %v4817 = vld [vmem:[#allocation13 + $0xe0] sm:$0xf]
        %v4818 = vld [vmem:[#allocation13 + $0xe4] sm:$0xf]
        %v4819 = vld [vmem:[#allocation13 + $0xe8] sm:$0xf]
        %v4820 = vld [vmem:[#allocation13 + $0xec] sm:$0xf]
        %v4821 = vld [vmem:[#allocation13 + $0xf0] sm:$0xf]
        %v4822 = vld [vmem:[#allocation13 + $0xf4] sm:$0xf]
        %v4823 = vld [vmem:[#allocation13 + $0xf8] sm:$0xf]
        %v4824 = vld [vmem:[#allocation13 + $0xfc] sm:$0xf]
        %v4857 = vunpack.c.l.b16 %v4793
        %v4858 = vunpack.c.l.b16 %v4794
        %v4859 = vunpack.c.l.b16 %v4795
        %v4860 = vunpack.c.l.b16 %v4796
        %v4861 = vunpack.c.l.b16 %v4797
        %v4862 = vunpack.c.l.b16 %v4798
        %v4863 = vunpack.c.l.b16 %v4799
        %v4864 = vunpack.c.l.b16 %v4800
        %v4865 = vunpack.c.l.b16 %v4801
        %v4866 = vunpack.c.l.b16 %v4802
        %v4867 = vunpack.c.l.b16 %v4803
        %v4868 = vunpack.c.l.b16 %v4804
        %v4869 = vunpack.c.l.b16 %v4805
        %v4870 = vunpack.c.l.b16 %v4806
        %v4871 = vunpack.c.l.b16 %v4807
        %v4872 = vunpack.c.l.b16 %v4808
        %v4873 = vunpack.c.l.b16 %v4809
        %v4874 = vunpack.c.l.b16 %v4810
        %v4875 = vunpack.c.l.b16 %v4811
        %v4876 = vunpack.c.l.b16 %v4812
        %v4877 = vunpack.c.l.b16 %v4813
        %v4878 = vunpack.c.l.b16 %v4814
        %v4879 = vunpack.c.l.b16 %v4815
        %v4880 = vunpack.c.l.b16 %v4816
        %v4881 = vunpack.c.l.b16 %v4817
        %v4882 = vunpack.c.l.b16 %v4818
        %v4883 = vunpack.c.l.b16 %v4819
        %v4884 = vunpack.c.l.b16 %v4820
        %v4885 = vunpack.c.l.b16 %v4821
        %v4886 = vunpack.c.l.b16 %v4822
        %v4887 = vunpack.c.l.b16 %v4823
        %v4888 = vunpack.c.l.b16 %v4824
        %v4889 = vpack.c.b16 %v4858, %v4857
        %v4890 = vpack.c.b16 %v4860, %v4859
        %v4891 = vpack.c.b16 %v4862, %v4861
        %v4892 = vpack.c.b16 %v4864, %v4863
        %v4893 = vpack.c.b16 %v4866, %v4865
        %v4894 = vpack.c.b16 %v4868, %v4867
        %v4895 = vpack.c.b16 %v4870, %v4869
        %v4896 = vpack.c.b16 %v4872, %v4871
        %v4897 = vpack.c.b16 %v4874, %v4873
        %v4898 = vpack.c.b16 %v4876, %v4875
        %v4899 = vpack.c.b16 %v4878, %v4877
        %v4900 = vpack.c.b16 %v4880, %v4879
        %v4901 = vpack.c.b16 %v4882, %v4881
        %v4902 = vpack.c.b16 %v4884, %v4883
        %v4903 = vpack.c.b16 %v4886, %v4885
        %v4904 = vpack.c.b16 %v4888, %v4887
        %4921 = vmatprep.subr.bf16.mxu0 0
        %4922 = vmatpush1.bf16.msra.mxu0 %v4889
        %4923 = vmatprep.subr.bf16.mxu0 0
        %4924 = vmatpush1.bf16.msra.mxu0 %v4890
        %4925 = vmatprep.subr.bf16.mxu0 0
        %4926 = vmatpush1.bf16.msra.mxu0 %v4891
        %4927 = vmatprep.subr.bf16.mxu0 0
        %4928 = vmatpush1.bf16.msra.mxu0 %v4892
        %4929 = vmatprep.subr.bf16.mxu0 0
        %4930 = vmatpush1.bf16.msra.mxu0 %v4893
        %4931 = vmatprep.subr.bf16.mxu0 0
        %4932 = vmatpush1.bf16.msra.mxu0 %v4894
        %4933 = vmatprep.subr.bf16.mxu0 0
        %4934 = vmatpush1.bf16.msra.mxu0 %v4895
        %4935 = vmatprep.subr.bf16.mxu0 0
        %4936 = vmatpush1.bf16.msra.mxu0 %v4896
        %4937 = vmatprep.subr.bf16.mxu0 0
        %4938 = vmatpush1.bf16.msra.mxu0 %v4897
        %4939 = vmatprep.subr.bf16.mxu0 0
        %4940 = vmatpush1.bf16.msra.mxu0 %v4898
        %4941 = vmatprep.subr.bf16.mxu0 0
        %4942 = vmatpush1.bf16.msra.mxu0 %v4899
        %4943 = vmatprep.subr.bf16.mxu0 0
        %4944 = vmatpush1.bf16.msra.mxu0 %v4900
        %4945 = vmatprep.subr.bf16.mxu0 0
        %4946 = vmatpush1.bf16.msra.mxu0 %v4901
        %4947 = vmatprep.subr.bf16.mxu0 0
        %4948 = vmatpush1.bf16.msra.mxu0 %v4902
        %4949 = vmatprep.subr.bf16.mxu0 0
        %4950 = vmatpush1.bf16.msra.mxu0 %v4903
        %4951 = vmatprep.subr.bf16.mxu0 0
        %4952 = vmatpush1.bf16.msra.mxu0 %v4904
        %4953 = vmatprep.mubr.bf16.mxu0 %v4762
        %4954 = vmatmul.mubr.bf16.gmra.mrb[0].mxu0 %v4761
        %v4955 = vpop.f32.mrb[0].mxu0
        %v4956 = vadd.f32 0.0, %v4955
        %v4957 = vpop.f32.mrb[0].mxu0
        %v4958 = vpop.f32.mrb[0].mxu0
        %v4959 = vadd.f32 0.0, %v4958
        %v4960 = vpop.f32.mrb[0].mxu0
        %4961 = vmatprep.mubr.bf16.mxu0 %v4764
        %4962 = vmatmul.mubr.bf16.gmra.mrb[0].mxu0 %v4763
        %v4963 = vpop.f32.mrb[0].mxu0
        %v4964 = vadd.f32 0.0, %v4963
        %v4965 = vpop.f32.mrb[0].mxu0
        %v4966 = vpop.f32.mrb[0].mxu0
        %v4967 = vadd.f32 0.0, %v4966
        %v4968 = vpop.f32.mrb[0].mxu0
        %4969 = vmatprep.mubr.bf16.mxu0 %v4766
        %4970 = vmatmul.mubr.bf16.gmra.mrb[0].mxu0 %v4765
        %v4971 = vpop.f32.mrb[0].mxu0
        %v4972 = vadd.f32 0.0, %v4971
        %v4973 = vpop.f32.mrb[0].mxu0
        %v4974 = vpop.f32.mrb[0].mxu0
        %v4975 = vadd.f32 0.0, %v4974
        %v4976 = vpop.f32.mrb[0].mxu0
        %4977 = vmatprep.mubr.bf16.mxu0 %v4768
        %4978 = vmatmul.mubr.bf16.gmra.mrb[0].mxu0 %v4767
        %v4979 = vpop.f32.mrb[0].mxu0
        %v4980 = vadd.f32 0.0, %v4979
        %v4981 = vpop.f32.mrb[0].mxu0
        %v4982 = vpop.f32.mrb[0].mxu0
        %v4983 = vadd.f32 0.0, %v4982
        %v4984 = vpop.f32.mrb[0].mxu0
        %4985 = vmatprep.mubr.bf16.mxu0 %v4770
        %4986 = vmatmul.mubr.bf16.gmra.mrb[0].mxu0 %v4769
        %v4987 = vpop.f32.mrb[0].mxu0
        %v4988 = vadd.f32 0.0, %v4987
        %v4989 = vpop.f32.mrb[0].mxu0
        %v4990 = vpop.f32.mrb[0].mxu0
        %v4991 = vadd.f32 0.0, %v4990
        %v4992 = vpop.f32.mrb[0].mxu0
        %4993 = vmatprep.mubr.bf16.mxu0 %v4772
        %4994 = vmatmul.mubr.bf16.gmra.mrb[0].mxu0 %v4771
        %v4995 = vpop.f32.mrb[0].mxu0
        %v4996 = vadd.f32 0.0, %v4995
        %v4997 = vpop.f32.mrb[0].mxu0
        %v4998 = vpop.f32.mrb[0].mxu0
        %v4999 = vadd.f32 0.0, %v4998
        %v5000 = vpop.f32.mrb[0].mxu0
        %5001 = vmatprep.mubr.bf16.mxu0 %v4774
        %5002 = vmatmul.mubr.bf16.gmra.mrb[0].mxu0 %v4773
        %v5003 = vpop.f32.mrb[0].mxu0
        %v5004 = vadd.f32 0.0, %v5003
        %v5005 = vpop.f32.mrb[0].mxu0
        %v5006 = vpop.f32.mrb[0].mxu0
        %v5007 = vadd.f32 0.0, %v5006
        %v5008 = vpop.f32.mrb[0].mxu0
        %5009 = vmatprep.mubr.bf16.mxu0 %v4776
        %5010 = vmatmul.mubr.bf16.gmra.mrb[0].mxu0 %v4775
        %v5011 = vpop.f32.mrb[0].mxu0
        %v5012 = vadd.f32 0.0, %v5011
        %v5013 = vpop.f32.mrb[0].mxu0
        %v5014 = vpop.f32.mrb[0].mxu0
        %v5015 = vadd.f32 0.0, %v5014
        %v5016 = vpop.f32.mrb[0].mxu0
        %5017 = vmatprep.mubr.bf16.mxu0 %v4778
        %5018 = vmatmul.mubr.bf16.gmra.mrb[0].mxu0 %v4777
        %v5019 = vpop.f32.mrb[0].mxu0
        %v5020 = vadd.f32 0.0, %v5019
        %v5021 = vpop.f32.mrb[0].mxu0
        %v5022 = vpop.f32.mrb[0].mxu0
        %v5023 = vadd.f32 0.0, %v5022
        %v5024 = vpop.f32.mrb[0].mxu0
        %5025 = vmatprep.mubr.bf16.mxu0 %v4780
        %5026 = vmatmul.mubr.bf16.gmra.mrb[0].mxu0 %v4779
        %v5027 = vpop.f32.mrb[0].mxu0
        %v5028 = vadd.f32 0.0, %v5027
        %v5029 = vpop.f32.mrb[0].mxu0
        %v5030 = vpop.f32.mrb[0].mxu0
        %v5031 = vadd.f32 0.0, %v5030
        %v5032 = vpop.f32.mrb[0].mxu0
        %5033 = vmatprep.mubr.bf16.mxu0 %v4782
        %5034 = vmatmul.mubr.bf16.gmra.mrb[0].mxu0 %v4781
        %v5035 = vpop.f32.mrb[0].mxu0
        %v5036 = vadd.f32 0.0, %v5035
        %v5037 = vpop.f32.mrb[0].mxu0
        %v5038 = vpop.f32.mrb[0].mxu0
        %v5039 = vadd.f32 0.0, %v5038
        %v5040 = vpop.f32.mrb[0].mxu0
        %5041 = vmatprep.mubr.bf16.mxu0 %v4784
        %5042 = vmatmul.mubr.bf16.gmra.mrb[0].mxu0 %v4783
        %v5043 = vpop.f32.mrb[0].mxu0
        %v5044 = vadd.f32 0.0, %v5043
        %v5045 = vpop.f32.mrb[0].mxu0
        %v5046 = vpop.f32.mrb[0].mxu0
        %v5047 = vadd.f32 0.0, %v5046
        %v5048 = vpop.f32.mrb[0].mxu0
        %5049 = vmatprep.mubr.bf16.mxu0 %v4786
        %5050 = vmatmul.mubr.bf16.gmra.mrb[0].mxu0 %v4785
        %v5051 = vpop.f32.mrb[0].mxu0
        %v5052 = vadd.f32 0.0, %v5051
        %v5053 = vpop.f32.mrb[0].mxu0
        %v5054 = vpop.f32.mrb[0].mxu0
        %v5055 = vadd.f32 0.0, %v5054
        %v5056 = vpop.f32.mrb[0].mxu0
        %5057 = vmatprep.mubr.bf16.mxu0 %v4788
        %5058 = vmatmul.mubr.bf16.gmra.mrb[0].mxu0 %v4787
        %v5059 = vpop.f32.mrb[0].mxu0
        %v5060 = vadd.f32 0.0, %v5059
        %v5061 = vpop.f32.mrb[0].mxu0
        %v5062 = vpop.f32.mrb[0].mxu0
        %v5063 = vadd.f32 0.0, %v5062
        %v5064 = vpop.f32.mrb[0].mxu0
        %5065 = vmatprep.mubr.bf16.mxu0 %v4790
        %5066 = vmatmul.mubr.bf16.gmra.mrb[0].mxu0 %v4789
        %v5067 = vpop.f32.mrb[0].mxu0
        %v5068 = vadd.f32 0.0, %v5067
        %v5069 = vpop.f32.mrb[0].mxu0
        %v5070 = vpop.f32.mrb[0].mxu0
        %v5071 = vadd.f32 0.0, %v5070
        %v5072 = vpop.f32.mrb[0].mxu0
        %5073 = vmatprep.mubr.bf16.mxu0 %v4792
        %5074 = vmatmul.mubr.bf16.gmra.mrb[0].mxu0 %v4791
        %v5075 = vpop.f32.mrb[0].mxu0
        %v5076 = vadd.f32 0.0, %v5075
        %v5077 = vpop.f32.mrb[0].mxu0
        %v5078 = vpop.f32.mrb[0].mxu0
        %v5079 = vadd.f32 0.0, %v5078
        %v5080 = vpop.f32.mrb[0].mxu0
        %5081 = vdwg.mxu0
        %v5114 = vunpack.c.l.b16 %v3852
        %v5115 = vunpack.c.l.b16 %v3853
        %v5116 = vunpack.c.l.b16 %v3854
        %v5117 = vunpack.c.l.b16 %v3855
        %v5118 = vunpack.c.l.b16 %v3856
        %v5119 = vunpack.c.l.b16 %v3857
        %v5120 = vunpack.c.l.b16 %v3858
        %v5121 = vunpack.c.l.b16 %v3859
        %v5122 = vunpack.c.l.b16 %v3860
        %v5123 = vunpack.c.l.b16 %v3861
        %v5124 = vunpack.c.l.b16 %v3862
        %v5125 = vunpack.c.l.b16 %v3863
        %v5126 = vunpack.c.l.b16 %v3864
        %v5127 = vunpack.c.l.b16 %v3865
        %v5128 = vunpack.c.l.b16 %v3866
        %v5129 = vunpack.c.l.b16 %v3867
        %v5130 = vunpack.c.l.b16 %v3868
        %v5131 = vunpack.c.l.b16 %v3869
        %v5132 = vunpack.c.l.b16 %v3870
        %v5133 = vunpack.c.l.b16 %v3871
        %v5134 = vunpack.c.l.b16 %v3872
        %v5135 = vunpack.c.l.b16 %v3873
        %v5136 = vunpack.c.l.b16 %v3874
        %v5137 = vunpack.c.l.b16 %v3875
        %v5138 = vunpack.c.l.b16 %v3876
        %v5139 = vunpack.c.l.b16 %v3877
        %v5140 = vunpack.c.l.b16 %v3878
        %v5141 = vunpack.c.l.b16 %v3879
        %v5142 = vunpack.c.l.b16 %v3880
        %v5143 = vunpack.c.l.b16 %v3881
        %v5144 = vunpack.c.l.b16 %v3882
        %v5145 = vunpack.c.l.b16 %v3883
        %v5146 = vpack.c.b16 %v5115, %v5114
        %v5147 = vpack.c.b16 %v5117, %v5116
        %v5148 = vpack.c.b16 %v5119, %v5118
        %v5149 = vpack.c.b16 %v5121, %v5120
        %v5150 = vpack.c.b16 %v5123, %v5122
        %v5151 = vpack.c.b16 %v5125, %v5124
        %v5152 = vpack.c.b16 %v5127, %v5126
        %v5153 = vpack.c.b16 %v5129, %v5128
        %v5154 = vpack.c.b16 %v5131, %v5130
        %v5155 = vpack.c.b16 %v5133, %v5132
        %v5156 = vpack.c.b16 %v5135, %v5134
        %v5157 = vpack.c.b16 %v5137, %v5136
        %v5158 = vpack.c.b16 %v5139, %v5138
        %v5159 = vpack.c.b16 %v5141, %v5140
        %v5160 = vpack.c.b16 %v5143, %v5142
        %v5161 = vpack.c.b16 %v5145, %v5144
        %5178 = vmatprep.subr.bf16.mxu0 0
        %5179 = vmatpush1.bf16.msra.mxu0 %v5146
        %5180 = vmatprep.subr.bf16.mxu0 0
        %5181 = vmatpush1.bf16.msra.mxu0 %v5147
        %5182 = vmatprep.subr.bf16.mxu0 0
        %5183 = vmatpush1.bf16.msra.mxu0 %v5148
        %5184 = vmatprep.subr.bf16.mxu0 0
        %5185 = vmatpush1.bf16.msra.mxu0 %v5149
        %5186 = vmatprep.subr.bf16.mxu0 0
        %5187 = vmatpush1.bf16.msra.mxu0 %v5150
        %5188 = vmatprep.subr.bf16.mxu0 0
        %5189 = vmatpush1.bf16.msra.mxu0 %v5151
        %5190 = vmatprep.subr.bf16.mxu0 0
        %5191 = vmatpush1.bf16.msra.mxu0 %v5152
        %5192 = vmatprep.subr.bf16.mxu0 0
        %5193 = vmatpush1.bf16.msra.mxu0 %v5153
        %5194 = vmatprep.subr.bf16.mxu0 0
        %5195 = vmatpush1.bf16.msra.mxu0 %v5154
        %5196 = vmatprep.subr.bf16.mxu0 0
        %5197 = vmatpush1.bf16.msra.mxu0 %v5155
        %5198 = vmatprep.subr.bf16.mxu0 0
        %5199 = vmatpush1.bf16.msra.mxu0 %v5156
        %5200 = vmatprep.subr.bf16.mxu0 0
        %5201 = vmatpush1.bf16.msra.mxu0 %v5157
        %5202 = vmatprep.subr.bf16.mxu0 0
        %5203 = vmatpush1.bf16.msra.mxu0 %v5158
        %5204 = vmatprep.subr.bf16.mxu0 0
        %5205 = vmatpush1.bf16.msra.mxu0 %v5159
        %5206 = vmatprep.subr.bf16.mxu0 0
        %5207 = vmatpush1.bf16.msra.mxu0 %v5160
        %5208 = vmatprep.subr.bf16.mxu0 0
        %5209 = vmatpush1.bf16.msra.mxu0 %v5161
        %5210 = vmatprep.mubr.bf16.mxu0 %v3821
        %5211 = vmatmul.mubr.bf16.gmra.mrb[0].mxu0 %v3820
        %v5212 = vpop.f32.mrb[0].mxu0
        %v5213 = vadd.f32 %v4956, %v5212
        %v5214 = vpop.f32.mrb[0].mxu0
        %v5215 = vpop.f32.mrb[0].mxu0
        %v5216 = vadd.f32 %v4959, %v5215
        %v5217 = vpop.f32.mrb[0].mxu0
        %5218 = vmatprep.mubr.bf16.mxu0 %v3823
        %5219 = vmatmul.mubr.bf16.gmra.mrb[0].mxu0 %v3822
        %v5220 = vpop.f32.mrb[0].mxu0
        %v5221 = vadd.f32 %v4964, %v5220
        %v5222 = vpop.f32.mrb[0].mxu0
        %v5223 = vpop.f32.mrb[0].mxu0
        %v5224 = vadd.f32 %v4967, %v5223
        %v5225 = vpop.f32.mrb[0].mxu0
        %5226 = vmatprep.mubr.bf16.mxu0 %v3825
        %5227 = vmatmul.mubr.bf16.gmra.mrb[0].mxu0 %v3824
        %v5228 = vpop.f32.mrb[0].mxu0
        %v5229 = vadd.f32 %v4972, %v5228
        %v5230 = vpop.f32.mrb[0].mxu0
        %v5231 = vpop.f32.mrb[0].mxu0
        %v5232 = vadd.f32 %v4975, %v5231
        %v5233 = vpop.f32.mrb[0].mxu0
        %5234 = vmatprep.mubr.bf16.mxu0 %v3827
        %5235 = vmatmul.mubr.bf16.gmra.mrb[0].mxu0 %v3826
        %v5236 = vpop.f32.mrb[0].mxu0
        %v5237 = vadd.f32 %v4980, %v5236
        %v5238 = vpop.f32.mrb[0].mxu0
        %v5239 = vpop.f32.mrb[0].mxu0
        %v5240 = vadd.f32 %v4983, %v5239
        %v5241 = vpop.f32.mrb[0].mxu0
        %5242 = vmatprep.mubr.bf16.mxu0 %v3829
        %5243 = vmatmul.mubr.bf16.gmra.mrb[0].mxu0 %v3828
        %v5244 = vpop.f32.mrb[0].mxu0
        %v5245 = vadd.f32 %v4988, %v5244
        %v5246 = vpop.f32.mrb[0].mxu0
        %v5247 = vpop.f32.mrb[0].mxu0
        %v5248 = vadd.f32 %v4991, %v5247
        %v5249 = vpop.f32.mrb[0].mxu0
        %5250 = vmatprep.mubr.bf16.mxu0 %v3831
        %5251 = vmatmul.mubr.bf16.gmra.mrb[0].mxu0 %v3830
        %v5252 = vpop.f32.mrb[0].mxu0
        %v5253 = vadd.f32 %v4996, %v5252
        %v5254 = vpop.f32.mrb[0].mxu0
        %v5255 = vpop.f32.mrb[0].mxu0
        %v5256 = vadd.f32 %v4999, %v5255
        %v5257 = vpop.f32.mrb[0].mxu0
        %5258 = vmatprep.mubr.bf16.mxu0 %v3833
        %5259 = vmatmul.mubr.bf16.gmra.mrb[0].mxu0 %v3832
        %v5260 = vpop.f32.mrb[0].mxu0
        %v5261 = vadd.f32 %v5004, %v5260
        %v5262 = vpop.f32.mrb[0].mxu0
        %v5263 = vpop.f32.mrb[0].mxu0
        %v5264 = vadd.f32 %v5007, %v5263
        %v5265 = vpop.f32.mrb[0].mxu0
        %5266 = vmatprep.mubr.bf16.mxu0 %v3835
        %5267 = vmatmul.mubr.bf16.gmra.mrb[0].mxu0 %v3834
        %v5268 = vpop.f32.mrb[0].mxu0
        %v5269 = vadd.f32 %v5012, %v5268
        %v5270 = vpop.f32.mrb[0].mxu0
        %v5271 = vpop.f32.mrb[0].mxu0
        %v5272 = vadd.f32 %v5015, %v5271
        %v5273 = vpop.f32.mrb[0].mxu0
        %5274 = vmatprep.mubr.bf16.mxu0 %v3837
        %5275 = vmatmul.mubr.bf16.gmra.mrb[0].mxu0 %v3836
        %v5276 = vpop.f32.mrb[0].mxu0
        %v5277 = vadd.f32 %v5020, %v5276
        %v5278 = vpop.f32.mrb[0].mxu0
        %v5279 = vpop.f32.mrb[0].mxu0
        %v5280 = vadd.f32 %v5023, %v5279
        %v5281 = vpop.f32.mrb[0].mxu0
        %5282 = vmatprep.mubr.bf16.mxu0 %v3839
        %5283 = vmatmul.mubr.bf16.gmra.mrb[0].mxu0 %v3838
        %v5284 = vpop.f32.mrb[0].mxu0
        %v5285 = vadd.f32 %v5028, %v5284
        %v5286 = vpop.f32.mrb[0].mxu0
        %v5287 = vpop.f32.mrb[0].mxu0
        %v5288 = vadd.f32 %v5031, %v5287
        %v5289 = vpop.f32.mrb[0].mxu0
        %5290 = vmatprep.mubr.bf16.mxu0 %v3841
        %5291 = vmatmul.mubr.bf16.gmra.mrb[0].mxu0 %v3840
        %v5292 = vpop.f32.mrb[0].mxu0
        %v5293 = vadd.f32 %v5036, %v5292
        %v5294 = vpop.f32.mrb[0].mxu0
        %v5295 = vpop.f32.mrb[0].mxu0
        %v5296 = vadd.f32 %v5039, %v5295
        %v5297 = vpop.f32.mrb[0].mxu0
        %5298 = vmatprep.mubr.bf16.mxu0 %v3843
        %5299 = vmatmul.mubr.bf16.gmra.mrb[0].mxu0 %v3842
        %v5300 = vpop.f32.mrb[0].mxu0
        %v5301 = vadd.f32 %v5044, %v5300
        %v5302 = vpop.f32.mrb[0].mxu0
        %v5303 = vpop.f32.mrb[0].mxu0
        %v5304 = vadd.f32 %v5047, %v5303
        %v5305 = vpop.f32.mrb[0].mxu0
        %5306 = vmatprep.mubr.bf16.mxu0 %v3845
        %5307 = vmatmul.mubr.bf16.gmra.mrb[0].mxu0 %v3844
        %v5308 = vpop.f32.mrb[0].mxu0
        %v5309 = vadd.f32 %v5052, %v5308
        %v5310 = vpop.f32.mrb[0].mxu0
        %v5311 = vpop.f32.mrb[0].mxu0
        %v5312 = vadd.f32 %v5055, %v5311
        %v5313 = vpop.f32.mrb[0].mxu0
        %5314 = vmatprep.mubr.bf16.mxu0 %v3847
        %5315 = vmatmul.mubr.bf16.gmra.mrb[0].mxu0 %v3846
        %v5316 = vpop.f32.mrb[0].mxu0
        %v5317 = vadd.f32 %v5060, %v5316
        %v5318 = vpop.f32.mrb[0].mxu0
        %v5319 = vpop.f32.mrb[0].mxu0
        %v5320 = vadd.f32 %v5063, %v5319
        %v5321 = vpop.f32.mrb[0].mxu0
        %5322 = vmatprep.mubr.bf16.mxu0 %v3849
        %5323 = vmatmul.mubr.bf16.gmra.mrb[0].mxu0 %v3848
        %v5324 = vpop.f32.mrb[0].mxu0
        %v5325 = vadd.f32 %v5068, %v5324
        %v5326 = vpop.f32.mrb[0].mxu0
        %v5327 = vpop.f32.mrb[0].mxu0
        %v5328 = vadd.f32 %v5071, %v5327
        %v5329 = vpop.f32.mrb[0].mxu0
        %5330 = vmatprep.mubr.bf16.mxu0 %v3851
        %5331 = vmatmul.mubr.bf16.gmra.mrb[0].mxu0 %v3850
        %v5332 = vpop.f32.mrb[0].mxu0
        %v5333 = vadd.f32 %v5076, %v5332
        %v5334 = vpop.f32.mrb[0].mxu0
        %v5335 = vpop.f32.mrb[0].mxu0
        %v5336 = vadd.f32 %v5079, %v5335
        %v5337 = vpop.f32.mrb[0].mxu0
        %5338 = vdwg.mxu0
        %v5339 = vadd.f32 %v2504, %v5213
        %v5340 = vadd.f32 %v2505, %v5216
        %v5341 = vadd.f32 %v2506, %v5221
        %v5342 = vadd.f32 %v2507, %v5224
        %v5343 = vadd.f32 %v2508, %v5229
        %v5344 = vadd.f32 %v2509, %v5232
        %v5345 = vadd.f32 %v2510, %v5237
        %v5346 = vadd.f32 %v2511, %v5240
        %v5347 = vadd.f32 %v2512, %v5245
        %v5348 = vadd.f32 %v2513, %v5248
        %v5349 = vadd.f32 %v2514, %v5253
        %v5350 = vadd.f32 %v2515, %v5256
        %v5351 = vadd.f32 %v2516, %v5261
        %v5352 = vadd.f32 %v2517, %v5264
        %v5353 = vadd.f32 %v2518, %v5269
        %v5354 = vadd.f32 %v2519, %v5272
        %v5355 = vadd.f32 %v2520, %v5277
        %v5356 = vadd.f32 %v2521, %v5280
        %v5357 = vadd.f32 %v2522, %v5285
        %v5358 = vadd.f32 %v2523, %v5288
        %v5359 = vadd.f32 %v2524, %v5293
        %v5360 = vadd.f32 %v2525, %v5296
        %v5361 = vadd.f32 %v2526, %v5301
        %v5362 = vadd.f32 %v2527, %v5304
        %v5363 = vadd.f32 %v2528, %v5309
        %v5364 = vadd.f32 %v2529, %v5312
        %v5365 = vadd.f32 %v2530, %v5317
        %v5366 = vadd.f32 %v2531, %v5320
        %v5367 = vadd.f32 %v2532, %v5325
        %v5368 = vadd.f32 %v2533, %v5328
        %v5369 = vadd.f32 %v2534, %v5333
        %v5370 = vadd.f32 %v2535, %v5336
        %v5371 = vld [vmem:[%s12] sm:$0x1]
        %v5373 = vlaneseq
        %v5374 = vshrl.u32 %v5373, 7
        %v5375 = vsub.s32 0, %v5374
        %v5376 = vrot.slane %v5371, %v5375
        %v5378 = vadd.f32 %v5339, %v5376
        %v5379 = vadd.f32 %v5340, %v5376
        %v5380 = vadd.f32 %v5341, %v5376
        %v5381 = vadd.f32 %v5342, %v5376
        %v5382 = vadd.f32 %v5343, %v5376
        %v5383 = vadd.f32 %v5344, %v5376
        %v5384 = vadd.f32 %v5345, %v5376
        %v5385 = vadd.f32 %v5346, %v5376
        %v5386 = vadd.f32 %v5347, %v5376
        %v5387 = vadd.f32 %v5348, %v5376
        %v5388 = vadd.f32 %v5349, %v5376
        %v5389 = vadd.f32 %v5350, %v5376
        %v5390 = vadd.f32 %v5351, %v5376
        %v5391 = vadd.f32 %v5352, %v5376
        %v5392 = vadd.f32 %v5353, %v5376
        %v5393 = vadd.f32 %v5354, %v5376
        %v5394 = vadd.f32 %v5355, %v5376
        %v5395 = vadd.f32 %v5356, %v5376
        %v5396 = vadd.f32 %v5357, %v5376
        %v5397 = vadd.f32 %v5358, %v5376
        %v5398 = vadd.f32 %v5359, %v5376
        %v5399 = vadd.f32 %v5360, %v5376
        %v5400 = vadd.f32 %v5361, %v5376
        %v5401 = vadd.f32 %v5362, %v5376
        %v5402 = vadd.f32 %v5363, %v5376
        %v5403 = vadd.f32 %v5364, %v5376
        %v5404 = vadd.f32 %v5365, %v5376
        %v5405 = vadd.f32 %v5366, %v5376
        %v5406 = vadd.f32 %v5367, %v5376
        %v5407 = vadd.f32 %v5368, %v5376
        %v5408 = vadd.f32 %v5369, %v5376
        %v5409 = vadd.f32 %v5370, %v5376
        %5410 = vst [vmem:[%s546] sm:$0xff] %v5378
        %5411 = vst [vmem:[%s546 + $0x8] sm:$0xff] %v5379
        %5412 = vst [vmem:[%s546 + $0x10] sm:$0xff] %v5380
        %5413 = vst [vmem:[%s546 + $0x18] sm:$0xff] %v5381
        %5414 = vst [vmem:[%s546 + $0x20] sm:$0xff] %v5382
        %5415 = vst [vmem:[%s546 + $0x28] sm:$0xff] %v5383
        %5416 = vst [vmem:[%s546 + $0x30] sm:$0xff] %v5384
        %5417 = vst [vmem:[%s546 + $0x38] sm:$0xff] %v5385
        %5418 = vst [vmem:[%s546 + $0x40] sm:$0xff] %v5386
        %5419 = vst [vmem:[%s546 + $0x48] sm:$0xff] %v5387
        %5420 = vst [vmem:[%s546 + $0x50] sm:$0xff] %v5388
        %5421 = vst [vmem:[%s546 + $0x58] sm:$0xff] %v5389
        %5422 = vst [vmem:[%s546 + $0x60] sm:$0xff] %v5390
        %5423 = vst [vmem:[%s546 + $0x68] sm:$0xff] %v5391
        %5424 = vst [vmem:[%s546 + $0x70] sm:$0xff] %v5392
        %5425 = vst [vmem:[%s546 + $0x78] sm:$0xff] %v5393
        %5426 = vst [vmem:[%s546 + $0x80] sm:$0xff] %v5394
        %5427 = vst [vmem:[%s546 + $0x88] sm:$0xff] %v5395
        %5428 = vst [vmem:[%s546 + $0x90] sm:$0xff] %v5396
        %5429 = vst [vmem:[%s546 + $0x98] sm:$0xff] %v5397
        %5430 = vst [vmem:[%s546 + $0xa0] sm:$0xff] %v5398
        %5431 = vst [vmem:[%s546 + $0xa8] sm:$0xff] %v5399
        %5432 = vst [vmem:[%s546 + $0xb0] sm:$0xff] %v5400
        %5433 = vst [vmem:[%s546 + $0xb8] sm:$0xff] %v5401
        %5434 = vst [vmem:[%s546 + $0xc0] sm:$0xff] %v5402
        %5435 = vst [vmem:[%s546 + $0xc8] sm:$0xff] %v5403
        %5436 = vst [vmem:[%s546 + $0xd0] sm:$0xff] %v5404
        %5437 = vst [vmem:[%s546 + $0xd8] sm:$0xff] %v5405
        %5438 = vst [vmem:[%s546 + $0xe0] sm:$0xff] %v5406
        %5439 = vst [vmem:[%s546 + $0xe8] sm:$0xff] %v5407
        %5440 = vst [vmem:[%s546 + $0xf0] sm:$0xff] %v5408
        %5441 = vst [vmem:[%s546 + $0xf8] sm:$0xff] %v5409
        %s5442 = sand.u32 %s319, 1
        %s5443 = scalar_lea.sflag [#allocation4], %s5442
        %s5444 = sand.u32 %s319, 1
        %s5445 = smul.addr %s5444, 256
        %s5446 = scalar_lea.vmem [#allocation14], %s5445
        // Predicated region
        $region101: #{tpu_custom_call.1} parent=71 // pred_check
          %p5447 = pneg %p329
        $region102: #{tpu_custom_call.1} parent=71 // pred_check_branch
          %5449 = sbr.rel (%p5447) target = $region104
        $region103: #{tpu_custom_call.1} parent=71 // pred_region
          %s5450 = smul.u32 4, %s33
          %s5452 = ssub.s32 4096, 4096
          %5453 = vsyncadd %s5443, %s5452
          %s5454 = smul.addr %s5450, 8
          %s5455 = smul.addr %s5454, 128
          %s5456 = scalar_lea.hbm %s13, %s5455
          %s5457 = sshll.u32 %s5446, 4
          %s5458 = int_to_ptr.vmem [resolvable:$true] %s5457
          %5463 = dma.vmem_to_hbm [thread:$0]  %s5458, 4096, %s5456, %s5443, 128, 128, 8
        $region104: #{tpu_custom_call.1} parent=71 // pred_fallthru
          _
      $region72: #{tpu_custom_call.1} parent=5 // pred_fallthru
        _
      %p5464 = scmp.le.s32.totalorder 2, %s28
      // Predicated region
      $region105: #{tpu_custom_call.1} parent=5 // pred_check
        %p5465 = pneg %p5464
      $region106: #{tpu_custom_call.1} parent=5 // pred_check_branch
        %5467 = sbr.rel (%p5465) target = $region108
      $region107: #{tpu_custom_call.1} parent=5 // pred_region
        %s5468 = ssub.s32 %s28, 2
        // Predicated region
        $region109: #{tpu_custom_call.1} parent=107 // pred_check
          %p5469 = pneg %p335
        $region110: #{tpu_custom_call.1} parent=107 // pred_check_branch
          %5471 = sbr.rel (%p5469) target = $region112
        $region111: #{tpu_custom_call.1} parent=107 // pred_region
          %s5472 = sand.u32 %s320, 1
          %s5473 = scalar_lea.sflag [#allocation4], %s5472
          %s5474 = sand.u32 %s320, 1
          %s5475 = smul.addr %s5474, 256
          %s5476 = scalar_lea.vmem [#allocation14], %s5475
          %5477 = dma.done %s5473, 4096
        $region112: #{tpu_custom_call.1} parent=107 // pred_fallthru
          _
      $region108: #{tpu_custom_call.1} parent=5 // pred_fallthru
        _
    $region6: #{tpu_custom_call.1} parent=1 // loop_footer
      %s32 = sadd.s32 1, %s28
    $region7: #{tpu_custom_call.1} parent=1 // loop_footer_branch
      %27 = sbr.rel target = $region3
    $region8: #{tpu_custom_call.1} parent=1 // loop_exit
      _
    %5478 = vsyncpa [#allocation3], 1
    %s5479 = scalar_lea.sflag [#allocation3], 1
    %5480 = vsyncpa %s5479, 1
    %5481 = vsyncpa [#allocation6], 1
    %5482 = vsyncpa [#allocation9], 1
    %5483 = vsyncpa [#allocation12], 1
    %5484 = vsyncpa [#allocation4], 1
    %s5485 = scalar_lea.sflag [#allocation4], 1
    %5486 = vsyncpa %s5485, 1

</llo_original>
